<compile_context>
chip_gen: v5e
topology: v5e:2x2
jax: 0.10.0
libtpu: 0.0.40
codegen_flags: <defaults>
</compile_context>

<pallas_src>
import functools

import jax
import jax.numpy as jnp
from jax.experimental import pallas as pl
from jax.experimental.pallas import tpu as pltpu

EPS = 1e-5
LANE = 128
SUBLANE = 8
VMEM_LIMIT = 32 * 1024 * 1024


def _round_up(x, m):
    return (x + m - 1) // m * m


# ---------------------------------------------------------------------------
# Pallas kernels
# ---------------------------------------------------------------------------
def conv3x3_stats_kernel(x_ref, w_ref, y_ref, sum_ref, ssq_ref):
    """3x3 'SAME' conv on one row-band (with halo) + per-channel sum / sum^2.

    x_ref : (1, th+2, W+2, Cin_p)  bf16   input band incl. 1-pixel halo
    w_ref : (9, Cin_p, Cout_p)     bf16   taps in (ky*3 + kx) order
    y_ref : (1, th, W, Cout_p)     f32    pre-BN conv output for this band
    sum_ref, ssq_ref : (1, Cout_p) f32    accumulated across the whole grid
    """
    @pl.when(pl.program_id(0) == 0)
    def _init():
        sum_ref[...] = jnp.zeros_like(sum_ref)
        ssq_ref[...] = jnp.zeros_like(ssq_ref)

    th, width, cout_p = y_ref.shape[1], y_ref.shape[2], y_ref.shape[3]
    cin_p = x_ref.shape[3]

    # Single f32 copy of the band; per-tap slices are clean sublane shifts.
    xt = x_ref[0].astype(jnp.float32)                 # (th+2, W+2, Cin_p)
    acc = jnp.zeros((th * width, cout_p), jnp.float32)
    for k in range(9):                                # fully unrolled: 9 MXU matmuls
        ky, kx = divmod(k, 3)
        patch = xt[ky:ky + th, kx:kx + width, :].reshape(th * width, cin_p)
        acc = acc + jnp.dot(patch.astype(jnp.bfloat16), w_ref[k],
                            preferred_element_type=jnp.float32)

    y_ref[...] = acc.reshape(1, th, width, cout_p)
    sum_ref[...] += jnp.sum(acc, axis=0, keepdims=True)
    ssq_ref[...] += jnp.sum(acc * acc, axis=0, keepdims=True)


def bn_relu_kernel(y_ref, sc_ref, sh_ref, o_ref):
    """o = relu(y * scale + shift); written bf16 for the next conv."""
    o_ref[...] = jnp.maximum(y_ref[...] * sc_ref[...] + sh_ref[...],
                             0.0).astype(o_ref.dtype)


def bn_relu_skip_kernel(y_ref, sc_ref, sh_ref, x_ref, ws_ref, bs_ref, o_ref):
    """o = relu(y * scale + shift) + x @ ws + bs   (1x1 skip conv fused)."""
    th, width, cout_p = o_ref.shape[1], o_ref.shape[2], o_ref.shape[3]
    cin_p = x_ref.shape[3]
    y2d = y_ref[0].reshape(th * width, cout_p)
    main = jnp.maximum(y2d * sc_ref[...] + sh_ref[...], 0.0)
    x2d = x_ref[0].reshape(th * width, cin_p)          # bf16 tile
    skip = jnp.dot(x2d, ws_ref[...],
                   preferred_element_type=jnp.float32) + bs_ref[...]
    o_ref[...] = (main + skip).reshape(1, th, width, cout_p)


# ---------------------------------------------------------------------------
# pallas_call wrappers
# ---------------------------------------------------------------------------
def _conv3x3_stats(x_band, w9, cout_p):
    nb, thp2, wp2, cin_p = x_band.shape
    th, width = thp2 - 2, wp2 - 2
    y_shape = jax.ShapeDtypeStruct((nb, th, width, cout_p), jnp.float32)
    s_shape = jax.ShapeDtypeStruct((1, cout_p), jnp.float32)
    return pl.pallas_call(
        conv3x3_stats_kernel,
        grid=(nb,),
        in_specs=[
            pl.BlockSpec((1, thp2, wp2, cin_p), lambda i: (i, 0, 0, 0)),
            pl.BlockSpec((9, cin_p, cout_p), lambda i: (0, 0, 0)),
        ],
        out_specs=(
            pl.BlockSpec((1, th, width, cout_p), lambda i: (i, 0, 0, 0)),
            pl.BlockSpec((1, cout_p), lambda i: (0, 0)),
            pl.BlockSpec((1, cout_p), lambda i: (0, 0)),
        ),
        out_shape=(y_shape, s_shape, s_shape),
        compiler_params=pltpu.CompilerParams(
            dimension_semantics=("arbitrary",),   # stats accumulate over bands
            vmem_limit_bytes=VMEM_LIMIT),
    )(x_band, w9)


def _bn_relu(y, scale, shift):
    nb, th, width, cout_p = y.shape
    return pl.pallas_call(
        bn_relu_kernel,
        grid=(nb,),
        in_specs=[
            pl.BlockSpec((1, th, width, cout_p), lambda i: (i, 0, 0, 0)),
            pl.BlockSpec((1, cout_p), lambda i: (0, 0)),
            pl.BlockSpec((1, cout_p), lambda i: (0, 0)),
        ],
        out_specs=pl.BlockSpec((1, th, width, cout_p), lambda i: (i, 0, 0, 0)),
        out_shape=jax.ShapeDtypeStruct((nb, th, width, cout_p), jnp.bfloat16),
        compiler_params=pltpu.CompilerParams(
            dimension_semantics=("parallel",),
            vmem_limit_bytes=VMEM_LIMIT),
    )(y, scale, shift)


def _bn_relu_skip(y, scale, shift, x_c, ws, bs):
    nb, th, width, cout_p = y.shape
    cin_p = x_c.shape[3]
    return pl.pallas_call(
        bn_relu_skip_kernel,
        grid=(nb,),
        in_specs=[
            pl.BlockSpec((1, th, width, cout_p), lambda i: (i, 0, 0, 0)),
            pl.BlockSpec((1, cout_p), lambda i: (0, 0)),
            pl.BlockSpec((1, cout_p), lambda i: (0, 0)),
            pl.BlockSpec((1, th, width, cin_p), lambda i: (i, 0, 0, 0)),
            pl.BlockSpec((cin_p, cout_p), lambda i: (0, 0)),
            pl.BlockSpec((1, cout_p), lambda i: (0, 0)),
        ],
        out_specs=pl.BlockSpec((1, th, width, cout_p), lambda i: (i, 0, 0, 0)),
        out_shape=jax.ShapeDtypeStruct((nb, th, width, cout_p), jnp.float32),
        compiler_params=pltpu.CompilerParams(
            dimension_semantics=("parallel",),
            vmem_limit_bytes=VMEM_LIMIT),
    )(y, scale, shift, x_c, ws, bs)


# ---------------------------------------------------------------------------
# Glue
# ---------------------------------------------------------------------------
def _band_with_halo(x_pad, tile_h):
    """(N, H+2, W+2, C) -> (N*nb, tile_h+2, W+2, C) row-bands with halo."""
    n, hp2, wp2, c = x_pad.shape
    h = hp2 - 2
    nb = h // tile_h
    bands = [x_pad[:, b * tile_h: b * tile_h + tile_h + 2] for b in range(nb)]
    xb = jnp.stack(bands, axis=1)                     # (N, nb, th+2, W+2, C)
    return xb.reshape(n * nb, tile_h + 2, wp2, c)


def _bn_affine(ssum, ssq, count, gamma, beta):
    """Fold batch stats into a per-channel scale/shift (tiny (1,C) math)."""
    mean = ssum / count
    var = jnp.maximum(ssq / count - mean * mean, 0.0)
    inv_std = jax.lax.rsqrt(var + EPS)
    scale = gamma * inv_std
    shift = beta - mean * scale
    return scale, shift


def _pick_tile_h(h):
    for cand in (32, 24, 16, 8):
        if cand <= h and h % cand == 0:
            return cand
    return h


def encoding_block_forward(x_nchw, params, tile_h=None):
    """Forward of EncodingBlock.  Input/output are NCHW (PyTorch layout)."""
    n, cin, h, w = x_nchw.shape
    cout = params["w1"].shape[-1]
    cin_p = _round_up(cin, SUBLANE)
    cout_p = _round_up(cout, LANE)
    if tile_h is None:
        tile_h = _pick_tile_h(h)
    assert h % tile_h == 0, (h, tile_h)
    assert w % SUBLANE == 0, "width must be a multiple of 8 for this kernel"
    nb = h // tile_h
    m_total = float(n * h * w)

    # NCHW -> NHWC, pad input channels
    x = jnp.transpose(x_nchw, (0, 2, 3, 1)).astype(jnp.float32)
    x = jnp.pad(x, ((0, 0), (0, 0), (0, 0), (0, cin_p - cin)))

    # Parameters: channel-padded; conv weights flattened to 9 taps, bf16.
    def pad_w3(wk, ci, co):
        wp = jnp.pad(wk, ((0, 0), (0, 0),
                          (0, ci - wk.shape[2]), (0, co - wk.shape[3])))
        return wp.reshape(9, ci, co).astype(jnp.bfloat16)

    def pad_vec(v, co):
        v = v.reshape(1, -1)
        return jnp.pad(v, ((0, 0), (0, co - v.shape[1]))).astype(jnp.float32)

    w1 = pad_w3(params["w1"], cin_p, cout_p)
    w2 = pad_w3(params["w2"], cout_p, cout_p)
    ws = jnp.pad(params["ws"], ((0, cin_p - cin),
                                (0, cout_p - cout))).astype(jnp.bfloat16)
    g1, be1 = pad_vec(params["g1"], cout_p), pad_vec(params["beta1"], cout_p)
    g2, be2 = pad_vec(params["g2"], cout_p), pad_vec(params["beta2"], cout_p)
    bs = pad_vec(params["bs"], cout_p)
    # Conv biases b1/b2 are intentionally dropped: a per-channel constant added
    # before BatchNorm is exactly cancelled by the mean subtraction.

    # ---- conv1 (implicit 3x3, no im2col) + BN1 batch stats -------------------
    x_pad = jnp.pad(x, ((0, 0), (1, 1), (1, 1), (0, 0)))
    x_band = _band_with_halo(x_pad.astype(jnp.bfloat16), tile_h)
    y1, s1, q1 = _conv3x3_stats(x_band, w1, cout_p)

    sc1, sh1 = _bn_affine(s1, q1, m_total, g1, be1)
    h1 = _bn_relu(y1, sc1, sh1)                       # (NB, th, W, Cout_p) bf16

    # ---- conv2 (implicit 3x3) + BN2 batch stats ------------------------------
    h1_img = h1.reshape(n, h, w, cout_p)
    h1_pad = jnp.pad(h1_img, ((0, 0), (1, 1), (1, 1), (0, 0)))
    h1_band = _band_with_halo(h1_pad, tile_h)
    y2, s2, q2 = _conv3x3_stats(h1_band, w2, cout_p)

    sc2, sh2 = _bn_affine(s2, q2, m_total, g2, be2)

    # ---- BN2 normalize + ReLU + 1x1 skip + add (single fused pass) ----------
    x_c = x.astype(jnp.bfloat16).reshape(n * nb, tile_h, w, cin_p)
    out = _bn_relu_skip(y2, sc2, sh2, x_c, ws, bs)    # (NB, th, W, Cout_p) f32

    out = out.reshape(n, h, w, cout_p)[..., :cout]
    return jnp.transpose(out, (0, 3, 1, 2))           # NHWC -> NCHW


# ---------------------------------------------------------------------------
# Deterministic parameter init (synthetic, shapes match the nn.Module)
# ---------------------------------------------------------------------------
def init_params(key, cin, cout):
    ks = jax.random.split(key, 8)
    scale1 = 1.0 / jnp.sqrt(9.0 * cin)
    scale2 = 1.0 / jnp.sqrt(9.0 * cout)
    scales = 1.0 / jnp.sqrt(1.0 * cin)
    return {
        # conv weights stored as HWIO: (3, 3, Cin, Cout)
        "w1": scale1 * jax.random.normal(ks[0], (3, 3, cin, cout), jnp.float32),
        "b1": scale1 * jax.random.normal(ks[1], (1, cout), jnp.float32),
        "g1": 1.0 + 0.1 * jax.random.normal(ks[2], (1, cout), jnp.float32),
        "beta1": 0.1 * jax.random.normal(ks[3], (1, cout), jnp.float32),
        "w2": scale2 * jax.random.normal(ks[4], (3, 3, cout, cout), jnp.float32),
        "b2": scale2 * jax.random.normal(ks[5], (1, cout), jnp.float32),
        "g2": 1.0 + 0.1 * jax.random.normal(ks[6], (1, cout), jnp.float32),
        "beta2": 0.1 * jax.random.normal(ks[7], (1, cout), jnp.float32),
        # 1x1 skip conv: (Cin, Cout)
        "ws": scales * jax.random.normal(jax.random.fold_in(key, 100),
                                         (cin, cout), jnp.float32),
        "bs": scales * jax.random.normal(jax.random.fold_in(key, 101),
                                         (1, cout), jnp.float32),
    }


# ---------------------------------------------------------------------------
# Pure-JAX reference.  mm_dtype=bf16 models the kernel's intentional bf16 MXU
# operands (f32 accumulation); mm_dtype=f32 is the exact-precision reference.
# ---------------------------------------------------------------------------
def reference_forward(x_nchw, params, mm_dtype=jnp.float32):
    x = jnp.transpose(x_nchw, (0, 2, 3, 1)).astype(jnp.float32)   # NHWC
    dn = ("NHWC", "HWIO", "NHWC")

    def conv(inp, wk):
        return jax.lax.conv_general_dilated(
            inp.astype(mm_dtype), wk.astype(mm_dtype), (1, 1), "SAME",
            dimension_numbers=dn, preferred_element_type=jnp.float32)

    def bn_relu(y, g, beta):
        mean = jnp.mean(y, axis=(0, 1, 2), keepdims=True)
        var = jnp.mean((y - mean) ** 2, axis=(0, 1, 2), keepdims=True)
        y_hat = (y - mean) * jax.lax.rsqrt(var + EPS)
        return jnp.maximum(y_hat * g.reshape(1, 1, 1, -1)
                           + beta.reshape(1, 1, 1, -1), 0.0)

    y1 = conv(x, params["w1"]) + params["b1"].reshape(1, 1, 1, -1)
    h1 = bn_relu(y1, params["g1"], params["beta1"])
    y2 = conv(h1, params["w2"]) + params["b2"].reshape(1, 1, 1, -1)
    h2 = bn_relu(y2, params["g2"], params["beta2"])
    skip = jnp.einsum("nhwc,cd->nhwd", x.astype(mm_dtype),
                      params["ws"].astype(mm_dtype),
                      preferred_element_type=jnp.float32) \
        + params["bs"].reshape(1, 1, 1, -1)
    return jnp.transpose(h2 + skip, (0, 3, 1, 2))


# ---------------------------------------------------------------------------
if __name__ == "__main__":
    N, CIN, COUT, H, W = 2, 4, 8, 16, 16

    key = jax.random.PRNGKey(0)
    kx, kp = jax.random.split(key)
    x = jax.random.normal(kx, (N, CIN, H, W), jnp.float32)   # NCHW input
    params = init_params(kp, CIN, COUT)

    # tile_h=8 -> 2 bands per image: exercises multi-band halo handling and the
    # cross-grid-step BN stat accumulation.
    fwd = jax.jit(functools.partial(encoding_block_forward, tile_h=8))
    out = jax.block_until_ready(fwd(x, params))
    assert out.shape == (N, COUT, H, W), out.shape

    # Check vs. a reference with the same bf16-operand conv precision.
    ref_bf16 = jax.block_until_ready(reference_forward(x, params, jnp.bfloat16))
    err = float(jnp.max(jnp.abs(out - ref_bf16)))
    assert jnp.allclose(out, ref_bf16, atol=2e-2, rtol=2e-2), err

    # Sanity check vs. the pure-f32 reference (difference = bf16 MXU rounding).
    ref_f32 = jax.block_until_ready(reference_forward(x, params, jnp.float32))
    err32 = float(jnp.max(jnp.abs(out - ref_f32)))
    assert err32 < 0.15, err32

    print("KERNEL_OK")
</pallas_src>

<mosaic_0001>
module attributes {stable_mosaic.version = 11 : i64} {
  func.func @conv3x3_stats_kernel(%arg0: i32, %arg1: memref<1x10x18x8xbf16, #tpu.memory_space<vmem>>, %arg2: memref<9x8x128xbf16, #tpu.memory_space<vmem>>, %arg3: memref<1x8x16x128xf32, #tpu.memory_space<vmem>>, %arg4: memref<1x128xf32, #tpu.memory_space<vmem>>, %arg5: memref<1x128xf32, #tpu.memory_space<vmem>>) attributes {dimension_semantics = [#tpu.dimension_semantics<arbitrary>], iteration_bounds = array<i64: 4>, scalar_prefetch = 0 : i64, scratch_operands = 0 : i64, tpu.core_type = #tpu.core_type<tc>, window_params = [{transform_indices = @transform_0, window_bounds = array<i64: 1, 10, 18, 8>}, {pipeline_mode = #tpu.pipeline_mode<synchronous>, transform_indices = @transform_1, window_bounds = array<i64: 9, 8, 128>}, {transform_indices = @transform_2, window_bounds = array<i64: 1, 8, 16, 128>}, {pipeline_mode = #tpu.pipeline_mode<synchronous>, transform_indices = @transform_3, window_bounds = array<i64: 1, 128>}, {pipeline_mode = #tpu.pipeline_mode<synchronous>, transform_indices = @transform_4, window_bounds = array<i64: 1, 128>}]} {
    %c0_i32 = arith.constant 0 : i32
    %0 = arith.cmpi eq, %arg0, %c0_i32 : i32
    %1 = arith.extui %0 : i1 to i32
    %c0_i32_0 = arith.constant 0 : i32
    %2 = arith.cmpi ne, %1, %c0_i32_0 : i32
    scf.if %2 {
      %cst_46 = arith.constant 0.000000e+00 : f32
      %83 = vector.broadcast %cst_46 : f32 to vector<1x128xf32>
      %c0_47 = arith.constant 0 : index
      %c0_48 = arith.constant 0 : index
      %84 = vector.load %arg4[%c0_47, %c0_48] : memref<1x128xf32, #tpu.memory_space<vmem>>, vector<1x128xf32>
      tpu.vector_store %arg4[%c0_47, %c0_48], %83 {strides = array<i32>} : memref<1x128xf32, #tpu.memory_space<vmem>>, vector<1x128xf32>,
      %cst_49 = arith.constant 0.000000e+00 : f32
      %85 = vector.broadcast %cst_49 : f32 to vector<1x128xf32>
      %c0_50 = arith.constant 0 : index
      %c0_51 = arith.constant 0 : index
      %86 = vector.load %arg5[%c0_50, %c0_51] : memref<1x128xf32, #tpu.memory_space<vmem>>, vector<1x128xf32>
      tpu.vector_store %arg5[%c0_50, %c0_51], %85 {strides = array<i32>} : memref<1x128xf32, #tpu.memory_space<vmem>>, vector<1x128xf32>,
    } else {
    }
    %c0 = arith.constant 0 : index
    %c0_1 = arith.constant 0 : index
    %c0_2 = arith.constant 0 : index
    %c0_3 = arith.constant 0 : index
    %3 = vector.load %arg1[%c0, %c0_1, %c0_2, %c0_3] : memref<1x10x18x8xbf16, #tpu.memory_space<vmem>>, vector<1x10x18x8xbf16>
    %4 = vector.shape_cast %3 : vector<1x10x18x8xbf16> to vector<10x18x8xbf16>
    %5 = arith.extf %4 : vector<10x18x8xbf16> to vector<10x18x8xf32>
    %cst = arith.constant 0.000000e+00 : f32
    %6 = vector.broadcast %cst : f32 to vector<128x128xf32>
    %7 = vector.extract_strided_slice %5 {offsets = [0, 0, 0], sizes = [8, 16, 8], strides = [1, 1, 1]} : vector<10x18x8xf32> to vector<8x16x8xf32>
    %8 = vector.shape_cast %7 : vector<8x16x8xf32> to vector<128x8xf32>
    %9 = arith.truncf %8 : vector<128x8xf32> to vector<128x8xbf16>
    %c0_4 = arith.constant 0 : index
    %c0_5 = arith.constant 0 : index
    %c0_6 = arith.constant 0 : index
    %10 = vector.load %arg2[%c0_4, %c0_5, %c0_6] : memref<9x8x128xbf16, #tpu.memory_space<vmem>>, vector<1x8x128xbf16>
    %11 = vector.shape_cast %10 : vector<1x8x128xbf16> to vector<8x128xbf16>
    %cst_7 = arith.constant dense<0.000000e+00> : vector<128x128xf32>
    %12 = tpu.matmul %9, %11, %cst_7 {dimension_numbers = #tpu.dot_dimension_numbers<[1], [0], [0], [1], [0, 0, 1, 1], [], []>} : vector<128x8xbf16>, vector<8x128xbf16>, vector<128x128xf32> -> vector<128x128xf32>
    %13 = arith.addf %6, %12 : vector<128x128xf32>
    %14 = vector.extract_strided_slice %5 {offsets = [0, 1, 0], sizes = [8, 16, 8], strides = [1, 1, 1]} : vector<10x18x8xf32> to vector<8x16x8xf32>
    %15 = vector.shape_cast %14 : vector<8x16x8xf32> to vector<128x8xf32>
    %16 = arith.truncf %15 : vector<128x8xf32> to vector<128x8xbf16>
    %c1 = arith.constant 1 : index
    %c0_8 = arith.constant 0 : index
    %c0_9 = arith.constant 0 : index
    %17 = vector.load %arg2[%c1, %c0_8, %c0_9] : memref<9x8x128xbf16, #tpu.memory_space<vmem>>, vector<1x8x128xbf16>
    %18 = vector.shape_cast %17 : vector<1x8x128xbf16> to vector<8x128xbf16>
    %cst_10 = arith.constant dense<0.000000e+00> : vector<128x128xf32>
    %19 = tpu.matmul %16, %18, %cst_10 {dimension_numbers = #tpu.dot_dimension_numbers<[1], [0], [0], [1], [0, 0, 1, 1], [], []>} : vector<128x8xbf16>, vector<8x128xbf16>, vector<128x128xf32> -> vector<128x128xf32>
    %20 = arith.addf %13, %19 : vector<128x128xf32>
    %21 = vector.extract_strided_slice %5 {offsets = [0, 2, 0], sizes = [8, 16, 8], strides = [1, 1, 1]} : vector<10x18x8xf32> to vector<8x16x8xf32>
    %22 = vector.shape_cast %21 : vector<8x16x8xf32> to vector<128x8xf32>
    %23 = arith.truncf %22 : vector<128x8xf32> to vector<128x8xbf16>
    %c2 = arith.constant 2 : index
    %c0_11 = arith.constant 0 : index
    %c0_12 = arith.constant 0 : index
    %24 = vector.load %arg2[%c2, %c0_11, %c0_12] : memref<9x8x128xbf16, #tpu.memory_space<vmem>>, vector<1x8x128xbf16>
    %25 = vector.shape_cast %24 : vector<1x8x128xbf16> to vector<8x128xbf16>
    %cst_13 = arith.constant dense<0.000000e+00> : vector<128x128xf32>
    %26 = tpu.matmul %23, %25, %cst_13 {dimension_numbers = #tpu.dot_dimension_numbers<[1], [0], [0], [1], [0, 0, 1, 1], [], []>} : vector<128x8xbf16>, vector<8x128xbf16>, vector<128x128xf32> -> vector<128x128xf32>
    %27 = arith.addf %20, %26 : vector<128x128xf32>
    %28 = vector.extract_strided_slice %5 {offsets = [1, 0, 0], sizes = [8, 16, 8], strides = [1, 1, 1]} : vector<10x18x8xf32> to vector<8x16x8xf32>
    %29 = vector.shape_cast %28 : vector<8x16x8xf32> to vector<128x8xf32>
    %30 = arith.truncf %29 : vector<128x8xf32> to vector<128x8xbf16>
    %c3 = arith.constant 3 : index
    %c0_14 = arith.constant 0 : index
    %c0_15 = arith.constant 0 : index
    %31 = vector.load %arg2[%c3, %c0_14, %c0_15] : memref<9x8x128xbf16, #tpu.memory_space<vmem>>, vector<1x8x128xbf16>
    %32 = vector.shape_cast %31 : vector<1x8x128xbf16> to vector<8x128xbf16>
    %cst_16 = arith.constant dense<0.000000e+00> : vector<128x128xf32>
    %33 = tpu.matmul %30, %32, %cst_16 {dimension_numbers = #tpu.dot_dimension_numbers<[1], [0], [0], [1], [0, 0, 1, 1], [], []>} : vector<128x8xbf16>, vector<8x128xbf16>, vector<128x128xf32> -> vector<128x128xf32>
    %34 = arith.addf %27, %33 : vector<128x128xf32>
    %35 = vector.extract_strided_slice %5 {offsets = [1, 1, 0], sizes = [8, 16, 8], strides = [1, 1, 1]} : vector<10x18x8xf32> to vector<8x16x8xf32>
    %36 = vector.shape_cast %35 : vector<8x16x8xf32> to vector<128x8xf32>
    %37 = arith.truncf %36 : vector<128x8xf32> to vector<128x8xbf16>
    %c4 = arith.constant 4 : index
    %c0_17 = arith.constant 0 : index
    %c0_18 = arith.constant 0 : index
    %38 = vector.load %arg2[%c4, %c0_17, %c0_18] : memref<9x8x128xbf16, #tpu.memory_space<vmem>>, vector<1x8x128xbf16>
    %39 = vector.shape_cast %38 : vector<1x8x128xbf16> to vector<8x128xbf16>
    %cst_19 = arith.constant dense<0.000000e+00> : vector<128x128xf32>
    %40 = tpu.matmul %37, %39, %cst_19 {dimension_numbers = #tpu.dot_dimension_numbers<[1], [0], [0], [1], [0, 0, 1, 1], [], []>} : vector<128x8xbf16>, vector<8x128xbf16>, vector<128x128xf32> -> vector<128x128xf32>
    %41 = arith.addf %34, %40 : vector<128x128xf32>
    %42 = vector.extract_strided_slice %5 {offsets = [1, 2, 0], sizes = [8, 16, 8], strides = [1, 1, 1]} : vector<10x18x8xf32> to vector<8x16x8xf32>
    %43 = vector.shape_cast %42 : vector<8x16x8xf32> to vector<128x8xf32>
    %44 = arith.truncf %43 : vector<128x8xf32> to vector<128x8xbf16>
    %c5 = arith.constant 5 : index
    %c0_20 = arith.constant 0 : index
    %c0_21 = arith.constant 0 : index
    %45 = vector.load %arg2[%c5, %c0_20, %c0_21] : memref<9x8x128xbf16, #tpu.memory_space<vmem>>, vector<1x8x128xbf16>
    %46 = vector.shape_cast %45 : vector<1x8x128xbf16> to vector<8x128xbf16>
    %cst_22 = arith.constant dense<0.000000e+00> : vector<128x128xf32>
    %47 = tpu.matmul %44, %46, %cst_22 {dimension_numbers = #tpu.dot_dimension_numbers<[1], [0], [0], [1], [0, 0, 1, 1], [], []>} : vector<128x8xbf16>, vector<8x128xbf16>, vector<128x128xf32> -> vector<128x128xf32>
    %48 = arith.addf %41, %47 : vector<128x128xf32>
    %49 = vector.extract_strided_slice %5 {offsets = [2, 0, 0], sizes = [8, 16, 8], strides = [1, 1, 1]} : vector<10x18x8xf32> to vector<8x16x8xf32>
    %50 = vector.shape_cast %49 : vector<8x16x8xf32> to vector<128x8xf32>
    %51 = arith.truncf %50 : vector<128x8xf32> to vector<128x8xbf16>
    %c6 = arith.constant 6 : index
    %c0_23 = arith.constant 0 : index
    %c0_24 = arith.constant 0 : index
    %52 = vector.load %arg2[%c6, %c0_23, %c0_24] : memref<9x8x128xbf16, #tpu.memory_space<vmem>>, vector<1x8x128xbf16>
    %53 = vector.shape_cast %52 : vector<1x8x128xbf16> to vector<8x128xbf16>
    %cst_25 = arith.constant dense<0.000000e+00> : vector<128x128xf32>
    %54 = tpu.matmul %51, %53, %cst_25 {dimension_numbers = #tpu.dot_dimension_numbers<[1], [0], [0], [1], [0, 0, 1, 1], [], []>} : vector<128x8xbf16>, vector<8x128xbf16>, vector<128x128xf32> -> vector<128x128xf32>
    %55 = arith.addf %48, %54 : vector<128x128xf32>
    %56 = vector.extract_strided_slice %5 {offsets = [2, 1, 0], sizes = [8, 16, 8], strides = [1, 1, 1]} : vector<10x18x8xf32> to vector<8x16x8xf32>
    %57 = vector.shape_cast %56 : vector<8x16x8xf32> to vector<128x8xf32>
    %58 = arith.truncf %57 : vector<128x8xf32> to vector<128x8xbf16>
    %c7 = arith.constant 7 : index
    %c0_26 = arith.constant 0 : index
    %c0_27 = arith.constant 0 : index
    %59 = vector.load %arg2[%c7, %c0_26, %c0_27] : memref<9x8x128xbf16, #tpu.memory_space<vmem>>, vector<1x8x128xbf16>
    %60 = vector.shape_cast %59 : vector<1x8x128xbf16> to vector<8x128xbf16>
    %cst_28 = arith.constant dense<0.000000e+00> : vector<128x128xf32>
    %61 = tpu.matmul %58, %60, %cst_28 {dimension_numbers = #tpu.dot_dimension_numbers<[1], [0], [0], [1], [0, 0, 1, 1], [], []>} : vector<128x8xbf16>, vector<8x128xbf16>, vector<128x128xf32> -> vector<128x128xf32>
    %62 = arith.addf %55, %61 : vector<128x128xf32>
    %63 = vector.extract_strided_slice %5 {offsets = [2, 2, 0], sizes = [8, 16, 8], strides = [1, 1, 1]} : vector<10x18x8xf32> to vector<8x16x8xf32>
    %64 = vector.shape_cast %63 : vector<8x16x8xf32> to vector<128x8xf32>
    %65 = arith.truncf %64 : vector<128x8xf32> to vector<128x8xbf16>
    %c8 = arith.constant 8 : index
    %c0_29 = arith.constant 0 : index
    %c0_30 = arith.constant 0 : index
    %66 = vector.load %arg2[%c8, %c0_29, %c0_30] : memref<9x8x128xbf16, #tpu.memory_space<vmem>>, vector<1x8x128xbf16>
    %67 = vector.shape_cast %66 : vector<1x8x128xbf16> to vector<8x128xbf16>
    %cst_31 = arith.constant dense<0.000000e+00> : vector<128x128xf32>
    %68 = tpu.matmul %65, %67, %cst_31 {dimension_numbers = #tpu.dot_dimension_numbers<[1], [0], [0], [1], [0, 0, 1, 1], [], []>} : vector<128x8xbf16>, vector<8x128xbf16>, vector<128x128xf32> -> vector<128x128xf32>
    %69 = arith.addf %62, %68 : vector<128x128xf32>
    %70 = vector.shape_cast %69 : vector<128x128xf32> to vector<1x8x16x128xf32>
    %c0_32 = arith.constant 0 : index
    %c0_33 = arith.constant 0 : index
    %c0_34 = arith.constant 0 : index
    %c0_35 = arith.constant 0 : index
    %71 = vector.load %arg3[%c0_32, %c0_33, %c0_34, %c0_35] : memref<1x8x16x128xf32, #tpu.memory_space<vmem>>, vector<1x8x16x128xf32>
    tpu.vector_store %arg3[%c0_32, %c0_33, %c0_34, %c0_35], %70 {strides = array<i32>} : memref<1x8x16x128xf32, #tpu.memory_space<vmem>>, vector<1x8x16x128xf32>,
    %c0_36 = arith.constant 0 : index
    %c0_37 = arith.constant 0 : index
    %72 = vector.load %arg4[%c0_36, %c0_37] : memref<1x128xf32, #tpu.memory_space<vmem>>, vector<1x128xf32>
    %cst_38 = arith.constant dense<0.000000e+00> : vector<128xf32>
    %73 = vector.multi_reduction <add>, %69, %cst_38 [0] : vector<128x128xf32> to vector<128xf32>
    %74 = vector.shape_cast %73 : vector<128xf32> to vector<1x128xf32>
    %75 = arith.addf %72, %74 : vector<1x128xf32>
    %c0_39 = arith.constant 0 : index
    %c0_40 = arith.constant 0 : index
    %76 = vector.load %arg4[%c0_39, %c0_40] : memref<1x128xf32, #tpu.memory_space<vmem>>, vector<1x128xf32>
    tpu.vector_store %arg4[%c0_39, %c0_40], %75 {strides = array<i32>} : memref<1x128xf32, #tpu.memory_space<vmem>>, vector<1x128xf32>,
    %c0_41 = arith.constant 0 : index
    %c0_42 = arith.constant 0 : index
    %77 = vector.load %arg5[%c0_41, %c0_42] : memref<1x128xf32, #tpu.memory_space<vmem>>, vector<1x128xf32>
    %78 = arith.mulf %69, %69 : vector<128x128xf32>
    %cst_43 = arith.constant dense<0.000000e+00> : vector<128xf32>
    %79 = vector.multi_reduction <add>, %78, %cst_43 [0] : vector<128x128xf32> to vector<128xf32>
    %80 = vector.shape_cast %79 : vector<128xf32> to vector<1x128xf32>
    %81 = arith.addf %77, %80 : vector<1x128xf32>
    %c0_44 = arith.constant 0 : index
    %c0_45 = arith.constant 0 : index
    %82 = vector.load %arg5[%c0_44, %c0_45] : memref<1x128xf32, #tpu.memory_space<vmem>>, vector<1x128xf32>
    tpu.vector_store %arg5[%c0_44, %c0_45], %81 {strides = array<i32>} : memref<1x128xf32, #tpu.memory_space<vmem>>, vector<1x128xf32>,
    return
  }
  func.func @transform_0(%arg0: i32) -> (i32, i32, i32, i32) {
    %c0_i32 = arith.constant 0 : i32
    %c0_i32_0 = arith.constant 0 : i32
    %c0_i32_1 = arith.constant 0 : i32
    %c0_i32_2 = arith.constant 0 : i32
    return %arg0, %c0_i32, %c0_i32_0, %c0_i32_1 : i32, i32, i32, i32
  }
  func.func @transform_1(%arg0: i32) -> (i32, i32, i32) {
    %c0_i32 = arith.constant 0 : i32
    %c0_i32_0 = arith.constant 0 : i32
    %c0_i32_1 = arith.constant 0 : i32
    %c0_i32_2 = arith.constant 0 : i32
    return %c0_i32, %c0_i32_0, %c0_i32_1 : i32, i32, i32
  }
  func.func @transform_2(%arg0: i32) -> (i32, i32, i32, i32) {
    %c0_i32 = arith.constant 0 : i32
    %c0_i32_0 = arith.constant 0 : i32
    %c0_i32_1 = arith.constant 0 : i32
    %c0_i32_2 = arith.constant 0 : i32
    return %arg0, %c0_i32, %c0_i32_0, %c0_i32_1 : i32, i32, i32, i32
  }
  func.func @transform_3(%arg0: i32) -> (i32, i32) {
    %c0_i32 = arith.constant 0 : i32
    %c0_i32_0 = arith.constant 0 : i32
    %c0_i32_1 = arith.constant 0 : i32
    return %c0_i32, %c0_i32_0 : i32, i32
  }
  func.func @transform_4(%arg0: i32) -> (i32, i32) {
    %c0_i32 = arith.constant 0 : i32
    %c0_i32_0 = arith.constant 0 : i32
    %c0_i32_1 = arith.constant 0 : i32
    return %c0_i32, %c0_i32_0 : i32, i32
  }
}

module attributes {stable_mosaic.version = 11 : i64} {
  func.func @bn_relu_kernel(%arg0: i32, %arg1: memref<1x8x16x128xf32, #tpu.memory_space<vmem>>, %arg2: memref<1x128xf32, #tpu.memory_space<vmem>>, %arg3: memref<1x128xf32, #tpu.memory_space<vmem>>, %arg4: memref<1x8x16x128xbf16, #tpu.memory_space<vmem>>) attributes {dimension_semantics = [#tpu.dimension_semantics<parallel>], iteration_bounds = array<i64: 4>, scalar_prefetch = 0 : i64, scratch_operands = 0 : i64, tpu.core_type = #tpu.core_type<tc>, window_params = [{transform_indices = @transform_0, window_bounds = array<i64: 1, 8, 16, 128>}, {pipeline_mode = #tpu.pipeline_mode<synchronous>, transform_indices = @transform_1, window_bounds = array<i64: 1, 128>}, {pipeline_mode = #tpu.pipeline_mode<synchronous>, transform_indices = @transform_2, window_bounds = array<i64: 1, 128>}, {transform_indices = @transform_3, window_bounds = array<i64: 1, 8, 16, 128>}]} {
    %c0 = arith.constant 0 : index
    %c0_0 = arith.constant 0 : index
    %c0_1 = arith.constant 0 : index
    %c0_2 = arith.constant 0 : index
    %0 = vector.load %arg1[%c0, %c0_0, %c0_1, %c0_2] : memref<1x8x16x128xf32, #tpu.memory_space<vmem>>, vector<1x8x16x128xf32>
    %c0_3 = arith.constant 0 : index
    %c0_4 = arith.constant 0 : index
    %1 = vector.load %arg2[%c0_3, %c0_4] : memref<1x128xf32, #tpu.memory_space<vmem>>, vector<1x128xf32>
    %2 = vector.shape_cast %1 : vector<1x128xf32> to vector<1x1x1x128xf32>
    %3 = vector.broadcast %2 : vector<1x1x1x128xf32> to vector<1x8x16x128xf32>
    %4 = arith.mulf %0, %3 : vector<1x8x16x128xf32>
    %c0_5 = arith.constant 0 : index
    %c0_6 = arith.constant 0 : index
    %5 = vector.load %arg3[%c0_5, %c0_6] : memref<1x128xf32, #tpu.memory_space<vmem>>, vector<1x128xf32>
    %6 = vector.shape_cast %5 : vector<1x128xf32> to vector<1x1x1x128xf32>
    %7 = vector.broadcast %6 : vector<1x1x1x128xf32> to vector<1x8x16x128xf32>
    %8 = arith.addf %4, %7 : vector<1x8x16x128xf32>
    %cst = arith.constant 0.000000e+00 : f32
    %9 = vector.broadcast %cst : f32 to vector<1x8x16x128xf32>
    %10 = arith.maximumf %8, %9 : vector<1x8x16x128xf32>
    %11 = arith.truncf %10 : vector<1x8x16x128xf32> to vector<1x8x16x128xbf16>
    %c0_7 = arith.constant 0 : index
    %c0_8 = arith.constant 0 : index
    %c0_9 = arith.constant 0 : index
    %c0_10 = arith.constant 0 : index
    %12 = vector.load %arg4[%c0_7, %c0_8, %c0_9, %c0_10] : memref<1x8x16x128xbf16, #tpu.memory_space<vmem>>, vector<1x8x16x128xbf16>
    tpu.vector_store %arg4[%c0_7, %c0_8, %c0_9, %c0_10], %11 {strides = array<i32>} : memref<1x8x16x128xbf16, #tpu.memory_space<vmem>>, vector<1x8x16x128xbf16>,
    return
  }
  func.func @transform_0(%arg0: i32) -> (i32, i32, i32, i32) {
    %c0_i32 = arith.constant 0 : i32
    %c0_i32_0 = arith.constant 0 : i32
    %c0_i32_1 = arith.constant 0 : i32
    %c0_i32_2 = arith.constant 0 : i32
    return %arg0, %c0_i32, %c0_i32_0, %c0_i32_1 : i32, i32, i32, i32
  }
  func.func @transform_1(%arg0: i32) -> (i32, i32) {
    %c0_i32 = arith.constant 0 : i32
    %c0_i32_0 = arith.constant 0 : i32
    %c0_i32_1 = arith.constant 0 : i32
    return %c0_i32, %c0_i32_0 : i32, i32
  }
  func.func @transform_2(%arg0: i32) -> (i32, i32) {
    %c0_i32 = arith.constant 0 : i32
    %c0_i32_0 = arith.constant 0 : i32
    %c0_i32_1 = arith.constant 0 : i32
    return %c0_i32, %c0_i32_0 : i32, i32
  }
  func.func @transform_3(%arg0: i32) -> (i32, i32, i32, i32) {
    %c0_i32 = arith.constant 0 : i32
    %c0_i32_0 = arith.constant 0 : i32
    %c0_i32_1 = arith.constant 0 : i32
    %c0_i32_2 = arith.constant 0 : i32
    return %arg0, %c0_i32, %c0_i32_0, %c0_i32_1 : i32, i32, i32, i32
  }
}

module attributes {stable_mosaic.version = 11 : i64} {
  func.func @conv3x3_stats_kernel(%arg0: i32, %arg1: memref<1x10x18x128xbf16, #tpu.memory_space<vmem>>, %arg2: memref<9x128x128xbf16, #tpu.memory_space<vmem>>, %arg3: memref<1x8x16x128xf32, #tpu.memory_space<vmem>>, %arg4: memref<1x128xf32, #tpu.memory_space<vmem>>, %arg5: memref<1x128xf32, #tpu.memory_space<vmem>>) attributes {dimension_semantics = [#tpu.dimension_semantics<arbitrary>], iteration_bounds = array<i64: 4>, scalar_prefetch = 0 : i64, scratch_operands = 0 : i64, tpu.core_type = #tpu.core_type<tc>, window_params = [{transform_indices = @transform_0, window_bounds = array<i64: 1, 10, 18, 128>}, {pipeline_mode = #tpu.pipeline_mode<synchronous>, transform_indices = @transform_1, window_bounds = array<i64: 9, 128, 128>}, {transform_indices = @transform_2, window_bounds = array<i64: 1, 8, 16, 128>}, {pipeline_mode = #tpu.pipeline_mode<synchronous>, transform_indices = @transform_3, window_bounds = array<i64: 1, 128>}, {pipeline_mode = #tpu.pipeline_mode<synchronous>, transform_indices = @transform_4, window_bounds = array<i64: 1, 128>}]} {
    %c0_i32 = arith.constant 0 : i32
    %0 = arith.cmpi eq, %arg0, %c0_i32 : i32
    %1 = arith.extui %0 : i1 to i32
    %c0_i32_0 = arith.constant 0 : i32
    %2 = arith.cmpi ne, %1, %c0_i32_0 : i32
    scf.if %2 {
      %cst_46 = arith.constant 0.000000e+00 : f32
      %83 = vector.broadcast %cst_46 : f32 to vector<1x128xf32>
      %c0_47 = arith.constant 0 : index
      %c0_48 = arith.constant 0 : index
      %84 = vector.load %arg4[%c0_47, %c0_48] : memref<1x128xf32, #tpu.memory_space<vmem>>, vector<1x128xf32>
      tpu.vector_store %arg4[%c0_47, %c0_48], %83 {strides = array<i32>} : memref<1x128xf32, #tpu.memory_space<vmem>>, vector<1x128xf32>,
      %cst_49 = arith.constant 0.000000e+00 : f32
      %85 = vector.broadcast %cst_49 : f32 to vector<1x128xf32>
      %c0_50 = arith.constant 0 : index
      %c0_51 = arith.constant 0 : index
      %86 = vector.load %arg5[%c0_50, %c0_51] : memref<1x128xf32, #tpu.memory_space<vmem>>, vector<1x128xf32>
      tpu.vector_store %arg5[%c0_50, %c0_51], %85 {strides = array<i32>} : memref<1x128xf32, #tpu.memory_space<vmem>>, vector<1x128xf32>,
    } else {
    }
    %c0 = arith.constant 0 : index
    %c0_1 = arith.constant 0 : index
    %c0_2 = arith.constant 0 : index
    %c0_3 = arith.constant 0 : index
    %3 = vector.load %arg1[%c0, %c0_1, %c0_2, %c0_3] : memref<1x10x18x128xbf16, #tpu.memory_space<vmem>>, vector<1x10x18x128xbf16>
    %4 = vector.shape_cast %3 : vector<1x10x18x128xbf16> to vector<10x18x128xbf16>
    %5 = arith.extf %4 : vector<10x18x128xbf16> to vector<10x18x128xf32>
    %cst = arith.constant 0.000000e+00 : f32
    %6 = vector.broadcast %cst : f32 to vector<128x128xf32>
    %7 = vector.extract_strided_slice %5 {offsets = [0, 0, 0], sizes = [8, 16, 128], strides = [1, 1, 1]} : vector<10x18x128xf32> to vector<8x16x128xf32>
    %8 = vector.shape_cast %7 : vector<8x16x128xf32> to vector<128x128xf32>
    %9 = arith.truncf %8 : vector<128x128xf32> to vector<128x128xbf16>
    %c0_4 = arith.constant 0 : index
    %c0_5 = arith.constant 0 : index
    %c0_6 = arith.constant 0 : index
    %10 = vector.load %arg2[%c0_4, %c0_5, %c0_6] : memref<9x128x128xbf16, #tpu.memory_space<vmem>>, vector<1x128x128xbf16>
    %11 = vector.shape_cast %10 : vector<1x128x128xbf16> to vector<128x128xbf16>
    %cst_7 = arith.constant dense<0.000000e+00> : vector<128x128xf32>
    %12 = tpu.matmul %9, %11, %cst_7 {dimension_numbers = #tpu.dot_dimension_numbers<[1], [0], [0], [1], [0, 0, 1, 1], [], []>} : vector<128x128xbf16>, vector<128x128xbf16>, vector<128x128xf32> -> vector<128x128xf32>
    %13 = arith.addf %6, %12 : vector<128x128xf32>
    %14 = vector.extract_strided_slice %5 {offsets = [0, 1, 0], sizes = [8, 16, 128], strides = [1, 1, 1]} : vector<10x18x128xf32> to vector<8x16x128xf32>
    %15 = vector.shape_cast %14 : vector<8x16x128xf32> to vector<128x128xf32>
    %16 = arith.truncf %15 : vector<128x128xf32> to vector<128x128xbf16>
    %c1 = arith.constant 1 : index
    %c0_8 = arith.constant 0 : index
    %c0_9 = arith.constant 0 : index
    %17 = vector.load %arg2[%c1, %c0_8, %c0_9] : memref<9x128x128xbf16, #tpu.memory_space<vmem>>, vector<1x128x128xbf16>
    %18 = vector.shape_cast %17 : vector<1x128x128xbf16> to vector<128x128xbf16>
    %cst_10 = arith.constant dense<0.000000e+00> : vector<128x128xf32>
    %19 = tpu.matmul %16, %18, %cst_10 {dimension_numbers = #tpu.dot_dimension_numbers<[1], [0], [0], [1], [0, 0, 1, 1], [], []>} : vector<128x128xbf16>, vector<128x128xbf16>, vector<128x128xf32> -> vector<128x128xf32>
    %20 = arith.addf %13, %19 : vector<128x128xf32>
    %21 = vector.extract_strided_slice %5 {offsets = [0, 2, 0], sizes = [8, 16, 128], strides = [1, 1, 1]} : vector<10x18x128xf32> to vector<8x16x128xf32>
    %22 = vector.shape_cast %21 : vector<8x16x128xf32> to vector<128x128xf32>
    %23 = arith.truncf %22 : vector<128x128xf32> to vector<128x128xbf16>
    %c2 = arith.constant 2 : index
    %c0_11 = arith.constant 0 : index
    %c0_12 = arith.constant 0 : index
    %24 = vector.load %arg2[%c2, %c0_11, %c0_12] : memref<9x128x128xbf16, #tpu.memory_space<vmem>>, vector<1x128x128xbf16>
    %25 = vector.shape_cast %24 : vector<1x128x128xbf16> to vector<128x128xbf16>
    %cst_13 = arith.constant dense<0.000000e+00> : vector<128x128xf32>
    %26 = tpu.matmul %23, %25, %cst_13 {dimension_numbers = #tpu.dot_dimension_numbers<[1], [0], [0], [1], [0, 0, 1, 1], [], []>} : vector<128x128xbf16>, vector<128x128xbf16>, vector<128x128xf32> -> vector<128x128xf32>
    %27 = arith.addf %20, %26 : vector<128x128xf32>
    %28 = vector.extract_strided_slice %5 {offsets = [1, 0, 0], sizes = [8, 16, 128], strides = [1, 1, 1]} : vector<10x18x128xf32> to vector<8x16x128xf32>
    %29 = vector.shape_cast %28 : vector<8x16x128xf32> to vector<128x128xf32>
    %30 = arith.truncf %29 : vector<128x128xf32> to vector<128x128xbf16>
    %c3 = arith.constant 3 : index
    %c0_14 = arith.constant 0 : index
    %c0_15 = arith.constant 0 : index
    %31 = vector.load %arg2[%c3, %c0_14, %c0_15] : memref<9x128x128xbf16, #tpu.memory_space<vmem>>, vector<1x128x128xbf16>
    %32 = vector.shape_cast %31 : vector<1x128x128xbf16> to vector<128x128xbf16>
    %cst_16 = arith.constant dense<0.000000e+00> : vector<128x128xf32>
    %33 = tpu.matmul %30, %32, %cst_16 {dimension_numbers = #tpu.dot_dimension_numbers<[1], [0], [0], [1], [0, 0, 1, 1], [], []>} : vector<128x128xbf16>, vector<128x128xbf16>, vector<128x128xf32> -> vector<128x128xf32>
    %34 = arith.addf %27, %33 : vector<128x128xf32>
    %35 = vector.extract_strided_slice %5 {offsets = [1, 1, 0], sizes = [8, 16, 128], strides = [1, 1, 1]} : vector<10x18x128xf32> to vector<8x16x128xf32>
    %36 = vector.shape_cast %35 : vector<8x16x128xf32> to vector<128x128xf32>
    %37 = arith.truncf %36 : vector<128x128xf32> to vector<128x128xbf16>
    %c4 = arith.constant 4 : index
    %c0_17 = arith.constant 0 : index
    %c0_18 = arith.constant 0 : index
    %38 = vector.load %arg2[%c4, %c0_17, %c0_18] : memref<9x128x128xbf16, #tpu.memory_space<vmem>>, vector<1x128x128xbf16>
    %39 = vector.shape_cast %38 : vector<1x128x128xbf16> to vector<128x128xbf16>
    %cst_19 = arith.constant dense<0.000000e+00> : vector<128x128xf32>
    %40 = tpu.matmul %37, %39, %cst_19 {dimension_numbers = #tpu.dot_dimension_numbers<[1], [0], [0], [1], [0, 0, 1, 1], [], []>} : vector<128x128xbf16>, vector<128x128xbf16>, vector<128x128xf32> -> vector<128x128xf32>
    %41 = arith.addf %34, %40 : vector<128x128xf32>
    %42 = vector.extract_strided_slice %5 {offsets = [1, 2, 0], sizes = [8, 16, 128], strides = [1, 1, 1]} : vector<10x18x128xf32> to vector<8x16x128xf32>
    %43 = vector.shape_cast %42 : vector<8x16x128xf32> to vector<128x128xf32>
    %44 = arith.truncf %43 : vector<128x128xf32> to vector<128x128xbf16>
    %c5 = arith.constant 5 : index
    %c0_20 = arith.constant 0 : index
    %c0_21 = arith.constant 0 : index
    %45 = vector.load %arg2[%c5, %c0_20, %c0_21] : memref<9x128x128xbf16, #tpu.memory_space<vmem>>, vector<1x128x128xbf16>
    %46 = vector.shape_cast %45 : vector<1x128x128xbf16> to vector<128x128xbf16>
    %cst_22 = arith.constant dense<0.000000e+00> : vector<128x128xf32>
    %47 = tpu.matmul %44, %46, %cst_22 {dimension_numbers = #tpu.dot_dimension_numbers<[1], [0], [0], [1], [0, 0, 1, 1], [], []>} : vector<128x128xbf16>, vector<128x128xbf16>, vector<128x128xf32> -> vector<128x128xf32>
    %48 = arith.addf %41, %47 : vector<128x128xf32>
    %49 = vector.extract_strided_slice %5 {offsets = [2, 0, 0], sizes = [8, 16, 128], strides = [1, 1, 1]} : vector<10x18x128xf32> to vector<8x16x128xf32>
    %50 = vector.shape_cast %49 : vector<8x16x128xf32> to vector<128x128xf32>
    %51 = arith.truncf %50 : vector<128x128xf32> to vector<128x128xbf16>
    %c6 = arith.constant 6 : index
    %c0_23 = arith.constant 0 : index
    %c0_24 = arith.constant 0 : index
    %52 = vector.load %arg2[%c6, %c0_23, %c0_24] : memref<9x128x128xbf16, #tpu.memory_space<vmem>>, vector<1x128x128xbf16>
    %53 = vector.shape_cast %52 : vector<1x128x128xbf16> to vector<128x128xbf16>
    %cst_25 = arith.constant dense<0.000000e+00> : vector<128x128xf32>
    %54 = tpu.matmul %51, %53, %cst_25 {dimension_numbers = #tpu.dot_dimension_numbers<[1], [0], [0], [1], [0, 0, 1, 1], [], []>} : vector<128x128xbf16>, vector<128x128xbf16>, vector<128x128xf32> -> vector<128x128xf32>
    %55 = arith.addf %48, %54 : vector<128x128xf32>
    %56 = vector.extract_strided_slice %5 {offsets = [2, 1, 0], sizes = [8, 16, 128], strides = [1, 1, 1]} : vector<10x18x128xf32> to vector<8x16x128xf32>
    %57 = vector.shape_cast %56 : vector<8x16x128xf32> to vector<128x128xf32>
    %58 = arith.truncf %57 : vector<128x128xf32> to vector<128x128xbf16>
    %c7 = arith.constant 7 : index
    %c0_26 = arith.constant 0 : index
    %c0_27 = arith.constant 0 : index
    %59 = vector.load %arg2[%c7, %c0_26, %c0_27] : memref<9x128x128xbf16, #tpu.memory_space<vmem>>, vector<1x128x128xbf16>
    %60 = vector.shape_cast %59 : vector<1x128x128xbf16> to vector<128x128xbf16>
    %cst_28 = arith.constant dense<0.000000e+00> : vector<128x128xf32>
    %61 = tpu.matmul %58, %60, %cst_28 {dimension_numbers = #tpu.dot_dimension_numbers<[1], [0], [0], [1], [0, 0, 1, 1], [], []>} : vector<128x128xbf16>, vector<128x128xbf16>, vector<128x128xf32> -> vector<128x128xf32>
    %62 = arith.addf %55, %61 : vector<128x128xf32>
    %63 = vector.extract_strided_slice %5 {offsets = [2, 2, 0], sizes = [8, 16, 128], strides = [1, 1, 1]} : vector<10x18x128xf32> to vector<8x16x128xf32>
    %64 = vector.shape_cast %63 : vector<8x16x128xf32> to vector<128x128xf32>
    %65 = arith.truncf %64 : vector<128x128xf32> to vector<128x128xbf16>
    %c8 = arith.constant 8 : index
    %c0_29 = arith.constant 0 : index
    %c0_30 = arith.constant 0 : index
    %66 = vector.load %arg2[%c8, %c0_29, %c0_30] : memref<9x128x128xbf16, #tpu.memory_space<vmem>>, vector<1x128x128xbf16>
    %67 = vector.shape_cast %66 : vector<1x128x128xbf16> to vector<128x128xbf16>
    %cst_31 = arith.constant dense<0.000000e+00> : vector<128x128xf32>
    %68 = tpu.matmul %65, %67, %cst_31 {dimension_numbers = #tpu.dot_dimension_numbers<[1], [0], [0], [1], [0, 0, 1, 1], [], []>} : vector<128x128xbf16>, vector<128x128xbf16>, vector<128x128xf32> -> vector<128x128xf32>
    %69 = arith.addf %62, %68 : vector<128x128xf32>
    %70 = vector.shape_cast %69 : vector<128x128xf32> to vector<1x8x16x128xf32>
    %c0_32 = arith.constant 0 : index
    %c0_33 = arith.constant 0 : index
    %c0_34 = arith.constant 0 : index
    %c0_35 = arith.constant 0 : index
    %71 = vector.load %arg3[%c0_32, %c0_33, %c0_34, %c0_35] : memref<1x8x16x128xf32, #tpu.memory_space<vmem>>, vector<1x8x16x128xf32>
    tpu.vector_store %arg3[%c0_32, %c0_33, %c0_34, %c0_35], %70 {strides = array<i32>} : memref<1x8x16x128xf32, #tpu.memory_space<vmem>>, vector<1x8x16x128xf32>,
    %c0_36 = arith.constant 0 : index
    %c0_37 = arith.constant 0 : index
    %72 = vector.load %arg4[%c0_36, %c0_37] : memref<1x128xf32, #tpu.memory_space<vmem>>, vector<1x128xf32>
    %cst_38 = arith.constant dense<0.000000e+00> : vector<128xf32>
    %73 = vector.multi_reduction <add>, %69, %cst_38 [0] : vector<128x128xf32> to vector<128xf32>
    %74 = vector.shape_cast %73 : vector<128xf32> to vector<1x128xf32>
    %75 = arith.addf %72, %74 : vector<1x128xf32>
    %c0_39 = arith.constant 0 : index
    %c0_40 = arith.constant 0 : index
    %76 = vector.load %arg4[%c0_39, %c0_40] : memref<1x128xf32, #tpu.memory_space<vmem>>, vector<1x128xf32>
    tpu.vector_store %arg4[%c0_39, %c0_40], %75 {strides = array<i32>} : memref<1x128xf32, #tpu.memory_space<vmem>>, vector<1x128xf32>,
    %c0_41 = arith.constant 0 : index
    %c0_42 = arith.constant 0 : index
    %77 = vector.load %arg5[%c0_41, %c0_42] : memref<1x128xf32, #tpu.memory_space<vmem>>, vector<1x128xf32>
    %78 = arith.mulf %69, %69 : vector<128x128xf32>
    %cst_43 = arith.constant dense<0.000000e+00> : vector<128xf32>
    %79 = vector.multi_reduction <add>, %78, %cst_43 [0] : vector<128x128xf32> to vector<128xf32>
    %80 = vector.shape_cast %79 : vector<128xf32> to vector<1x128xf32>
    %81 = arith.addf %77, %80 : vector<1x128xf32>
    %c0_44 = arith.constant 0 : index
    %c0_45 = arith.constant 0 : index
    %82 = vector.load %arg5[%c0_44, %c0_45] : memref<1x128xf32, #tpu.memory_space<vmem>>, vector<1x128xf32>
    tpu.vector_store %arg5[%c0_44, %c0_45], %81 {strides = array<i32>} : memref<1x128xf32, #tpu.memory_space<vmem>>, vector<1x128xf32>,
    return
  }
  func.func @transform_0(%arg0: i32) -> (i32, i32, i32, i32) {
    %c0_i32 = arith.constant 0 : i32
    %c0_i32_0 = arith.constant 0 : i32
    %c0_i32_1 = arith.constant 0 : i32
    %c0_i32_2 = arith.constant 0 : i32
    return %arg0, %c0_i32, %c0_i32_0, %c0_i32_1 : i32, i32, i32, i32
  }
  func.func @transform_1(%arg0: i32) -> (i32, i32, i32) {
    %c0_i32 = arith.constant 0 : i32
    %c0_i32_0 = arith.constant 0 : i32
    %c0_i32_1 = arith.constant 0 : i32
    %c0_i32_2 = arith.constant 0 : i32
    return %c0_i32, %c0_i32_0, %c0_i32_1 : i32, i32, i32
  }
  func.func @transform_2(%arg0: i32) -> (i32, i32, i32, i32) {
    %c0_i32 = arith.constant 0 : i32
    %c0_i32_0 = arith.constant 0 : i32
    %c0_i32_1 = arith.constant 0 : i32
    %c0_i32_2 = arith.constant 0 : i32
    return %arg0, %c0_i32, %c0_i32_0, %c0_i32_1 : i32, i32, i32, i32
  }
  func.func @transform_3(%arg0: i32) -> (i32, i32) {
    %c0_i32 = arith.constant 0 : i32
    %c0_i32_0 = arith.constant 0 : i32
    %c0_i32_1 = arith.constant 0 : i32
    return %c0_i32, %c0_i32_0 : i32, i32
  }
  func.func @transform_4(%arg0: i32) -> (i32, i32) {
    %c0_i32 = arith.constant 0 : i32
    %c0_i32_0 = arith.constant 0 : i32
    %c0_i32_1 = arith.constant 0 : i32
    return %c0_i32, %c0_i32_0 : i32, i32
  }
}

module attributes {stable_mosaic.version = 11 : i64} {
  func.func @bn_relu_skip_kernel(%arg0: i32, %arg1: memref<1x8x16x128xf32, #tpu.memory_space<vmem>>, %arg2: memref<1x128xf32, #tpu.memory_space<vmem>>, %arg3: memref<1x128xf32, #tpu.memory_space<vmem>>, %arg4: memref<1x8x16x8xbf16, #tpu.memory_space<vmem>>, %arg5: memref<8x128xbf16, #tpu.memory_space<vmem>>, %arg6: memref<1x128xf32, #tpu.memory_space<vmem>>, %arg7: memref<1x8x16x128xf32, #tpu.memory_space<vmem>>) attributes {dimension_semantics = [#tpu.dimension_semantics<parallel>], iteration_bounds = array<i64: 4>, scalar_prefetch = 0 : i64, scratch_operands = 0 : i64, tpu.core_type = #tpu.core_type<tc>, window_params = [{transform_indices = @transform_0, window_bounds = array<i64: 1, 8, 16, 128>}, {pipeline_mode = #tpu.pipeline_mode<synchronous>, transform_indices = @transform_1, window_bounds = array<i64: 1, 128>}, {pipeline_mode = #tpu.pipeline_mode<synchronous>, transform_indices = @transform_2, window_bounds = array<i64: 1, 128>}, {transform_indices = @transform_3, window_bounds = array<i64: 1, 8, 16, 8>}, {pipeline_mode = #tpu.pipeline_mode<synchronous>, transform_indices = @transform_4, window_bounds = array<i64: 8, 128>}, {pipeline_mode = #tpu.pipeline_mode<synchronous>, transform_indices = @transform_5, window_bounds = array<i64: 1, 128>}, {transform_indices = @transform_6, window_bounds = array<i64: 1, 8, 16, 128>}]} {
    %c0 = arith.constant 0 : index
    %c0_0 = arith.constant 0 : index
    %c0_1 = arith.constant 0 : index
    %c0_2 = arith.constant 0 : index
    %0 = vector.load %arg1[%c0, %c0_0, %c0_1, %c0_2] : memref<1x8x16x128xf32, #tpu.memory_space<vmem>>, vector<1x8x16x128xf32>
    %1 = vector.shape_cast %0 : vector<1x8x16x128xf32> to vector<8x16x128xf32>
    %2 = vector.shape_cast %1 : vector<8x16x128xf32> to vector<128x128xf32>
    %c0_3 = arith.constant 0 : index
    %c0_4 = arith.constant 0 : index
    %3 = vector.load %arg2[%c0_3, %c0_4] : memref<1x128xf32, #tpu.memory_space<vmem>>, vector<1x128xf32>
    %4 = vector.broadcast %3 : vector<1x128xf32> to vector<128x128xf32>
    %5 = arith.mulf %2, %4 : vector<128x128xf32>
    %c0_5 = arith.constant 0 : index
    %c0_6 = arith.constant 0 : index
    %6 = vector.load %arg3[%c0_5, %c0_6] : memref<1x128xf32, #tpu.memory_space<vmem>>, vector<1x128xf32>
    %7 = vector.broadcast %6 : vector<1x128xf32> to vector<128x128xf32>
    %8 = arith.addf %5, %7 : vector<128x128xf32>
    %cst = arith.constant 0.000000e+00 : f32
    %9 = vector.broadcast %cst : f32 to vector<128x128xf32>
    %10 = arith.maximumf %8, %9 : vector<128x128xf32>
    %c0_7 = arith.constant 0 : index
    %c0_8 = arith.constant 0 : index
    %c0_9 = arith.constant 0 : index
    %c0_10 = arith.constant 0 : index
    %11 = vector.load %arg4[%c0_7, %c0_8, %c0_9, %c0_10] : memref<1x8x16x8xbf16, #tpu.memory_space<vmem>>, vector<1x8x16x8xbf16>
    %12 = vector.shape_cast %11 : vector<1x8x16x8xbf16> to vector<8x16x8xbf16>
    %13 = vector.shape_cast %12 : vector<8x16x8xbf16> to vector<128x8xbf16>
    %c0_11 = arith.constant 0 : index
    %c0_12 = arith.constant 0 : index
    %14 = vector.load %arg5[%c0_11, %c0_12] : memref<8x128xbf16, #tpu.memory_space<vmem>>, vector<8x128xbf16>
    %cst_13 = arith.constant dense<0.000000e+00> : vector<128x128xf32>
    %15 = tpu.matmul %13, %14, %cst_13 {dimension_numbers = #tpu.dot_dimension_numbers<[1], [0], [0], [1], [0, 0, 1, 1], [], []>} : vector<128x8xbf16>, vector<8x128xbf16>, vector<128x128xf32> -> vector<128x128xf32>
    %c0_14 = arith.constant 0 : index
    %c0_15 = arith.constant 0 : index
    %16 = vector.load %arg6[%c0_14, %c0_15] : memref<1x128xf32, #tpu.memory_space<vmem>>, vector<1x128xf32>
    %17 = vector.broadcast %16 : vector<1x128xf32> to vector<128x128xf32>
    %18 = arith.addf %15, %17 : vector<128x128xf32>
    %19 = arith.addf %10, %18 : vector<128x128xf32>
    %20 = vector.shape_cast %19 : vector<128x128xf32> to vector<1x8x16x128xf32>
    %c0_16 = arith.constant 0 : index
    %c0_17 = arith.constant 0 : index
    %c0_18 = arith.constant 0 : index
    %c0_19 = arith.constant 0 : index
    %21 = vector.load %arg7[%c0_16, %c0_17, %c0_18, %c0_19] : memref<1x8x16x128xf32, #tpu.memory_space<vmem>>, vector<1x8x16x128xf32>
    tpu.vector_store %arg7[%c0_16, %c0_17, %c0_18, %c0_19], %20 {strides = array<i32>} : memref<1x8x16x128xf32, #tpu.memory_space<vmem>>, vector<1x8x16x128xf32>,
    return
  }
  func.func @transform_0(%arg0: i32) -> (i32, i32, i32, i32) {
    %c0_i32 = arith.constant 0 : i32
    %c0_i32_0 = arith.constant 0 : i32
    %c0_i32_1 = arith.constant 0 : i32
    %c0_i32_2 = arith.constant 0 : i32
    return %arg0, %c0_i32, %c0_i32_0, %c0_i32_1 : i32, i32, i32, i32
  }
  func.func @transform_1(%arg0: i32) -> (i32, i32) {
    %c0_i32 = arith.constant 0 : i32
    %c0_i32_0 = arith.constant 0 : i32
    %c0_i32_1 = arith.constant 0 : i32
    return %c0_i32, %c0_i32_0 : i32, i32
  }
  func.func @transform_2(%arg0: i32) -> (i32, i32) {
    %c0_i32 = arith.constant 0 : i32
    %c0_i32_0 = arith.constant 0 : i32
    %c0_i32_1 = arith.constant 0 : i32
    return %c0_i32, %c0_i32_0 : i32, i32
  }
  func.func @transform_3(%arg0: i32) -> (i32, i32, i32, i32) {
    %c0_i32 = arith.constant 0 : i32
    %c0_i32_0 = arith.constant 0 : i32
    %c0_i32_1 = arith.constant 0 : i32
    %c0_i32_2 = arith.constant 0 : i32
    return %arg0, %c0_i32, %c0_i32_0, %c0_i32_1 : i32, i32, i32, i32
  }
  func.func @transform_4(%arg0: i32) -> (i32, i32) {
    %c0_i32 = arith.constant 0 : i32
    %c0_i32_0 = arith.constant 0 : i32
    %c0_i32_1 = arith.constant 0 : i32
    return %c0_i32, %c0_i32_0 : i32, i32
  }
  func.func @transform_5(%arg0: i32) -> (i32, i32) {
    %c0_i32 = arith.constant 0 : i32
    %c0_i32_0 = arith.constant 0 : i32
    %c0_i32_1 = arith.constant 0 : i32
    return %c0_i32, %c0_i32_0 : i32, i32
  }
  func.func @transform_6(%arg0: i32) -> (i32, i32, i32, i32) {
    %c0_i32 = arith.constant 0 : i32
    %c0_i32_0 = arith.constant 0 : i32
    %c0_i32_1 = arith.constant 0 : i32
    %c0_i32_2 = arith.constant 0 : i32
    return %arg0, %c0_i32, %c0_i32_0, %c0_i32_1 : i32, i32, i32, i32
  }
}

</mosaic_0001>

<llo_original>
// kernel: encoding_block_forward.5
$region0: #{encoding_block_forward.5}
  #allocation0 [shape = 'u32[]', space=smem, size = 0x4, offset = 0x4, fixed_abs, tag = 'smem constant byte address 0x4 - core index']
  #allocation1 [shape = 'u32[72,128]{1,0:T(1,128)}', space=vmem, size = 0x9000, scoped, tag = 'internal scratch']
  %s0 = inlined_call_operand.vmem [shape: f32[4,8,16,128], index: 0, kind: input, shape index: {}]
  %s1 = inlined_call_operand.vmem [shape: f32[1,128], index: 1, kind: input, shape index: {}]
  %s2 = inlined_call_operand.vmem [shape: f32[1,128], index: 2, kind: input, shape index: {}]
  %s3 = inlined_call_operand.vmem [shape: bf16[4,8,16,128], index: 3, kind: output, shape index: {}]
  %s4 = sld [smem:[#allocation0]]
  $region45: #{encoding_block_forward.5} parent=0
    _
  %s6 = ssub.s32 1, %s4
  %s7 = scalar_select 0, %s6, %s4
  loop: start=0, step=1, limit=6
  $region2: #{encoding_block_forward.5} parent=0 // loop_pre_header
    _
  $region3: #{encoding_block_forward.5} parent=0 // loop_header
    %s9 = sphi 0, %s13
    %p10 = scmp.ge.s32.totalorder %s9, 6
    %s19 = sphi 0, %s21
    %s22 = sphi 0, %s19
    %s23 = sphi 0, %s22
    %s39 = sphi 0, %s23
    %s43 = sphi 0, %s43
    %s45 = sphi 0, %s43
    %s46 = sphi 0, %s45
    %s60 = sphi 0, %s46
    %s64 = sphi 0, %s64
    %s66 = sphi 0, %s64
    %s67 = sphi 0, %s66
    %s81 = sphi 0, %s67
    %s87 = sphi 0, %s89
    %s90 = sphi 0, %s87
    %s91 = sphi 0, %s90
    %s107 = sphi 0, %s91
  $region4: #{encoding_block_forward.5} parent=0 // loop_header_branch
    %12 = sbr.rel (%p10) target = $region8
  $region5: #{encoding_block_forward.5} parent=0 // loop_body
    %s14 = ssub.s32 %s9, 1
    %s15 = ssub.s32 %s9, 2
    %s16 = sadd.s32 %s9, 1
    %s17 = ssub.s32 %s9, %s16
    %p18 = scmp.eq.s32.totalorder %s17, 0
    %s20 = sadd.s32 %s19, 1
    %s21 = scalar_select %p18, %s19, %s20
    %p24 = pneg %p18
    %p25 = scmp.eq.s32.totalorder %s9, 3
    %p26 = por %p24, %p25
    %p27 = scmp.ne.s32.totalorder %s19, %s22
    %p28 = scmp.eq.s32.totalorder %s9, 0
    %p29 = por %p27, %p28
    %p30 = scmp.ne.s32.totalorder %s19, %s22
    %p31 = scmp.eq.s32.totalorder %s14, 3
    %p32 = por %p30, %p31
    %p33 = scmp.ne.s32.totalorder %s22, %s23
    %p34 = scmp.eq.s32.totalorder %s14, 0
    %p35 = por %p33, %p34
    %p36 = scmp.ne.s32.totalorder %s22, %s23
    %p37 = scmp.eq.s32.totalorder %s15, 3
    %p38 = por %p36, %p37
    %p40 = scmp.ne.s32.totalorder %s23, %s39
    %p41 = scmp.eq.s32.totalorder %s15, 0
    %p42 = por %p40, %p41
    %s44 = sadd.s32 %s43, 1
    %p47 = scmp.eq.s32.totalorder %s9, 3
    %p48 = scmp.ne.s32.totalorder %s43, %s45
    %p49 = scmp.eq.s32.totalorder %s9, 0
    %p50 = por %p48, %p49
    %p51 = scmp.ne.s32.totalorder %s43, %s45
    %p52 = scmp.eq.s32.totalorder %s14, 3
    %p53 = por %p51, %p52
    %p54 = scmp.ne.s32.totalorder %s45, %s46
    %p55 = scmp.eq.s32.totalorder %s14, 0
    %p56 = por %p54, %p55
    %p57 = scmp.ne.s32.totalorder %s45, %s46
    %p58 = scmp.eq.s32.totalorder %s15, 3
    %p59 = por %p57, %p58
    %p61 = scmp.ne.s32.totalorder %s46, %s60
    %p62 = scmp.eq.s32.totalorder %s15, 0
    %p63 = por %p61, %p62
    %s65 = sadd.s32 %s64, 1
    %p68 = scmp.eq.s32.totalorder %s9, 3
    %p69 = scmp.ne.s32.totalorder %s64, %s66
    %p70 = scmp.eq.s32.totalorder %s9, 0
    %p71 = por %p69, %p70
    %p72 = scmp.ne.s32.totalorder %s64, %s66
    %p73 = scmp.eq.s32.totalorder %s14, 3
    %p74 = por %p72, %p73
    %p75 = scmp.ne.s32.totalorder %s66, %s67
    %p76 = scmp.eq.s32.totalorder %s14, 0
    %p77 = por %p75, %p76
    %p78 = scmp.ne.s32.totalorder %s66, %s67
    %p79 = scmp.eq.s32.totalorder %s15, 3
    %p80 = por %p78, %p79
    %p82 = scmp.ne.s32.totalorder %s67, %s81
    %p83 = scmp.eq.s32.totalorder %s15, 0
    %p84 = por %p82, %p83
    %s85 = ssub.s32 %s9, %s16
    %p86 = scmp.eq.s32.totalorder %s85, 0
    %s88 = sadd.s32 %s87, 1
    %s89 = scalar_select %p86, %s87, %s88
    %p92 = pneg %p86
    %p93 = scmp.eq.s32.totalorder %s9, 3
    %p94 = por %p92, %p93
    %p95 = scmp.ne.s32.totalorder %s87, %s90
    %p96 = scmp.eq.s32.totalorder %s9, 0
    %p97 = por %p95, %p96
    %p98 = scmp.ne.s32.totalorder %s87, %s90
    %p99 = scmp.eq.s32.totalorder %s14, 3
    %p100 = por %p98, %p99
    %p101 = scmp.ne.s32.totalorder %s90, %s91
    %p102 = scmp.eq.s32.totalorder %s14, 0
    %p103 = por %p101, %p102
    %p104 = scmp.ne.s32.totalorder %s90, %s91
    %p105 = scmp.eq.s32.totalorder %s15, 3
    %p106 = por %p104, %p105
    %p108 = scmp.ne.s32.totalorder %s91, %s107
    %p109 = scmp.eq.s32.totalorder %s15, 0
    %p110 = por %p108, %p109
    %p111 = scmp.le.s32.totalorder 1, %s9
    %p112 = scmp.lt.s32.totalorder %s9, 5
    %p113 = pnand %p111, %p112
    %p114 = pneg %p113
    // Predicated region
    $region9: #{encoding_block_forward.5} parent=5 // pred_check
      _
    $region10: #{encoding_block_forward.5} parent=5 // pred_check_branch
      %116 = sbr.rel (%p113) target = $region12
    $region11: #{encoding_block_forward.5} parent=5 // pred_region
      %s117 = ssub.s32 %s9, 1
      // Predicated region
      $region13: #{encoding_block_forward.5} parent=11 // pred_check
        %p118 = pneg %p56
      $region14: #{encoding_block_forward.5} parent=11 // pred_check_branch
        %120 = sbr.rel (%p118) target = $region16
      $region15: #{encoding_block_forward.5} parent=11 // pred_region
        _
      $region16: #{encoding_block_forward.5} parent=11 // pred_fallthru
        _
      // Predicated region
      $region17: #{encoding_block_forward.5} parent=11 // pred_check
        %p121 = pneg %p77
      $region18: #{encoding_block_forward.5} parent=11 // pred_check_branch
        %123 = sbr.rel (%p121) target = $region20
      $region19: #{encoding_block_forward.5} parent=11 // pred_region
        _
      $region20: #{encoding_block_forward.5} parent=11 // pred_fallthru
        _
    $region12: #{encoding_block_forward.5} parent=5 // pred_fallthru
      _
    %p124 = scmp.lt.s32.totalorder %s9, 4
    // Predicated region
    $region21: #{encoding_block_forward.5} parent=5 // pred_check
      %p125 = pneg %p124
    $region22: #{encoding_block_forward.5} parent=5 // pred_check_branch
      %127 = sbr.rel (%p125) target = $region24
    $region23: #{encoding_block_forward.5} parent=5 // pred_region
      // Predicated region
      $region25: #{encoding_block_forward.5} parent=23 // pred_check
        %p128 = pneg %p29
      $region26: #{encoding_block_forward.5} parent=23 // pred_check_branch
        %130 = sbr.rel (%p128) target = $region28
      $region27: #{encoding_block_forward.5} parent=23 // pred_region
        %p131 = scmp.lt.s32.totalorder %s9, 3
        %s132 = scalar_select %p131, %s9, 3
        %s133 = smul.addr %s132, 16
        %s134 = smul.addr %s133, 8
        %s135 = scalar_lea.vmem %s0, %s134
      $region28: #{encoding_block_forward.5} parent=23 // pred_fallthru
        _
    $region24: #{encoding_block_forward.5} parent=5 // pred_fallthru
      _
    %p136 = scmp.le.s32.totalorder 1, %s9
    %p137 = scmp.lt.s32.totalorder %s9, 5
    %p138 = pnand %p136, %p137
    %p139 = pneg %p138
    // Predicated region
    $region29: #{encoding_block_forward.5} parent=5 // pred_check
      _
    $region30: #{encoding_block_forward.5} parent=5 // pred_check_branch
      %141 = sbr.rel (%p138) target = $region32
    $region31: #{encoding_block_forward.5} parent=5 // pred_region
      %s142 = ssub.s32 %s9, 1
      %p143 = scmp.lt.s32.totalorder %s14, 3
      %s144 = scalar_select %p143, %s14, 3
      %s145 = smul.addr %s144, 16
      %s146 = smul.addr %s145, 8
      %s147 = scalar_lea.vmem %s0, %s146
      %p148 = pneg %p35
      %p149 = pneg %p32
      %p150 = pneg %p56
      %p151 = pneg %p53
      %p152 = pneg %p77
      %p153 = pneg %p74
      %p154 = pneg %p103
      %p155 = pneg %p100
      %p156 = scmp.lt.s32.totalorder %s14, 3
      %s157 = scalar_select %p156, %s14, 3
      %s158 = smul.addr %s157, 16
      %s159 = smul.addr %s158, 4
      %s160 = scalar_lea.vmem %s3, %s159
      %p161 = scmp.lt.s32.totalorder %s14, 3
      %s162 = scalar_select %p161, %s14, 3
      %s163 = smul.addr %s162, 16
      %s164 = smul.addr %s163, 8
      %s165 = scalar_lea.vmem %s0, %s164
      %p166 = scmp.lt.s32.totalorder %s14, 3
      %s167 = scalar_select %p166, %s14, 3
      %s168 = smul.addr %s167, 16
      %s169 = smul.addr %s168, 4
      %s170 = scalar_lea.vmem %s3, %s169
      %v171 = vld [vmem:[%s165] sm:$0xff]
      %v172 = vld [vmem:[%s165 + $0x8] sm:$0xff]
      %v173 = vld [vmem:[%s165 + $0x10] sm:$0xff]
      %v174 = vld [vmem:[%s165 + $0x18] sm:$0xff]
      %v175 = vld [vmem:[%s165 + $0x20] sm:$0xff]
      %v176 = vld [vmem:[%s165 + $0x28] sm:$0xff]
      %v177 = vld [vmem:[%s165 + $0x30] sm:$0xff]
      %v178 = vld [vmem:[%s165 + $0x38] sm:$0xff]
      %v179 = vld [vmem:[%s165 + $0x40] sm:$0xff]
      %v180 = vld [vmem:[%s165 + $0x48] sm:$0xff]
      %v181 = vld [vmem:[%s165 + $0x50] sm:$0xff]
      %v182 = vld [vmem:[%s165 + $0x58] sm:$0xff]
      %v183 = vld [vmem:[%s165 + $0x60] sm:$0xff]
      %v184 = vld [vmem:[%s165 + $0x68] sm:$0xff]
      %v185 = vld [vmem:[%s165 + $0x70] sm:$0xff]
      %v186 = vld [vmem:[%s165 + $0x78] sm:$0xff]
      %v187 = vld [vmem:[%s1] sm:$0x1]
      %v189 = vperm.slane %v187, 0
      %v191 = vmul.f32 %v171, %v189
      %v192 = vmul.f32 %v172, %v189
      %v193 = vmul.f32 %v173, %v189
      %v194 = vmul.f32 %v174, %v189
      %v195 = vmul.f32 %v175, %v189
      %v196 = vmul.f32 %v176, %v189
      %v197 = vmul.f32 %v177, %v189
      %v198 = vmul.f32 %v178, %v189
      %v199 = vmul.f32 %v179, %v189
      %v200 = vmul.f32 %v180, %v189
      %v201 = vmul.f32 %v181, %v189
      %v202 = vmul.f32 %v182, %v189
      %v203 = vmul.f32 %v183, %v189
      %v204 = vmul.f32 %v184, %v189
      %v205 = vmul.f32 %v185, %v189
      %v206 = vmul.f32 %v186, %v189
      %v207 = vld [vmem:[%s2] sm:$0x1]
      %v209 = vperm.slane %v207, 0
      %v211 = vadd.f32 %v191, %v209
      %v212 = vadd.f32 %v192, %v209
      %v213 = vadd.f32 %v193, %v209
      %v214 = vadd.f32 %v194, %v209
      %v215 = vadd.f32 %v195, %v209
      %v216 = vadd.f32 %v196, %v209
      %v217 = vadd.f32 %v197, %v209
      %v218 = vadd.f32 %v198, %v209
      %v219 = vadd.f32 %v199, %v209
      %v220 = vadd.f32 %v200, %v209
      %v221 = vadd.f32 %v201, %v209
      %v222 = vadd.f32 %v202, %v209
      %v223 = vadd.f32 %v203, %v209
      %v224 = vadd.f32 %v204, %v209
      %v225 = vadd.f32 %v205, %v209
      %v226 = vadd.f32 %v206, %v209
      %v227 = vmax.f32 %v211, 0.0
      %v228 = vmax.f32 %v212, 0.0
      %v229 = vmax.f32 %v213, 0.0
      %v230 = vmax.f32 %v214, 0.0
      %v231 = vmax.f32 %v215, 0.0
      %v232 = vmax.f32 %v216, 0.0
      %v233 = vmax.f32 %v217, 0.0
      %v234 = vmax.f32 %v218, 0.0
      %v235 = vmax.f32 %v219, 0.0
      %v236 = vmax.f32 %v220, 0.0
      %v237 = vmax.f32 %v221, 0.0
      %v238 = vmax.f32 %v222, 0.0
      %v239 = vmax.f32 %v223, 0.0
      %v240 = vmax.f32 %v224, 0.0
      %v241 = vmax.f32 %v225, 0.0
      %v242 = vmax.f32 %v226, 0.0
      %v243 = vpack.c.bf16 %v227, %v227
      %v244 = vpack.c.bf16 %v228, %v228
      %v245 = vpack.c.bf16 %v229, %v229
      %v246 = vpack.c.bf16 %v230, %v230
      %v247 = vpack.c.bf16 %v231, %v231
      %v248 = vpack.c.bf16 %v232, %v232
      %v249 = vpack.c.bf16 %v233, %v233
      %v250 = vpack.c.bf16 %v234, %v234
      %v251 = vpack.c.bf16 %v235, %v235
      %v252 = vpack.c.bf16 %v236, %v236
      %v253 = vpack.c.bf16 %v237, %v237
      %v254 = vpack.c.bf16 %v238, %v238
      %v255 = vpack.c.bf16 %v239, %v239
      %v256 = vpack.c.bf16 %v240, %v240
      %v257 = vpack.c.bf16 %v241, %v241
      %v258 = vpack.c.bf16 %v242, %v242
      %259 = vst [vmem:[%s170] sm:$0xf] %v243
      %260 = vst [vmem:[%s170 + $0x4] sm:$0xf] %v244
      %261 = vst [vmem:[%s170 + $0x8] sm:$0xf] %v245
      %262 = vst [vmem:[%s170 + $0xc] sm:$0xf] %v246
      %263 = vst [vmem:[%s170 + $0x10] sm:$0xf] %v247
      %264 = vst [vmem:[%s170 + $0x14] sm:$0xf] %v248
      %265 = vst [vmem:[%s170 + $0x18] sm:$0xf] %v249
      %266 = vst [vmem:[%s170 + $0x1c] sm:$0xf] %v250
      %267 = vst [vmem:[%s170 + $0x20] sm:$0xf] %v251
      %268 = vst [vmem:[%s170 + $0x24] sm:$0xf] %v252
      %269 = vst [vmem:[%s170 + $0x28] sm:$0xf] %v253
      %270 = vst [vmem:[%s170 + $0x2c] sm:$0xf] %v254
      %271 = vst [vmem:[%s170 + $0x30] sm:$0xf] %v255
      %272 = vst [vmem:[%s170 + $0x34] sm:$0xf] %v256
      %273 = vst [vmem:[%s170 + $0x38] sm:$0xf] %v257
      %274 = vst [vmem:[%s170 + $0x3c] sm:$0xf] %v258
      %p275 = scmp.lt.s32.totalorder %s14, 3
      %s276 = scalar_select %p275, %s14, 3
      %s277 = smul.addr %s276, 16
      %s278 = smul.addr %s277, 4
      %s279 = scalar_lea.vmem %s3, %s278
      // Predicated region
      $region33: #{encoding_block_forward.5} parent=31 // pred_check
        %p280 = pneg %p100
      $region34: #{encoding_block_forward.5} parent=31 // pred_check_branch
        %282 = sbr.rel (%p280) target = $region36
      $region35: #{encoding_block_forward.5} parent=31 // pred_region
        _
      $region36: #{encoding_block_forward.5} parent=31 // pred_fallthru
        _
    $region32: #{encoding_block_forward.5} parent=5 // pred_fallthru
      _
    %p283 = scmp.le.s32.totalorder 2, %s9
    // Predicated region
    $region37: #{encoding_block_forward.5} parent=5 // pred_check
      %p284 = pneg %p283
    $region38: #{encoding_block_forward.5} parent=5 // pred_check_branch
      %286 = sbr.rel (%p284) target = $region40
    $region39: #{encoding_block_forward.5} parent=5 // pred_region
      %s287 = ssub.s32 %s9, 2
      // Predicated region
      $region41: #{encoding_block_forward.5} parent=39 // pred_check
        %p288 = pneg %p106
      $region42: #{encoding_block_forward.5} parent=39 // pred_check_branch
        %290 = sbr.rel (%p288) target = $region44
      $region43: #{encoding_block_forward.5} parent=39 // pred_region
        %p291 = scmp.lt.s32.totalorder %s15, 3
        %s292 = scalar_select %p291, %s15, 3
        %s293 = smul.addr %s292, 16
        %s294 = smul.addr %s293, 4
        %s295 = scalar_lea.vmem %s3, %s294
      $region44: #{encoding_block_forward.5} parent=39 // pred_fallthru
        _
    $region40: #{encoding_block_forward.5} parent=5 // pred_fallthru
      _
  $region6: #{encoding_block_forward.5} parent=0 // loop_footer
    %s13 = sadd.s32 1, %s9
  $region7: #{encoding_block_forward.5} parent=0 // loop_footer_branch
    %8 = sbr.rel target = $region3
  $region8: #{encoding_block_forward.5} parent=0 // loop_exit
    _

// kernel: encoding_block_forward.4
$region0: #{encoding_block_forward.4}
  #allocation0 [shape = 'u32[]', space=smem, size = 0x4, offset = 0x4, fixed_abs, tag = 'smem constant byte address 0x4 - core index']
  #allocation1 [shape = 'u32[72,128]{1,0:T(1,128)}', space=vmem, size = 0x9000, scoped, tag = 'internal scratch']
  %s0 = inlined_call_operand.vmem [shape: bf16[4,10,18,8], index: 0, kind: input, shape index: {}]
  %s1 = inlined_call_operand.vmem [shape: bf16[9,8,128], index: 1, kind: input, shape index: {}]
  %s2 = inlined_call_operand.vmem [shape: f32[4,8,16,128], index: 2, kind: output, shape index: {0}]
  %s3 = inlined_call_operand.vmem [shape: f32[1,128], index: 3, kind: output, shape index: {1}]
  %s4 = inlined_call_operand.vmem [shape: f32[1,128], index: 4, kind: output, shape index: {2}]
  %5 = xla_tuple %s2, %s3, %s4
  %s6 = sld [smem:[#allocation0]]
  $region61: #{encoding_block_forward.4} parent=0
    _
  %s8 = ssub.s32 1, %s6
  %s9 = scalar_select 0, %s8, %s6
  loop: start=0, step=1, limit=6
  $region2: #{encoding_block_forward.4} parent=0 // loop_pre_header
    _
  $region3: #{encoding_block_forward.4} parent=0 // loop_header
    %s11 = sphi 0, %s15
    %p12 = scmp.ge.s32.totalorder %s11, 6
    %s21 = sphi 0, %s23
    %s24 = sphi 0, %s21
    %s25 = sphi 0, %s24
    %s41 = sphi 0, %s25
    %s45 = sphi 0, %s45
    %s47 = sphi 0, %s45
    %s48 = sphi 0, %s47
    %s62 = sphi 0, %s48
    %s68 = sphi 0, %s70
    %s71 = sphi 0, %s68
    %s72 = sphi 0, %s71
    %s88 = sphi 0, %s72
    %s92 = sphi 0, %s92
    %s94 = sphi 0, %s92
    %s95 = sphi 0, %s94
    %s109 = sphi 0, %s95
    %s113 = sphi 0, %s113
    %s115 = sphi 0, %s113
    %s116 = sphi 0, %s115
    %s130 = sphi 0, %s116
  $region4: #{encoding_block_forward.4} parent=0 // loop_header_branch
    %14 = sbr.rel (%p12) target = $region8
  $region5: #{encoding_block_forward.4} parent=0 // loop_body
    %s16 = ssub.s32 %s11, 1
    %s17 = ssub.s32 %s11, 2
    %s18 = sadd.s32 %s11, 1
    %s19 = ssub.s32 %s11, %s18
    %p20 = scmp.eq.s32.totalorder %s19, 0
    %s22 = sadd.s32 %s21, 1
    %s23 = scalar_select %p20, %s21, %s22
    %p26 = pneg %p20
    %p27 = scmp.eq.s32.totalorder %s11, 3
    %p28 = por %p26, %p27
    %p29 = scmp.ne.s32.totalorder %s21, %s24
    %p30 = scmp.eq.s32.totalorder %s11, 0
    %p31 = por %p29, %p30
    %p32 = scmp.ne.s32.totalorder %s21, %s24
    %p33 = scmp.eq.s32.totalorder %s16, 3
    %p34 = por %p32, %p33
    %p35 = scmp.ne.s32.totalorder %s24, %s25
    %p36 = scmp.eq.s32.totalorder %s16, 0
    %p37 = por %p35, %p36
    %p38 = scmp.ne.s32.totalorder %s24, %s25
    %p39 = scmp.eq.s32.totalorder %s17, 3
    %p40 = por %p38, %p39
    %p42 = scmp.ne.s32.totalorder %s25, %s41
    %p43 = scmp.eq.s32.totalorder %s17, 0
    %p44 = por %p42, %p43
    %s46 = sadd.s32 %s45, 1
    %p49 = scmp.eq.s32.totalorder %s11, 3
    %p50 = scmp.ne.s32.totalorder %s45, %s47
    %p51 = scmp.eq.s32.totalorder %s11, 0
    %p52 = por %p50, %p51
    %p53 = scmp.ne.s32.totalorder %s45, %s47
    %p54 = scmp.eq.s32.totalorder %s16, 3
    %p55 = por %p53, %p54
    %p56 = scmp.ne.s32.totalorder %s47, %s48
    %p57 = scmp.eq.s32.totalorder %s16, 0
    %p58 = por %p56, %p57
    %p59 = scmp.ne.s32.totalorder %s47, %s48
    %p60 = scmp.eq.s32.totalorder %s17, 3
    %p61 = por %p59, %p60
    %p63 = scmp.ne.s32.totalorder %s48, %s62
    %p64 = scmp.eq.s32.totalorder %s17, 0
    %p65 = por %p63, %p64
    %s66 = ssub.s32 %s11, %s18
    %p67 = scmp.eq.s32.totalorder %s66, 0
    %s69 = sadd.s32 %s68, 1
    %s70 = scalar_select %p67, %s68, %s69
    %p73 = pneg %p67
    %p74 = scmp.eq.s32.totalorder %s11, 3
    %p75 = por %p73, %p74
    %p76 = scmp.ne.s32.totalorder %s68, %s71
    %p77 = scmp.eq.s32.totalorder %s11, 0
    %p78 = por %p76, %p77
    %p79 = scmp.ne.s32.totalorder %s68, %s71
    %p80 = scmp.eq.s32.totalorder %s16, 3
    %p81 = por %p79, %p80
    %p82 = scmp.ne.s32.totalorder %s71, %s72
    %p83 = scmp.eq.s32.totalorder %s16, 0
    %p84 = por %p82, %p83
    %p85 = scmp.ne.s32.totalorder %s71, %s72
    %p86 = scmp.eq.s32.totalorder %s17, 3
    %p87 = por %p85, %p86
    %p89 = scmp.ne.s32.totalorder %s72, %s88
    %p90 = scmp.eq.s32.totalorder %s17, 0
    %p91 = por %p89, %p90
    %s93 = sadd.s32 %s92, 1
    %p96 = scmp.eq.s32.totalorder %s11, 3
    %p97 = scmp.ne.s32.totalorder %s92, %s94
    %p98 = scmp.eq.s32.totalorder %s11, 0
    %p99 = por %p97, %p98
    %p100 = scmp.ne.s32.totalorder %s92, %s94
    %p101 = scmp.eq.s32.totalorder %s16, 3
    %p102 = por %p100, %p101
    %p103 = scmp.ne.s32.totalorder %s94, %s95
    %p104 = scmp.eq.s32.totalorder %s16, 0
    %p105 = por %p103, %p104
    %p106 = scmp.ne.s32.totalorder %s94, %s95
    %p107 = scmp.eq.s32.totalorder %s17, 3
    %p108 = por %p106, %p107
    %p110 = scmp.ne.s32.totalorder %s95, %s109
    %p111 = scmp.eq.s32.totalorder %s17, 0
    %p112 = por %p110, %p111
    %s114 = sadd.s32 %s113, 1
    %p117 = scmp.eq.s32.totalorder %s11, 3
    %p118 = scmp.ne.s32.totalorder %s113, %s115
    %p119 = scmp.eq.s32.totalorder %s11, 0
    %p120 = por %p118, %p119
    %p121 = scmp.ne.s32.totalorder %s113, %s115
    %p122 = scmp.eq.s32.totalorder %s16, 3
    %p123 = por %p121, %p122
    %p124 = scmp.ne.s32.totalorder %s115, %s116
    %p125 = scmp.eq.s32.totalorder %s16, 0
    %p126 = por %p124, %p125
    %p127 = scmp.ne.s32.totalorder %s115, %s116
    %p128 = scmp.eq.s32.totalorder %s17, 3
    %p129 = por %p127, %p128
    %p131 = scmp.ne.s32.totalorder %s116, %s130
    %p132 = scmp.eq.s32.totalorder %s17, 0
    %p133 = por %p131, %p132
    %p134 = scmp.le.s32.totalorder 1, %s11
    %p135 = scmp.lt.s32.totalorder %s11, 5
    %p136 = pnand %p134, %p135
    %p137 = pneg %p136
    // Predicated region
    $region9: #{encoding_block_forward.4} parent=5 // pred_check
      _
    $region10: #{encoding_block_forward.4} parent=5 // pred_check_branch
      %139 = sbr.rel (%p136) target = $region12
    $region11: #{encoding_block_forward.4} parent=5 // pred_region
      %s140 = ssub.s32 %s11, 1
      // Predicated region
      $region13: #{encoding_block_forward.4} parent=11 // pred_check
        %p141 = pneg %p58
      $region14: #{encoding_block_forward.4} parent=11 // pred_check_branch
        %143 = sbr.rel (%p141) target = $region16
      $region15: #{encoding_block_forward.4} parent=11 // pred_region
        _
      $region16: #{encoding_block_forward.4} parent=11 // pred_fallthru
        _
    $region12: #{encoding_block_forward.4} parent=5 // pred_fallthru
      _
    %p144 = scmp.lt.s32.totalorder %s11, 4
    // Predicated region
    $region17: #{encoding_block_forward.4} parent=5 // pred_check
      %p145 = pneg %p144
    $region18: #{encoding_block_forward.4} parent=5 // pred_check_branch
      %147 = sbr.rel (%p145) target = $region20
    $region19: #{encoding_block_forward.4} parent=5 // pred_region
      // Predicated region
      $region21: #{encoding_block_forward.4} parent=19 // pred_check
        %p148 = pneg %p31
      $region22: #{encoding_block_forward.4} parent=19 // pred_check_branch
        %150 = sbr.rel (%p148) target = $region24
      $region23: #{encoding_block_forward.4} parent=19 // pred_region
        %p151 = scmp.lt.s32.totalorder %s11, 3
        %s152 = scalar_select %p151, %s11, 3
        %s153 = smul.addr %s152, 30
        %s154 = smul.addr %s153, 4
        %s155 = scalar_lea.vmem %s0, %s154
      $region24: #{encoding_block_forward.4} parent=19 // pred_fallthru
        _
    $region20: #{encoding_block_forward.4} parent=5 // pred_fallthru
      _
    %p156 = scmp.le.s32.totalorder 1, %s11
    %p157 = scmp.lt.s32.totalorder %s11, 5
    %p158 = pnand %p156, %p157
    %p159 = pneg %p158
    // Predicated region
    $region25: #{encoding_block_forward.4} parent=5 // pred_check
      _
    $region26: #{encoding_block_forward.4} parent=5 // pred_check_branch
      %161 = sbr.rel (%p158) target = $region28
    $region27: #{encoding_block_forward.4} parent=5 // pred_region
      %s162 = ssub.s32 %s11, 1
      %p163 = scmp.lt.s32.totalorder %s16, 3
      %s164 = scalar_select %p163, %s16, 3
      %s165 = smul.addr %s164, 30
      %s166 = smul.addr %s165, 4
      %s167 = scalar_lea.vmem %s0, %s166
      %p168 = pneg %p37
      %p169 = pneg %p34
      %p170 = pneg %p58
      %p171 = pneg %p55
      %p172 = pneg %p84
      %p173 = pneg %p81
      %p174 = scmp.lt.s32.totalorder %s16, 3
      %s175 = scalar_select %p174, %s16, 3
      %s176 = smul.addr %s175, 16
      %s177 = smul.addr %s176, 8
      %s178 = scalar_lea.vmem %s2, %s177
      %p179 = pneg %p105
      %p180 = pneg %p102
      %p181 = pneg %p126
      %p182 = pneg %p123
      %p183 = scmp.lt.s32.totalorder %s16, 3
      %s184 = scalar_select %p183, %s16, 3
      %s185 = smul.addr %s184, 30
      %s186 = smul.addr %s185, 4
      %s187 = scalar_lea.vmem %s0, %s186
      %p188 = scmp.lt.s32.totalorder %s16, 3
      %s189 = scalar_select %p188, %s16, 3
      %s190 = smul.addr %s189, 16
      %s191 = smul.addr %s190, 8
      %s192 = scalar_lea.vmem %s2, %s191
      %p194 = scmp.eq.s32.totalorder %s16, 0
      // Predicated region
      $region29: #{encoding_block_forward.4} parent=27 // pred_check
        %p195 = pneg %p194
      $region30: #{encoding_block_forward.4} parent=27 // pred_check_branch
        %197 = sbr.rel (%p195) target = $region32
      $region31: #{encoding_block_forward.4} parent=27 // pred_region
        %198 = vst [vmem:[%s3] sm:$0x1] 0.0
        %199 = vst [vmem:[%s4] sm:$0x1] 0.0
      $region32: #{encoding_block_forward.4} parent=27 // pred_fallthru
        _
      %v200 = vld [vmem:[%s187] sm:$0xf]
      %v201 = vld [vmem:[%s187 + $0x4] sm:$0xf]
      %v202 = vld [vmem:[%s187 + $0x8] sm:$0x1]
      %v203 = vld [vmem:[%s187 + $0xc] sm:$0xf]
      %v204 = vld [vmem:[%s187 + $0x10] sm:$0xf]
      %v205 = vld [vmem:[%s187 + $0x14] sm:$0x1]
      %v206 = vld [vmem:[%s187 + $0x18] sm:$0xf]
      %v207 = vld [vmem:[%s187 + $0x1c] sm:$0xf]
      %v208 = vld [vmem:[%s187 + $0x20] sm:$0x1]
      %v209 = vld [vmem:[%s187 + $0x24] sm:$0xf]
      %v210 = vld [vmem:[%s187 + $0x28] sm:$0xf]
      %v211 = vld [vmem:[%s187 + $0x2c] sm:$0x1]
      %v212 = vld [vmem:[%s187 + $0x30] sm:$0xf]
      %v213 = vld [vmem:[%s187 + $0x34] sm:$0xf]
      %v214 = vld [vmem:[%s187 + $0x38] sm:$0x1]
      %v215 = vld [vmem:[%s187 + $0x3c] sm:$0xf]
      %v216 = vld [vmem:[%s187 + $0x40] sm:$0xf]
      %v217 = vld [vmem:[%s187 + $0x44] sm:$0x1]
      %v218 = vld [vmem:[%s187 + $0x48] sm:$0xf]
      %v219 = vld [vmem:[%s187 + $0x4c] sm:$0xf]
      %v220 = vld [vmem:[%s187 + $0x50] sm:$0x1]
      %v221 = vld [vmem:[%s187 + $0x54] sm:$0xf]
      %v222 = vld [vmem:[%s187 + $0x58] sm:$0xf]
      %v223 = vld [vmem:[%s187 + $0x5c] sm:$0x1]
      %v224 = vld [vmem:[%s187 + $0x60] sm:$0xf]
      %v225 = vld [vmem:[%s187 + $0x64] sm:$0xf]
      %v226 = vld [vmem:[%s187 + $0x68] sm:$0x1]
      %v227 = vld [vmem:[%s187 + $0x6c] sm:$0xf]
      %v228 = vld [vmem:[%s187 + $0x70] sm:$0xf]
      %v229 = vld [vmem:[%s187 + $0x74] sm:$0x1]
      %v230 = vunpack.c.l.bf16 %v200
      %v231 = vunpack.c.l.bf16 %v201
      %v232 = vunpack.c.l.bf16 %v202
      %v233 = vunpack.c.l.bf16 %v203
      %v234 = vunpack.c.l.bf16 %v204
      %v235 = vunpack.c.l.bf16 %v205
      %v236 = vunpack.c.l.bf16 %v206
      %v237 = vunpack.c.l.bf16 %v207
      %v238 = vunpack.c.l.bf16 %v208
      %v239 = vunpack.c.l.bf16 %v209
      %v240 = vunpack.c.l.bf16 %v210
      %v241 = vunpack.c.l.bf16 %v211
      %v242 = vunpack.c.l.bf16 %v212
      %v243 = vunpack.c.l.bf16 %v213
      %v244 = vunpack.c.l.bf16 %v214
      %v245 = vunpack.c.l.bf16 %v215
      %v246 = vunpack.c.l.bf16 %v216
      %v247 = vunpack.c.l.bf16 %v217
      %v248 = vunpack.c.l.bf16 %v218
      %v249 = vunpack.c.l.bf16 %v219
      %v250 = vunpack.c.l.bf16 %v220
      %v251 = vunpack.c.l.bf16 %v221
      %v252 = vunpack.c.l.bf16 %v222
      %v253 = vunpack.c.l.bf16 %v223
      %v254 = vunpack.c.l.bf16 %v224
      %v255 = vunpack.c.l.bf16 %v225
      %v256 = vunpack.c.l.bf16 %v226
      %v257 = vunpack.c.l.bf16 %v227
      %v258 = vunpack.c.l.bf16 %v228
      %v259 = vunpack.c.l.bf16 %v229
      %v260 = vpack.c.bf16 %v231, %v230
      %v261 = vpack.c.bf16 %v234, %v233
      %v262 = vpack.c.bf16 %v237, %v236
      %v263 = vpack.c.bf16 %v240, %v239
      %v264 = vpack.c.bf16 %v243, %v242
      %v265 = vpack.c.bf16 %v246, %v245
      %v266 = vpack.c.bf16 %v249, %v248
      %v267 = vpack.c.bf16 %v252, %v251
      %v268 = vld [vmem:[%s1] sm:$0xf]
      %vm293 = vcmask 1046528
      %v294 = vrot.slane %v230, 1
      %v295 = vrot.slane %v231, 1
      %v296 = vsel %vm293, %v294, %v295
      %v297 = vrot.slane %v232, 1
      %v298 = vsel %vm293, %v295, %v297
      %v299 = vrot.slane %v233, 1
      %v300 = vrot.slane %v234, 1
      %v301 = vsel %vm293, %v299, %v300
      %v302 = vrot.slane %v235, 1
      %v303 = vsel %vm293, %v300, %v302
      %v304 = vrot.slane %v236, 1
      %v305 = vrot.slane %v237, 1
      %v306 = vsel %vm293, %v304, %v305
      %v307 = vrot.slane %v238, 1
      %v308 = vsel %vm293, %v305, %v307
      %v309 = vrot.slane %v239, 1
      %v310 = vrot.slane %v240, 1
      %v311 = vsel %vm293, %v309, %v310
      %v312 = vrot.slane %v241, 1
      %v313 = vsel %vm293, %v310, %v312
      %v314 = vrot.slane %v242, 1
      %v315 = vrot.slane %v243, 1
      %v316 = vsel %vm293, %v314, %v315
      %v317 = vrot.slane %v244, 1
      %v318 = vsel %vm293, %v315, %v317
      %v319 = vrot.slane %v245, 1
      %v320 = vrot.slane %v246, 1
      %v321 = vsel %vm293, %v319, %v320
      %v322 = vrot.slane %v247, 1
      %v323 = vsel %vm293, %v320, %v322
      %v324 = vrot.slane %v248, 1
      %v325 = vrot.slane %v249, 1
      %v326 = vsel %vm293, %v324, %v325
      %v327 = vrot.slane %v250, 1
      %v328 = vsel %vm293, %v325, %v327
      %v329 = vrot.slane %v251, 1
      %v330 = vrot.slane %v252, 1
      %v331 = vsel %vm293, %v329, %v330
      %v332 = vrot.slane %v253, 1
      %v333 = vsel %vm293, %v330, %v332
      %v350 = vpack.c.bf16 %v298, %v296
      %v351 = vpack.c.bf16 %v303, %v301
      %v352 = vpack.c.bf16 %v308, %v306
      %v353 = vpack.c.bf16 %v313, %v311
      %v354 = vpack.c.bf16 %v318, %v316
      %v355 = vpack.c.bf16 %v323, %v321
      %v356 = vpack.c.bf16 %v328, %v326
      %v357 = vpack.c.bf16 %v333, %v331
      %s358 = scalar_lea.vmem %s1, 4
      %v359 = vld [vmem:[%s358] sm:$0xf]
      %vm360 = vcmask 64512
      %v362 = vsel %vm360, %v350, 0
      %v365 = vsel %vm360, %v351, 0
      %v368 = vsel %vm360, %v352, 0
      %v371 = vsel %vm360, %v353, 0
      %v374 = vsel %vm360, %v354, 0
      %v377 = vsel %vm360, %v355, 0
      %v380 = vsel %vm360, %v356, 0
      %v383 = vsel %vm360, %v357, 0
      %vm385 = vcmask 1043456
      %v387 = vsel %vm385, %v359, 0
      %389 = vmatpush.bf16.msra.mxu0 0
      %390 = vmatpush.bf16.msra.mxu0 0
      %391 = vmatpush.bf16.msra.mxu0 0
      %392 = vmatpush.bf16.msra.mxu0 0
      %393 = vmatpush.bf16.msra.mxu0 0
      %394 = vmatpush.bf16.msra.mxu0 0
      %395 = vmatpush.bf16.msra.mxu0 0
      %396 = vmatpush.bf16.msra.mxu0 %v387
      %397 = vmatmul.bf16.gmra.mxu0 %v362
      %v398 = vpop.f32.mrf.mxu0
      %v399 = vadd.f32 0.0, %v398
      %v400 = vpop.f32.mrf.mxu0
      %v401 = vadd.f32 0.0, %v400
      %402 = vmatmul.bf16.gmra.mxu0 %v365
      %v403 = vpop.f32.mrf.mxu0
      %v404 = vadd.f32 0.0, %v403
      %v405 = vpop.f32.mrf.mxu0
      %v406 = vadd.f32 0.0, %v405
      %407 = vmatmul.bf16.gmra.mxu0 %v368
      %v408 = vpop.f32.mrf.mxu0
      %v409 = vadd.f32 0.0, %v408
      %v410 = vpop.f32.mrf.mxu0
      %v411 = vadd.f32 0.0, %v410
      %412 = vmatmul.bf16.gmra.mxu0 %v371
      %v413 = vpop.f32.mrf.mxu0
      %v414 = vadd.f32 0.0, %v413
      %v415 = vpop.f32.mrf.mxu0
      %v416 = vadd.f32 0.0, %v415
      %417 = vmatmul.bf16.gmra.mxu0 %v374
      %v418 = vpop.f32.mrf.mxu0
      %v419 = vadd.f32 0.0, %v418
      %v420 = vpop.f32.mrf.mxu0
      %v421 = vadd.f32 0.0, %v420
      %422 = vmatmul.bf16.gmra.mxu0 %v377
      %v423 = vpop.f32.mrf.mxu0
      %v424 = vadd.f32 0.0, %v423
      %v425 = vpop.f32.mrf.mxu0
      %v426 = vadd.f32 0.0, %v425
      %427 = vmatmul.bf16.gmra.mxu0 %v380
      %v428 = vpop.f32.mrf.mxu0
      %v429 = vadd.f32 0.0, %v428
      %v430 = vpop.f32.mrf.mxu0
      %v431 = vadd.f32 0.0, %v430
      %432 = vmatmul.bf16.gmra.mxu0 %v383
      %v433 = vpop.f32.mrf.mxu0
      %v434 = vadd.f32 0.0, %v433
      %v435 = vpop.f32.mrf.mxu0
      %v436 = vadd.f32 0.0, %v435
      %437 = vdwg.mxu0
      %v439 = vsel %vm360, %v260, 0
      %v442 = vsel %vm360, %v261, 0
      %v445 = vsel %vm360, %v262, 0
      %v448 = vsel %vm360, %v263, 0
      %v451 = vsel %vm360, %v264, 0
      %v454 = vsel %vm360, %v265, 0
      %v457 = vsel %vm360, %v266, 0
      %v460 = vsel %vm360, %v267, 0
      %v463 = vsel %vm385, %v268, 0
      %465 = vmatpush.bf16.msra.mxu0 0
      %466 = vmatpush.bf16.msra.mxu0 0
      %467 = vmatpush.bf16.msra.mxu0 0
      %468 = vmatpush.bf16.msra.mxu0 0
      %469 = vmatpush.bf16.msra.mxu0 0
      %470 = vmatpush.bf16.msra.mxu0 0
      %471 = vmatpush.bf16.msra.mxu0 0
      %472 = vmatpush.bf16.msra.mxu0 %v463
      %473 = vmatmul.bf16.gmra.mxu0 %v439
      %v474 = vpop.f32.mrf.mxu0
      %v475 = vadd.f32 %v399, %v474
      %v476 = vpop.f32.mrf.mxu0
      %v477 = vadd.f32 %v401, %v476
      %478 = vmatmul.bf16.gmra.mxu0 %v442
      %v479 = vpop.f32.mrf.mxu0
      %v480 = vadd.f32 %v404, %v479
      %v481 = vpop.f32.mrf.mxu0
      %v482 = vadd.f32 %v406, %v481
      %483 = vmatmul.bf16.gmra.mxu0 %v445
      %v484 = vpop.f32.mrf.mxu0
      %v485 = vadd.f32 %v409, %v484
      %v486 = vpop.f32.mrf.mxu0
      %v487 = vadd.f32 %v411, %v486
      %488 = vmatmul.bf16.gmra.mxu0 %v448
      %v489 = vpop.f32.mrf.mxu0
      %v490 = vadd.f32 %v414, %v489
      %v491 = vpop.f32.mrf.mxu0
      %v492 = vadd.f32 %v416, %v491
      %493 = vmatmul.bf16.gmra.mxu0 %v451
      %v494 = vpop.f32.mrf.mxu0
      %v495 = vadd.f32 %v419, %v494
      %v496 = vpop.f32.mrf.mxu0
      %v497 = vadd.f32 %v421, %v496
      %498 = vmatmul.bf16.gmra.mxu0 %v454
      %v499 = vpop.f32.mrf.mxu0
      %v500 = vadd.f32 %v424, %v499
      %v501 = vpop.f32.mrf.mxu0
      %v502 = vadd.f32 %v426, %v501
      %503 = vmatmul.bf16.gmra.mxu0 %v457
      %v504 = vpop.f32.mrf.mxu0
      %v505 = vadd.f32 %v429, %v504
      %v506 = vpop.f32.mrf.mxu0
      %v507 = vadd.f32 %v431, %v506
      %508 = vmatmul.bf16.gmra.mxu0 %v460
      %v509 = vpop.f32.mrf.mxu0
      %v510 = vadd.f32 %v434, %v509
      %v511 = vpop.f32.mrf.mxu0
      %v512 = vadd.f32 %v436, %v511
      %513 = vdwg.mxu0
      %vm514 = vcmask 1045504
      %v515 = vrot.slane %v230, 2
      %v516 = vrot.slane %v231, 2
      %v517 = vsel %vm514, %v515, %v516
      %v518 = vrot.slane %v232, 2
      %v519 = vsel %vm514, %v516, %v518
      %v520 = vrot.slane %v233, 2
      %v521 = vrot.slane %v234, 2
      %v522 = vsel %vm514, %v520, %v521
      %v523 = vrot.slane %v235, 2
      %v524 = vsel %vm514, %v521, %v523
      %v525 = vrot.slane %v236, 2
      %v526 = vrot.slane %v237, 2
      %v527 = vsel %vm514, %v525, %v526
      %v528 = vrot.slane %v238, 2
      %v529 = vsel %vm514, %v526, %v528
      %v530 = vrot.slane %v239, 2
      %v531 = vrot.slane %v240, 2
      %v532 = vsel %vm514, %v530, %v531
      %v533 = vrot.slane %v241, 2
      %v534 = vsel %vm514, %v531, %v533
      %v535 = vrot.slane %v242, 2
      %v536 = vrot.slane %v243, 2
      %v537 = vsel %vm514, %v535, %v536
      %v538 = vrot.slane %v244, 2
      %v539 = vsel %vm514, %v536, %v538
      %v540 = vrot.slane %v245, 2
      %v541 = vrot.slane %v246, 2
      %v542 = vsel %vm514, %v540, %v541
      %v543 = vrot.slane %v247, 2
      %v544 = vsel %vm514, %v541, %v543
      %v545 = vrot.slane %v248, 2
      %v546 = vrot.slane %v249, 2
      %v547 = vsel %vm514, %v545, %v546
      %v548 = vrot.slane %v250, 2
      %v549 = vsel %vm514, %v546, %v548
      %v550 = vrot.slane %v251, 2
      %v551 = vrot.slane %v252, 2
      %v552 = vsel %vm514, %v550, %v551
      %v553 = vrot.slane %v253, 2
      %v554 = vsel %vm514, %v551, %v553
      %v571 = vpack.c.bf16 %v519, %v517
      %v572 = vpack.c.bf16 %v524, %v522
      %v573 = vpack.c.bf16 %v529, %v527
      %v574 = vpack.c.bf16 %v534, %v532
      %v575 = vpack.c.bf16 %v539, %v537
      %v576 = vpack.c.bf16 %v544, %v542
      %v577 = vpack.c.bf16 %v549, %v547
      %v578 = vpack.c.bf16 %v554, %v552
      %s579 = scalar_lea.vmem %s1, 8
      %v580 = vld [vmem:[%s579] sm:$0xf]
      %v582 = vsel %vm360, %v571, 0
      %v585 = vsel %vm360, %v572, 0
      %v588 = vsel %vm360, %v573, 0
      %v591 = vsel %vm360, %v574, 0
      %v594 = vsel %vm360, %v575, 0
      %v597 = vsel %vm360, %v576, 0
      %v600 = vsel %vm360, %v577, 0
      %v603 = vsel %vm360, %v578, 0
      %v606 = vsel %vm385, %v580, 0
      %608 = vmatpush.bf16.msra.mxu0 0
      %609 = vmatpush.bf16.msra.mxu0 0
      %610 = vmatpush.bf16.msra.mxu0 0
      %611 = vmatpush.bf16.msra.mxu0 0
      %612 = vmatpush.bf16.msra.mxu0 0
      %613 = vmatpush.bf16.msra.mxu0 0
      %614 = vmatpush.bf16.msra.mxu0 0
      %615 = vmatpush.bf16.msra.mxu0 %v606
      %616 = vmatmul.bf16.gmra.mxu0 %v582
      %v617 = vpop.f32.mrf.mxu0
      %v618 = vadd.f32 0.0, %v617
      %v619 = vpop.f32.mrf.mxu0
      %v620 = vadd.f32 0.0, %v619
      %621 = vmatmul.bf16.gmra.mxu0 %v585
      %v622 = vpop.f32.mrf.mxu0
      %v623 = vadd.f32 0.0, %v622
      %v624 = vpop.f32.mrf.mxu0
      %v625 = vadd.f32 0.0, %v624
      %626 = vmatmul.bf16.gmra.mxu0 %v588
      %v627 = vpop.f32.mrf.mxu0
      %v628 = vadd.f32 0.0, %v627
      %v629 = vpop.f32.mrf.mxu0
      %v630 = vadd.f32 0.0, %v629
      %631 = vmatmul.bf16.gmra.mxu0 %v591
      %v632 = vpop.f32.mrf.mxu0
      %v633 = vadd.f32 0.0, %v632
      %v634 = vpop.f32.mrf.mxu0
      %v635 = vadd.f32 0.0, %v634
      %636 = vmatmul.bf16.gmra.mxu0 %v594
      %v637 = vpop.f32.mrf.mxu0
      %v638 = vadd.f32 0.0, %v637
      %v639 = vpop.f32.mrf.mxu0
      %v640 = vadd.f32 0.0, %v639
      %641 = vmatmul.bf16.gmra.mxu0 %v597
      %v642 = vpop.f32.mrf.mxu0
      %v643 = vadd.f32 0.0, %v642
      %v644 = vpop.f32.mrf.mxu0
      %v645 = vadd.f32 0.0, %v644
      %646 = vmatmul.bf16.gmra.mxu0 %v600
      %v647 = vpop.f32.mrf.mxu0
      %v648 = vadd.f32 0.0, %v647
      %v649 = vpop.f32.mrf.mxu0
      %v650 = vadd.f32 0.0, %v649
      %651 = vmatmul.bf16.gmra.mxu0 %v603
      %v652 = vpop.f32.mrf.mxu0
      %v653 = vadd.f32 0.0, %v652
      %v654 = vpop.f32.mrf.mxu0
      %v655 = vadd.f32 0.0, %v654
      %656 = vdwg.mxu0
      %v657 = vadd.f32 %v475, %v618
      %v658 = vadd.f32 %v477, %v620
      %v659 = vadd.f32 %v480, %v623
      %v660 = vadd.f32 %v482, %v625
      %v661 = vadd.f32 %v485, %v628
      %v662 = vadd.f32 %v487, %v630
      %v663 = vadd.f32 %v490, %v633
      %v664 = vadd.f32 %v492, %v635
      %v665 = vadd.f32 %v495, %v638
      %v666 = vadd.f32 %v497, %v640
      %v667 = vadd.f32 %v500, %v643
      %v668 = vadd.f32 %v502, %v645
      %v669 = vadd.f32 %v505, %v648
      %v670 = vadd.f32 %v507, %v650
      %v671 = vadd.f32 %v510, %v653
      %v672 = vadd.f32 %v512, %v655
      %v673 = vpack.c.bf16 %v255, %v254
      %s674 = scalar_lea.vmem %s1, 12
      %v675 = vld [vmem:[%s674] sm:$0xf]
      %v677 = vsel %vm360, %v673, 0
      %v680 = vsel %vm385, %v675, 0
      %682 = vmatpush.bf16.msra.mxu0 0
      %683 = vmatpush.bf16.msra.mxu0 0
      %684 = vmatpush.bf16.msra.mxu0 0
      %685 = vmatpush.bf16.msra.mxu0 0
      %686 = vmatpush.bf16.msra.mxu0 0
      %687 = vmatpush.bf16.msra.mxu0 0
      %688 = vmatpush.bf16.msra.mxu0 0
      %689 = vmatpush.bf16.msra.mxu0 %v680
      %690 = vmatmul.bf16.gmra.mxu0 %v442
      %v691 = vpop.f32.mrf.mxu0
      %v692 = vadd.f32 0.0, %v691
      %v693 = vpop.f32.mrf.mxu0
      %v694 = vadd.f32 0.0, %v693
      %695 = vmatmul.bf16.gmra.mxu0 %v445
      %v696 = vpop.f32.mrf.mxu0
      %v697 = vadd.f32 0.0, %v696
      %v698 = vpop.f32.mrf.mxu0
      %v699 = vadd.f32 0.0, %v698
      %700 = vmatmul.bf16.gmra.mxu0 %v448
      %v701 = vpop.f32.mrf.mxu0
      %v702 = vadd.f32 0.0, %v701
      %v703 = vpop.f32.mrf.mxu0
      %v704 = vadd.f32 0.0, %v703
      %705 = vmatmul.bf16.gmra.mxu0 %v451
      %v706 = vpop.f32.mrf.mxu0
      %v707 = vadd.f32 0.0, %v706
      %v708 = vpop.f32.mrf.mxu0
      %v709 = vadd.f32 0.0, %v708
      %710 = vmatmul.bf16.gmra.mxu0 %v454
      %v711 = vpop.f32.mrf.mxu0
      %v712 = vadd.f32 0.0, %v711
      %v713 = vpop.f32.mrf.mxu0
      %v714 = vadd.f32 0.0, %v713
      %715 = vmatmul.bf16.gmra.mxu0 %v457
      %v716 = vpop.f32.mrf.mxu0
      %v717 = vadd.f32 0.0, %v716
      %v718 = vpop.f32.mrf.mxu0
      %v719 = vadd.f32 0.0, %v718
      %720 = vmatmul.bf16.gmra.mxu0 %v460
      %v721 = vpop.f32.mrf.mxu0
      %v722 = vadd.f32 0.0, %v721
      %v723 = vpop.f32.mrf.mxu0
      %v724 = vadd.f32 0.0, %v723
      %725 = vmatmul.bf16.gmra.mxu0 %v677
      %v726 = vpop.f32.mrf.mxu0
      %v727 = vadd.f32 0.0, %v726
      %v728 = vpop.f32.mrf.mxu0
      %v729 = vadd.f32 0.0, %v728
      %730 = vdwg.mxu0
      %v731 = vadd.f32 %v657, %v692
      %v732 = vadd.f32 %v658, %v694
      %v733 = vadd.f32 %v659, %v697
      %v734 = vadd.f32 %v660, %v699
      %v735 = vadd.f32 %v661, %v702
      %v736 = vadd.f32 %v662, %v704
      %v737 = vadd.f32 %v663, %v707
      %v738 = vadd.f32 %v664, %v709
      %v739 = vadd.f32 %v665, %v712
      %v740 = vadd.f32 %v666, %v714
      %v741 = vadd.f32 %v667, %v717
      %v742 = vadd.f32 %v668, %v719
      %v743 = vadd.f32 %v669, %v722
      %v744 = vadd.f32 %v670, %v724
      %v745 = vadd.f32 %v671, %v727
      %v746 = vadd.f32 %v672, %v729
      %v750 = vrot.slane %v254, 1
      %v751 = vrot.slane %v255, 1
      %v752 = vsel %vm293, %v750, %v751
      %v753 = vrot.slane %v256, 1
      %v754 = vsel %vm293, %v751, %v753
      %v757 = vpack.c.bf16 %v754, %v752
      %s758 = scalar_lea.vmem %s1, 16
      %v759 = vld [vmem:[%s758] sm:$0xf]
      %v761 = vsel %vm360, %v757, 0
      %v764 = vsel %vm385, %v759, 0
      %766 = vmatpush.bf16.msra.mxu0 0
      %767 = vmatpush.bf16.msra.mxu0 0
      %768 = vmatpush.bf16.msra.mxu0 0
      %769 = vmatpush.bf16.msra.mxu0 0
      %770 = vmatpush.bf16.msra.mxu0 0
      %771 = vmatpush.bf16.msra.mxu0 0
      %772 = vmatpush.bf16.msra.mxu0 0
      %773 = vmatpush.bf16.msra.mxu0 %v764
      %774 = vmatmul.bf16.gmra.mxu0 %v365
      %v775 = vpop.f32.mrf.mxu0
      %v776 = vadd.f32 0.0, %v775
      %v777 = vpop.f32.mrf.mxu0
      %v778 = vadd.f32 0.0, %v777
      %779 = vmatmul.bf16.gmra.mxu0 %v368
      %v780 = vpop.f32.mrf.mxu0
      %v781 = vadd.f32 0.0, %v780
      %v782 = vpop.f32.mrf.mxu0
      %v783 = vadd.f32 0.0, %v782
      %784 = vmatmul.bf16.gmra.mxu0 %v371
      %v785 = vpop.f32.mrf.mxu0
      %v786 = vadd.f32 0.0, %v785
      %v787 = vpop.f32.mrf.mxu0
      %v788 = vadd.f32 0.0, %v787
      %789 = vmatmul.bf16.gmra.mxu0 %v374
      %v790 = vpop.f32.mrf.mxu0
      %v791 = vadd.f32 0.0, %v790
      %v792 = vpop.f32.mrf.mxu0
      %v793 = vadd.f32 0.0, %v792
      %794 = vmatmul.bf16.gmra.mxu0 %v377
      %v795 = vpop.f32.mrf.mxu0
      %v796 = vadd.f32 0.0, %v795
      %v797 = vpop.f32.mrf.mxu0
      %v798 = vadd.f32 0.0, %v797
      %799 = vmatmul.bf16.gmra.mxu0 %v380
      %v800 = vpop.f32.mrf.mxu0
      %v801 = vadd.f32 0.0, %v800
      %v802 = vpop.f32.mrf.mxu0
      %v803 = vadd.f32 0.0, %v802
      %804 = vmatmul.bf16.gmra.mxu0 %v383
      %v805 = vpop.f32.mrf.mxu0
      %v806 = vadd.f32 0.0, %v805
      %v807 = vpop.f32.mrf.mxu0
      %v808 = vadd.f32 0.0, %v807
      %809 = vmatmul.bf16.gmra.mxu0 %v761
      %v810 = vpop.f32.mrf.mxu0
      %v811 = vadd.f32 0.0, %v810
      %v812 = vpop.f32.mrf.mxu0
      %v813 = vadd.f32 0.0, %v812
      %814 = vdwg.mxu0
      %v815 = vadd.f32 %v731, %v776
      %v816 = vadd.f32 %v732, %v778
      %v817 = vadd.f32 %v733, %v781
      %v818 = vadd.f32 %v734, %v783
      %v819 = vadd.f32 %v735, %v786
      %v820 = vadd.f32 %v736, %v788
      %v821 = vadd.f32 %v737, %v791
      %v822 = vadd.f32 %v738, %v793
      %v823 = vadd.f32 %v739, %v796
      %v824 = vadd.f32 %v740, %v798
      %v825 = vadd.f32 %v741, %v801
      %v826 = vadd.f32 %v742, %v803
      %v827 = vadd.f32 %v743, %v806
      %v828 = vadd.f32 %v744, %v808
      %v829 = vadd.f32 %v745, %v811
      %v830 = vadd.f32 %v746, %v813
      %v831 = vrot.slane %v254, 2
      %v832 = vrot.slane %v255, 2
      %v833 = vsel %vm514, %v831, %v832
      %v834 = vrot.slane %v256, 2
      %v835 = vsel %vm514, %v832, %v834
      %v838 = vpack.c.bf16 %v835, %v833
      %s839 = scalar_lea.vmem %s1, 20
      %v840 = vld [vmem:[%s839] sm:$0xf]
      %v842 = vsel %vm360, %v838, 0
      %v845 = vsel %vm385, %v840, 0
      %847 = vmatpush.bf16.msra.mxu0 0
      %848 = vmatpush.bf16.msra.mxu0 0
      %849 = vmatpush.bf16.msra.mxu0 0
      %850 = vmatpush.bf16.msra.mxu0 0
      %851 = vmatpush.bf16.msra.mxu0 0
      %852 = vmatpush.bf16.msra.mxu0 0
      %853 = vmatpush.bf16.msra.mxu0 0
      %854 = vmatpush.bf16.msra.mxu0 %v845
      %855 = vmatmul.bf16.gmra.mxu0 %v585
      %v856 = vpop.f32.mrf.mxu0
      %v857 = vadd.f32 0.0, %v856
      %v858 = vpop.f32.mrf.mxu0
      %v859 = vadd.f32 0.0, %v858
      %860 = vmatmul.bf16.gmra.mxu0 %v588
      %v861 = vpop.f32.mrf.mxu0
      %v862 = vadd.f32 0.0, %v861
      %v863 = vpop.f32.mrf.mxu0
      %v864 = vadd.f32 0.0, %v863
      %865 = vmatmul.bf16.gmra.mxu0 %v591
      %v866 = vpop.f32.mrf.mxu0
      %v867 = vadd.f32 0.0, %v866
      %v868 = vpop.f32.mrf.mxu0
      %v869 = vadd.f32 0.0, %v868
      %870 = vmatmul.bf16.gmra.mxu0 %v594
      %v871 = vpop.f32.mrf.mxu0
      %v872 = vadd.f32 0.0, %v871
      %v873 = vpop.f32.mrf.mxu0
      %v874 = vadd.f32 0.0, %v873
      %875 = vmatmul.bf16.gmra.mxu0 %v597
      %v876 = vpop.f32.mrf.mxu0
      %v877 = vadd.f32 0.0, %v876
      %v878 = vpop.f32.mrf.mxu0
      %v879 = vadd.f32 0.0, %v878
      %880 = vmatmul.bf16.gmra.mxu0 %v600
      %v881 = vpop.f32.mrf.mxu0
      %v882 = vadd.f32 0.0, %v881
      %v883 = vpop.f32.mrf.mxu0
      %v884 = vadd.f32 0.0, %v883
      %885 = vmatmul.bf16.gmra.mxu0 %v603
      %v886 = vpop.f32.mrf.mxu0
      %v887 = vadd.f32 0.0, %v886
      %v888 = vpop.f32.mrf.mxu0
      %v889 = vadd.f32 0.0, %v888
      %890 = vmatmul.bf16.gmra.mxu0 %v842
      %v891 = vpop.f32.mrf.mxu0
      %v892 = vadd.f32 0.0, %v891
      %v893 = vpop.f32.mrf.mxu0
      %v894 = vadd.f32 0.0, %v893
      %895 = vdwg.mxu0
      %v896 = vadd.f32 %v815, %v857
      %v897 = vadd.f32 %v816, %v859
      %v898 = vadd.f32 %v817, %v862
      %v899 = vadd.f32 %v818, %v864
      %v900 = vadd.f32 %v819, %v867
      %v901 = vadd.f32 %v820, %v869
      %v902 = vadd.f32 %v821, %v872
      %v903 = vadd.f32 %v822, %v874
      %v904 = vadd.f32 %v823, %v877
      %v905 = vadd.f32 %v824, %v879
      %v906 = vadd.f32 %v825, %v882
      %v907 = vadd.f32 %v826, %v884
      %v908 = vadd.f32 %v827, %v887
      %v909 = vadd.f32 %v828, %v889
      %v910 = vadd.f32 %v829, %v892
      %v911 = vadd.f32 %v830, %v894
      %v912 = vpack.c.bf16 %v258, %v257
      %s913 = scalar_lea.vmem %s1, 24
      %v914 = vld [vmem:[%s913] sm:$0xf]
      %v916 = vsel %vm360, %v912, 0
      %v919 = vsel %vm385, %v914, 0
      %921 = vmatpush.bf16.msra.mxu0 0
      %922 = vmatpush.bf16.msra.mxu0 0
      %923 = vmatpush.bf16.msra.mxu0 0
      %924 = vmatpush.bf16.msra.mxu0 0
      %925 = vmatpush.bf16.msra.mxu0 0
      %926 = vmatpush.bf16.msra.mxu0 0
      %927 = vmatpush.bf16.msra.mxu0 0
      %928 = vmatpush.bf16.msra.mxu0 %v919
      %929 = vmatmul.bf16.gmra.mxu0 %v445
      %v930 = vpop.f32.mrf.mxu0
      %v931 = vadd.f32 0.0, %v930
      %v932 = vpop.f32.mrf.mxu0
      %v933 = vadd.f32 0.0, %v932
      %934 = vmatmul.bf16.gmra.mxu0 %v448
      %v935 = vpop.f32.mrf.mxu0
      %v936 = vadd.f32 0.0, %v935
      %v937 = vpop.f32.mrf.mxu0
      %v938 = vadd.f32 0.0, %v937
      %939 = vmatmul.bf16.gmra.mxu0 %v451
      %v940 = vpop.f32.mrf.mxu0
      %v941 = vadd.f32 0.0, %v940
      %v942 = vpop.f32.mrf.mxu0
      %v943 = vadd.f32 0.0, %v942
      %944 = vmatmul.bf16.gmra.mxu0 %v454
      %v945 = vpop.f32.mrf.mxu0
      %v946 = vadd.f32 0.0, %v945
      %v947 = vpop.f32.mrf.mxu0
      %v948 = vadd.f32 0.0, %v947
      %949 = vmatmul.bf16.gmra.mxu0 %v457
      %v950 = vpop.f32.mrf.mxu0
      %v951 = vadd.f32 0.0, %v950
      %v952 = vpop.f32.mrf.mxu0
      %v953 = vadd.f32 0.0, %v952
      %954 = vmatmul.bf16.gmra.mxu0 %v460
      %v955 = vpop.f32.mrf.mxu0
      %v956 = vadd.f32 0.0, %v955
      %v957 = vpop.f32.mrf.mxu0
      %v958 = vadd.f32 0.0, %v957
      %959 = vmatmul.bf16.gmra.mxu0 %v677
      %v960 = vpop.f32.mrf.mxu0
      %v961 = vadd.f32 0.0, %v960
      %v962 = vpop.f32.mrf.mxu0
      %v963 = vadd.f32 0.0, %v962
      %964 = vmatmul.bf16.gmra.mxu0 %v916
      %v965 = vpop.f32.mrf.mxu0
      %v966 = vadd.f32 0.0, %v965
      %v967 = vpop.f32.mrf.mxu0
      %v968 = vadd.f32 0.0, %v967
      %969 = vdwg.mxu0
      %v970 = vadd.f32 %v896, %v931
      %v971 = vadd.f32 %v897, %v933
      %v972 = vadd.f32 %v898, %v936
      %v973 = vadd.f32 %v899, %v938
      %v974 = vadd.f32 %v900, %v941
      %v975 = vadd.f32 %v901, %v943
      %v976 = vadd.f32 %v902, %v946
      %v977 = vadd.f32 %v903, %v948
      %v978 = vadd.f32 %v904, %v951
      %v979 = vadd.f32 %v905, %v953
      %v980 = vadd.f32 %v906, %v956
      %v981 = vadd.f32 %v907, %v958
      %v982 = vadd.f32 %v908, %v961
      %v983 = vadd.f32 %v909, %v963
      %v984 = vadd.f32 %v910, %v966
      %v985 = vadd.f32 %v911, %v968
      %v989 = vrot.slane %v257, 1
      %v990 = vrot.slane %v258, 1
      %v991 = vsel %vm293, %v989, %v990
      %v992 = vrot.slane %v259, 1
      %v993 = vsel %vm293, %v990, %v992
      %v996 = vpack.c.bf16 %v993, %v991
      %s997 = scalar_lea.vmem %s1, 28
      %v998 = vld [vmem:[%s997] sm:$0xf]
      %v1000 = vsel %vm360, %v996, 0
      %v1003 = vsel %vm385, %v998, 0
      %1005 = vmatpush.bf16.msra.mxu0 0
      %1006 = vmatpush.bf16.msra.mxu0 0
      %1007 = vmatpush.bf16.msra.mxu0 0
      %1008 = vmatpush.bf16.msra.mxu0 0
      %1009 = vmatpush.bf16.msra.mxu0 0
      %1010 = vmatpush.bf16.msra.mxu0 0
      %1011 = vmatpush.bf16.msra.mxu0 0
      %1012 = vmatpush.bf16.msra.mxu0 %v1003
      %1013 = vmatmul.bf16.gmra.mxu0 %v368
      %v1014 = vpop.f32.mrf.mxu0
      %v1015 = vadd.f32 0.0, %v1014
      %v1016 = vpop.f32.mrf.mxu0
      %v1017 = vadd.f32 0.0, %v1016
      %1018 = vmatmul.bf16.gmra.mxu0 %v371
      %v1019 = vpop.f32.mrf.mxu0
      %v1020 = vadd.f32 0.0, %v1019
      %v1021 = vpop.f32.mrf.mxu0
      %v1022 = vadd.f32 0.0, %v1021
      %1023 = vmatmul.bf16.gmra.mxu0 %v374
      %v1024 = vpop.f32.mrf.mxu0
      %v1025 = vadd.f32 0.0, %v1024
      %v1026 = vpop.f32.mrf.mxu0
      %v1027 = vadd.f32 0.0, %v1026
      %1028 = vmatmul.bf16.gmra.mxu0 %v377
      %v1029 = vpop.f32.mrf.mxu0
      %v1030 = vadd.f32 0.0, %v1029
      %v1031 = vpop.f32.mrf.mxu0
      %v1032 = vadd.f32 0.0, %v1031
      %1033 = vmatmul.bf16.gmra.mxu0 %v380
      %v1034 = vpop.f32.mrf.mxu0
      %v1035 = vadd.f32 0.0, %v1034
      %v1036 = vpop.f32.mrf.mxu0
      %v1037 = vadd.f32 0.0, %v1036
      %1038 = vmatmul.bf16.gmra.mxu0 %v383
      %v1039 = vpop.f32.mrf.mxu0
      %v1040 = vadd.f32 0.0, %v1039
      %v1041 = vpop.f32.mrf.mxu0
      %v1042 = vadd.f32 0.0, %v1041
      %1043 = vmatmul.bf16.gmra.mxu0 %v761
      %v1044 = vpop.f32.mrf.mxu0
      %v1045 = vadd.f32 0.0, %v1044
      %v1046 = vpop.f32.mrf.mxu0
      %v1047 = vadd.f32 0.0, %v1046
      %1048 = vmatmul.bf16.gmra.mxu0 %v1000
      %v1049 = vpop.f32.mrf.mxu0
      %v1050 = vadd.f32 0.0, %v1049
      %v1051 = vpop.f32.mrf.mxu0
      %v1052 = vadd.f32 0.0, %v1051
      %1053 = vdwg.mxu0
      %v1054 = vadd.f32 %v970, %v1015
      %v1055 = vadd.f32 %v971, %v1017
      %v1056 = vadd.f32 %v972, %v1020
      %v1057 = vadd.f32 %v973, %v1022
      %v1058 = vadd.f32 %v974, %v1025
      %v1059 = vadd.f32 %v975, %v1027
      %v1060 = vadd.f32 %v976, %v1030
      %v1061 = vadd.f32 %v977, %v1032
      %v1062 = vadd.f32 %v978, %v1035
      %v1063 = vadd.f32 %v979, %v1037
      %v1064 = vadd.f32 %v980, %v1040
      %v1065 = vadd.f32 %v981, %v1042
      %v1066 = vadd.f32 %v982, %v1045
      %v1067 = vadd.f32 %v983, %v1047
      %v1068 = vadd.f32 %v984, %v1050
      %v1069 = vadd.f32 %v985, %v1052
      %v1070 = vrot.slane %v257, 2
      %v1071 = vrot.slane %v258, 2
      %v1072 = vsel %vm514, %v1070, %v1071
      %v1073 = vrot.slane %v259, 2
      %v1074 = vsel %vm514, %v1071, %v1073
      %v1077 = vpack.c.bf16 %v1074, %v1072
      %s1078 = scalar_lea.vmem %s1, 32
      %v1079 = vld [vmem:[%s1078] sm:$0xf]
      %v1081 = vsel %vm360, %v1077, 0
      %v1084 = vsel %vm385, %v1079, 0
      %1086 = vmatpush.bf16.msra.mxu0 0
      %1087 = vmatpush.bf16.msra.mxu0 0
      %1088 = vmatpush.bf16.msra.mxu0 0
      %1089 = vmatpush.bf16.msra.mxu0 0
      %1090 = vmatpush.bf16.msra.mxu0 0
      %1091 = vmatpush.bf16.msra.mxu0 0
      %1092 = vmatpush.bf16.msra.mxu0 0
      %1093 = vmatpush.bf16.msra.mxu0 %v1084
      %1094 = vmatmul.bf16.gmra.mxu0 %v588
      %v1095 = vpop.f32.mrf.mxu0
      %v1096 = vadd.f32 0.0, %v1095
      %v1097 = vpop.f32.mrf.mxu0
      %v1098 = vadd.f32 0.0, %v1097
      %1099 = vmatmul.bf16.gmra.mxu0 %v591
      %v1100 = vpop.f32.mrf.mxu0
      %v1101 = vadd.f32 0.0, %v1100
      %v1102 = vpop.f32.mrf.mxu0
      %v1103 = vadd.f32 0.0, %v1102
      %1104 = vmatmul.bf16.gmra.mxu0 %v594
      %v1105 = vpop.f32.mrf.mxu0
      %v1106 = vadd.f32 0.0, %v1105
      %v1107 = vpop.f32.mrf.mxu0
      %v1108 = vadd.f32 0.0, %v1107
      %1109 = vmatmul.bf16.gmra.mxu0 %v597
      %v1110 = vpop.f32.mrf.mxu0
      %v1111 = vadd.f32 0.0, %v1110
      %v1112 = vpop.f32.mrf.mxu0
      %v1113 = vadd.f32 0.0, %v1112
      %1114 = vmatmul.bf16.gmra.mxu0 %v600
      %v1115 = vpop.f32.mrf.mxu0
      %v1116 = vadd.f32 0.0, %v1115
      %v1117 = vpop.f32.mrf.mxu0
      %v1118 = vadd.f32 0.0, %v1117
      %1119 = vmatmul.bf16.gmra.mxu0 %v603
      %v1120 = vpop.f32.mrf.mxu0
      %v1121 = vadd.f32 0.0, %v1120
      %v1122 = vpop.f32.mrf.mxu0
      %v1123 = vadd.f32 0.0, %v1122
      %1124 = vmatmul.bf16.gmra.mxu0 %v842
      %v1125 = vpop.f32.mrf.mxu0
      %v1126 = vadd.f32 0.0, %v1125
      %v1127 = vpop.f32.mrf.mxu0
      %v1128 = vadd.f32 0.0, %v1127
      %1129 = vmatmul.bf16.gmra.mxu0 %v1081
      %v1130 = vpop.f32.mrf.mxu0
      %v1131 = vadd.f32 0.0, %v1130
      %v1132 = vpop.f32.mrf.mxu0
      %v1133 = vadd.f32 0.0, %v1132
      %1134 = vdwg.mxu0
      %v1135 = vadd.f32 %v1054, %v1096
      %v1136 = vadd.f32 %v1055, %v1098
      %v1137 = vadd.f32 %v1056, %v1101
      %v1138 = vadd.f32 %v1057, %v1103
      %v1139 = vadd.f32 %v1058, %v1106
      %v1140 = vadd.f32 %v1059, %v1108
      %v1141 = vadd.f32 %v1060, %v1111
      %v1142 = vadd.f32 %v1061, %v1113
      %v1143 = vadd.f32 %v1062, %v1116
      %v1144 = vadd.f32 %v1063, %v1118
      %v1145 = vadd.f32 %v1064, %v1121
      %v1146 = vadd.f32 %v1065, %v1123
      %v1147 = vadd.f32 %v1066, %v1126
      %v1148 = vadd.f32 %v1067, %v1128
      %v1149 = vadd.f32 %v1068, %v1131
      %v1150 = vadd.f32 %v1069, %v1133
      %1151 = vst [vmem:[%s192] sm:$0xff] %v1135
      %1152 = vst [vmem:[%s192 + $0x8] sm:$0xff] %v1136
      %1153 = vst [vmem:[%s192 + $0x10] sm:$0xff] %v1137
      %1154 = vst [vmem:[%s192 + $0x18] sm:$0xff] %v1138
      %1155 = vst [vmem:[%s192 + $0x20] sm:$0xff] %v1139
      %1156 = vst [vmem:[%s192 + $0x28] sm:$0xff] %v1140
      %1157 = vst [vmem:[%s192 + $0x30] sm:$0xff] %v1141
      %1158 = vst [vmem:[%s192 + $0x38] sm:$0xff] %v1142
      %1159 = vst [vmem:[%s192 + $0x40] sm:$0xff] %v1143
      %1160 = vst [vmem:[%s192 + $0x48] sm:$0xff] %v1144
      %1161 = vst [vmem:[%s192 + $0x50] sm:$0xff] %v1145
      %1162 = vst [vmem:[%s192 + $0x58] sm:$0xff] %v1146
      %1163 = vst [vmem:[%s192 + $0x60] sm:$0xff] %v1147
      %1164 = vst [vmem:[%s192 + $0x68] sm:$0xff] %v1148
      %1165 = vst [vmem:[%s192 + $0x70] sm:$0xff] %v1149
      %1166 = vst [vmem:[%s192 + $0x78] sm:$0xff] %v1150
      %v1167 = vld [vmem:[%s3] sm:$0x1]
      %v1168 = vadd.f32 %v1135, %v1136
      %v1169 = vadd.f32 %v1168, %v1137
      %v1170 = vadd.f32 %v1169, %v1138
      %v1171 = vadd.f32 %v1170, %v1139
      %v1172 = vadd.f32 %v1171, %v1140
      %v1173 = vadd.f32 %v1172, %v1141
      %v1174 = vadd.f32 %v1173, %v1142
      %v1175 = vadd.f32 %v1174, %v1143
      %v1176 = vadd.f32 %v1175, %v1144
      %v1177 = vadd.f32 %v1176, %v1145
      %v1178 = vadd.f32 %v1177, %v1146
      %v1179 = vadd.f32 %v1178, %v1147
      %v1180 = vadd.f32 %v1179, %v1148
      %v1181 = vadd.f32 %v1180, %v1149
      %v1182 = vadd.f32 %v1181, %v1150
      %v1183 = vrot.slane %v1182, 4
      %v1184 = vadd.f32 %v1182, %v1183
      %v1185 = vrot.slane %v1184, 2
      %v1186 = vadd.f32 %v1184, %v1185
      %v1187 = vrot.slane %v1186, 1
      %v1188 = vadd.f32 %v1186, %v1187
      %v1189 = vadd.f32 %v1167, %v1188
      %1190 = vst [vmem:[%s3] sm:$0x1] %v1189
      %v1191 = vld [vmem:[%s4] sm:$0x1]
      %v1192 = vmul.f32 %v1135, %v1135
      %v1193 = vmul.f32 %v1136, %v1136
      %v1194 = vmul.f32 %v1137, %v1137
      %v1195 = vmul.f32 %v1138, %v1138
      %v1196 = vmul.f32 %v1139, %v1139
      %v1197 = vmul.f32 %v1140, %v1140
      %v1198 = vmul.f32 %v1141, %v1141
      %v1199 = vmul.f32 %v1142, %v1142
      %v1200 = vmul.f32 %v1143, %v1143
      %v1201 = vmul.f32 %v1144, %v1144
      %v1202 = vmul.f32 %v1145, %v1145
      %v1203 = vmul.f32 %v1146, %v1146
      %v1204 = vmul.f32 %v1147, %v1147
      %v1205 = vmul.f32 %v1148, %v1148
      %v1206 = vmul.f32 %v1149, %v1149
      %v1207 = vmul.f32 %v1150, %v1150
      %v1208 = vadd.f32 %v1192, %v1193
      %v1209 = vadd.f32 %v1208, %v1194
      %v1210 = vadd.f32 %v1209, %v1195
      %v1211 = vadd.f32 %v1210, %v1196
      %v1212 = vadd.f32 %v1211, %v1197
      %v1213 = vadd.f32 %v1212, %v1198
      %v1214 = vadd.f32 %v1213, %v1199
      %v1215 = vadd.f32 %v1214, %v1200
      %v1216 = vadd.f32 %v1215, %v1201
      %v1217 = vadd.f32 %v1216, %v1202
      %v1218 = vadd.f32 %v1217, %v1203
      %v1219 = vadd.f32 %v1218, %v1204
      %v1220 = vadd.f32 %v1219, %v1205
      %v1221 = vadd.f32 %v1220, %v1206
      %v1222 = vadd.f32 %v1221, %v1207
      %v1223 = vrot.slane %v1222, 4
      %v1224 = vadd.f32 %v1222, %v1223
      %v1225 = vrot.slane %v1224, 2
      %v1226 = vadd.f32 %v1224, %v1225
      %v1227 = vrot.slane %v1226, 1
      %v1228 = vadd.f32 %v1226, %v1227
      %v1229 = vadd.f32 %v1191, %v1228
      %1230 = vst [vmem:[%s4] sm:$0x1] %v1229
      %p1231 = scmp.lt.s32.totalorder %s16, 3
      %s1232 = scalar_select %p1231, %s16, 3
      %s1233 = smul.addr %s1232, 16
      %s1234 = smul.addr %s1233, 8
      %s1235 = scalar_lea.vmem %s2, %s1234
      // Predicated region
      $region33: #{encoding_block_forward.4} parent=27 // pred_check
        %p1236 = pneg %p81
      $region34: #{encoding_block_forward.4} parent=27 // pred_check_branch
        %1238 = sbr.rel (%p1236) target = $region36
      $region35: #{encoding_block_forward.4} parent=27 // pred_region
        _
      $region36: #{encoding_block_forward.4} parent=27 // pred_fallthru
        _
      // Predicated region
      $region37: #{encoding_block_forward.4} parent=27 // pred_check
        %p1239 = pneg %p102
      $region38: #{encoding_block_forward.4} parent=27 // pred_check_branch
        %1241 = sbr.rel (%p1239) target = $region40
      $region39: #{encoding_block_forward.4} parent=27 // pred_region
        _
      $region40: #{encoding_block_forward.4} parent=27 // pred_fallthru
        _
      // Predicated region
      $region41: #{encoding_block_forward.4} parent=27 // pred_check
        %p1242 = pneg %p123
      $region42: #{encoding_block_forward.4} parent=27 // pred_check_branch
        %1244 = sbr.rel (%p1242) target = $region44
      $region43: #{encoding_block_forward.4} parent=27 // pred_region
        _
      $region44: #{encoding_block_forward.4} parent=27 // pred_fallthru
        _
      // Predicated region
      $region45: #{encoding_block_forward.4} parent=27 // pred_check
        %p1245 = pneg %p102
      $region46: #{encoding_block_forward.4} parent=27 // pred_check_branch
        %1247 = sbr.rel (%p1245) target = $region48
      $region47: #{encoding_block_forward.4} parent=27 // pred_region
        _
      $region48: #{encoding_block_forward.4} parent=27 // pred_fallthru
        _
      // Predicated region
      $region49: #{encoding_block_forward.4} parent=27 // pred_check
        %p1248 = pneg %p123
      $region50: #{encoding_block_forward.4} parent=27 // pred_check_branch
        %1250 = sbr.rel (%p1248) target = $region52
      $region51: #{encoding_block_forward.4} parent=27 // pred_region
        _
      $region52: #{encoding_block_forward.4} parent=27 // pred_fallthru
        _
    $region28: #{encoding_block_forward.4} parent=5 // pred_fallthru
      _
    %p1251 = scmp.le.s32.totalorder 2, %s11
    // Predicated region
    $region53: #{encoding_block_forward.4} parent=5 // pred_check
      %p1252 = pneg %p1251
    $region54: #{encoding_block_forward.4} parent=5 // pred_check_branch
      %1254 = sbr.rel (%p1252) target = $region56
    $region55: #{encoding_block_forward.4} parent=5 // pred_region
      %s1255 = ssub.s32 %s11, 2
      // Predicated region
      $region57: #{encoding_block_forward.4} parent=55 // pred_check
        %p1256 = pneg %p87
      $region58: #{encoding_block_forward.4} parent=55 // pred_check_branch
        %1258 = sbr.rel (%p1256) target = $region60
      $region59: #{encoding_block_forward.4} parent=55 // pred_region
        %p1259 = scmp.lt.s32.totalorder %s17, 3
        %s1260 = scalar_select %p1259, %s17, 3
        %s1261 = smul.addr %s1260, 16
        %s1262 = smul.addr %s1261, 8
        %s1263 = scalar_lea.vmem %s2, %s1262
      $region60: #{encoding_block_forward.4} parent=55 // pred_fallthru
        _
    $region56: #{encoding_block_forward.4} parent=5 // pred_fallthru
      _
  $region6: #{encoding_block_forward.4} parent=0 // loop_footer
    %s15 = sadd.s32 1, %s11
  $region7: #{encoding_block_forward.4} parent=0 // loop_footer_branch
    %10 = sbr.rel target = $region3
  $region8: #{encoding_block_forward.4} parent=0 // loop_exit
    _

// kernel: encoding_block_forward.7
$region0: #{encoding_block_forward.7}
  #allocation0 [shape = 'u32[]', space=smem, size = 0x4, offset = 0x4, fixed_abs, tag = 'smem constant byte address 0x4 - core index']
  #allocation1 [shape = 'u32[72,128]{1,0:T(1,128)}', space=vmem, size = 0x9000, scoped, tag = 'internal scratch']
  %s0 = inlined_call_operand.vmem [shape: f32[4,8,16,128], index: 0, kind: input, shape index: {}]
  %s1 = inlined_call_operand.vmem [shape: f32[1,128], index: 1, kind: input, shape index: {}]
  %s2 = inlined_call_operand.vmem [shape: f32[1,128], index: 2, kind: input, shape index: {}]
  %s3 = inlined_call_operand.vmem [shape: bf16[4,8,16,8], index: 3, kind: input, shape index: {}]
  %s4 = inlined_call_operand.vmem [shape: bf16[8,128], index: 4, kind: input, shape index: {}]
  %s5 = inlined_call_operand.vmem [shape: f32[1,128], index: 5, kind: input, shape index: {}]
  %s6 = inlined_call_operand.vmem [shape: f32[4,8,16,128], index: 6, kind: output, shape index: {}]
  %s7 = sld [smem:[#allocation0]]
  $region57: #{encoding_block_forward.7} parent=0
    _
  %s9 = ssub.s32 1, %s7
  %s10 = scalar_select 0, %s9, %s7
  loop: start=0, step=1, limit=6
  $region2: #{encoding_block_forward.7} parent=0 // loop_pre_header
    _
  $region3: #{encoding_block_forward.7} parent=0 // loop_header
    %s12 = sphi 0, %s16
    %p13 = scmp.ge.s32.totalorder %s12, 6
    %s22 = sphi 0, %s24
    %s25 = sphi 0, %s22
    %s26 = sphi 0, %s25
    %s42 = sphi 0, %s26
    %s46 = sphi 0, %s46
    %s48 = sphi 0, %s46
    %s49 = sphi 0, %s48
    %s63 = sphi 0, %s49
    %s67 = sphi 0, %s67
    %s69 = sphi 0, %s67
    %s70 = sphi 0, %s69
    %s84 = sphi 0, %s70
    %s90 = sphi 0, %s92
    %s93 = sphi 0, %s90
    %s94 = sphi 0, %s93
    %s110 = sphi 0, %s94
    %s114 = sphi 0, %s114
    %s116 = sphi 0, %s114
    %s117 = sphi 0, %s116
    %s131 = sphi 0, %s117
    %s135 = sphi 0, %s135
    %s137 = sphi 0, %s135
    %s138 = sphi 0, %s137
    %s152 = sphi 0, %s138
    %s158 = sphi 0, %s160
    %s161 = sphi 0, %s158
    %s162 = sphi 0, %s161
    %s178 = sphi 0, %s162
  $region4: #{encoding_block_forward.7} parent=0 // loop_header_branch
    %15 = sbr.rel (%p13) target = $region8
  $region5: #{encoding_block_forward.7} parent=0 // loop_body
    %s17 = ssub.s32 %s12, 1
    %s18 = ssub.s32 %s12, 2
    %s19 = sadd.s32 %s12, 1
    %s20 = ssub.s32 %s12, %s19
    %p21 = scmp.eq.s32.totalorder %s20, 0
    %s23 = sadd.s32 %s22, 1
    %s24 = scalar_select %p21, %s22, %s23
    %p27 = pneg %p21
    %p28 = scmp.eq.s32.totalorder %s12, 3
    %p29 = por %p27, %p28
    %p30 = scmp.ne.s32.totalorder %s22, %s25
    %p31 = scmp.eq.s32.totalorder %s12, 0
    %p32 = por %p30, %p31
    %p33 = scmp.ne.s32.totalorder %s22, %s25
    %p34 = scmp.eq.s32.totalorder %s17, 3
    %p35 = por %p33, %p34
    %p36 = scmp.ne.s32.totalorder %s25, %s26
    %p37 = scmp.eq.s32.totalorder %s17, 0
    %p38 = por %p36, %p37
    %p39 = scmp.ne.s32.totalorder %s25, %s26
    %p40 = scmp.eq.s32.totalorder %s18, 3
    %p41 = por %p39, %p40
    %p43 = scmp.ne.s32.totalorder %s26, %s42
    %p44 = scmp.eq.s32.totalorder %s18, 0
    %p45 = por %p43, %p44
    %s47 = sadd.s32 %s46, 1
    %p50 = scmp.eq.s32.totalorder %s12, 3
    %p51 = scmp.ne.s32.totalorder %s46, %s48
    %p52 = scmp.eq.s32.totalorder %s12, 0
    %p53 = por %p51, %p52
    %p54 = scmp.ne.s32.totalorder %s46, %s48
    %p55 = scmp.eq.s32.totalorder %s17, 3
    %p56 = por %p54, %p55
    %p57 = scmp.ne.s32.totalorder %s48, %s49
    %p58 = scmp.eq.s32.totalorder %s17, 0
    %p59 = por %p57, %p58
    %p60 = scmp.ne.s32.totalorder %s48, %s49
    %p61 = scmp.eq.s32.totalorder %s18, 3
    %p62 = por %p60, %p61
    %p64 = scmp.ne.s32.totalorder %s49, %s63
    %p65 = scmp.eq.s32.totalorder %s18, 0
    %p66 = por %p64, %p65
    %s68 = sadd.s32 %s67, 1
    %p71 = scmp.eq.s32.totalorder %s12, 3
    %p72 = scmp.ne.s32.totalorder %s67, %s69
    %p73 = scmp.eq.s32.totalorder %s12, 0
    %p74 = por %p72, %p73
    %p75 = scmp.ne.s32.totalorder %s67, %s69
    %p76 = scmp.eq.s32.totalorder %s17, 3
    %p77 = por %p75, %p76
    %p78 = scmp.ne.s32.totalorder %s69, %s70
    %p79 = scmp.eq.s32.totalorder %s17, 0
    %p80 = por %p78, %p79
    %p81 = scmp.ne.s32.totalorder %s69, %s70
    %p82 = scmp.eq.s32.totalorder %s18, 3
    %p83 = por %p81, %p82
    %p85 = scmp.ne.s32.totalorder %s70, %s84
    %p86 = scmp.eq.s32.totalorder %s18, 0
    %p87 = por %p85, %p86
    %s88 = ssub.s32 %s12, %s19
    %p89 = scmp.eq.s32.totalorder %s88, 0
    %s91 = sadd.s32 %s90, 1
    %s92 = scalar_select %p89, %s90, %s91
    %p95 = pneg %p89
    %p96 = scmp.eq.s32.totalorder %s12, 3
    %p97 = por %p95, %p96
    %p98 = scmp.ne.s32.totalorder %s90, %s93
    %p99 = scmp.eq.s32.totalorder %s12, 0
    %p100 = por %p98, %p99
    %p101 = scmp.ne.s32.totalorder %s90, %s93
    %p102 = scmp.eq.s32.totalorder %s17, 3
    %p103 = por %p101, %p102
    %p104 = scmp.ne.s32.totalorder %s93, %s94
    %p105 = scmp.eq.s32.totalorder %s17, 0
    %p106 = por %p104, %p105
    %p107 = scmp.ne.s32.totalorder %s93, %s94
    %p108 = scmp.eq.s32.totalorder %s18, 3
    %p109 = por %p107, %p108
    %p111 = scmp.ne.s32.totalorder %s94, %s110
    %p112 = scmp.eq.s32.totalorder %s18, 0
    %p113 = por %p111, %p112
    %s115 = sadd.s32 %s114, 1
    %p118 = scmp.eq.s32.totalorder %s12, 3
    %p119 = scmp.ne.s32.totalorder %s114, %s116
    %p120 = scmp.eq.s32.totalorder %s12, 0
    %p121 = por %p119, %p120
    %p122 = scmp.ne.s32.totalorder %s114, %s116
    %p123 = scmp.eq.s32.totalorder %s17, 3
    %p124 = por %p122, %p123
    %p125 = scmp.ne.s32.totalorder %s116, %s117
    %p126 = scmp.eq.s32.totalorder %s17, 0
    %p127 = por %p125, %p126
    %p128 = scmp.ne.s32.totalorder %s116, %s117
    %p129 = scmp.eq.s32.totalorder %s18, 3
    %p130 = por %p128, %p129
    %p132 = scmp.ne.s32.totalorder %s117, %s131
    %p133 = scmp.eq.s32.totalorder %s18, 0
    %p134 = por %p132, %p133
    %s136 = sadd.s32 %s135, 1
    %p139 = scmp.eq.s32.totalorder %s12, 3
    %p140 = scmp.ne.s32.totalorder %s135, %s137
    %p141 = scmp.eq.s32.totalorder %s12, 0
    %p142 = por %p140, %p141
    %p143 = scmp.ne.s32.totalorder %s135, %s137
    %p144 = scmp.eq.s32.totalorder %s17, 3
    %p145 = por %p143, %p144
    %p146 = scmp.ne.s32.totalorder %s137, %s138
    %p147 = scmp.eq.s32.totalorder %s17, 0
    %p148 = por %p146, %p147
    %p149 = scmp.ne.s32.totalorder %s137, %s138
    %p150 = scmp.eq.s32.totalorder %s18, 3
    %p151 = por %p149, %p150
    %p153 = scmp.ne.s32.totalorder %s138, %s152
    %p154 = scmp.eq.s32.totalorder %s18, 0
    %p155 = por %p153, %p154
    %s156 = ssub.s32 %s12, %s19
    %p157 = scmp.eq.s32.totalorder %s156, 0
    %s159 = sadd.s32 %s158, 1
    %s160 = scalar_select %p157, %s158, %s159
    %p163 = pneg %p157
    %p164 = scmp.eq.s32.totalorder %s12, 3
    %p165 = por %p163, %p164
    %p166 = scmp.ne.s32.totalorder %s158, %s161
    %p167 = scmp.eq.s32.totalorder %s12, 0
    %p168 = por %p166, %p167
    %p169 = scmp.ne.s32.totalorder %s158, %s161
    %p170 = scmp.eq.s32.totalorder %s17, 3
    %p171 = por %p169, %p170
    %p172 = scmp.ne.s32.totalorder %s161, %s162
    %p173 = scmp.eq.s32.totalorder %s17, 0
    %p174 = por %p172, %p173
    %p175 = scmp.ne.s32.totalorder %s161, %s162
    %p176 = scmp.eq.s32.totalorder %s18, 3
    %p177 = por %p175, %p176
    %p179 = scmp.ne.s32.totalorder %s162, %s178
    %p180 = scmp.eq.s32.totalorder %s18, 0
    %p181 = por %p179, %p180
    %p182 = scmp.le.s32.totalorder 1, %s12
    %p183 = scmp.lt.s32.totalorder %s12, 5
    %p184 = pnand %p182, %p183
    %p185 = pneg %p184
    // Predicated region
    $region9: #{encoding_block_forward.7} parent=5 // pred_check
      _
    $region10: #{encoding_block_forward.7} parent=5 // pred_check_branch
      %187 = sbr.rel (%p184) target = $region12
    $region11: #{encoding_block_forward.7} parent=5 // pred_region
      %s188 = ssub.s32 %s12, 1
      // Predicated region
      $region13: #{encoding_block_forward.7} parent=11 // pred_check
        %p189 = pneg %p59
      $region14: #{encoding_block_forward.7} parent=11 // pred_check_branch
        %191 = sbr.rel (%p189) target = $region16
      $region15: #{encoding_block_forward.7} parent=11 // pred_region
        _
      $region16: #{encoding_block_forward.7} parent=11 // pred_fallthru
        _
      // Predicated region
      $region17: #{encoding_block_forward.7} parent=11 // pred_check
        %p192 = pneg %p80
      $region18: #{encoding_block_forward.7} parent=11 // pred_check_branch
        %194 = sbr.rel (%p192) target = $region20
      $region19: #{encoding_block_forward.7} parent=11 // pred_region
        _
      $region20: #{encoding_block_forward.7} parent=11 // pred_fallthru
        _
      // Predicated region
      $region21: #{encoding_block_forward.7} parent=11 // pred_check
        %p195 = pneg %p127
      $region22: #{encoding_block_forward.7} parent=11 // pred_check_branch
        %197 = sbr.rel (%p195) target = $region24
      $region23: #{encoding_block_forward.7} parent=11 // pred_region
        _
      $region24: #{encoding_block_forward.7} parent=11 // pred_fallthru
        _
      // Predicated region
      $region25: #{encoding_block_forward.7} parent=11 // pred_check
        %p198 = pneg %p148
      $region26: #{encoding_block_forward.7} parent=11 // pred_check_branch
        %200 = sbr.rel (%p198) target = $region28
      $region27: #{encoding_block_forward.7} parent=11 // pred_region
        _
      $region28: #{encoding_block_forward.7} parent=11 // pred_fallthru
        _
    $region12: #{encoding_block_forward.7} parent=5 // pred_fallthru
      _
    %p201 = scmp.lt.s32.totalorder %s12, 4
    // Predicated region
    $region29: #{encoding_block_forward.7} parent=5 // pred_check
      %p202 = pneg %p201
    $region30: #{encoding_block_forward.7} parent=5 // pred_check_branch
      %204 = sbr.rel (%p202) target = $region32
    $region31: #{encoding_block_forward.7} parent=5 // pred_region
      // Predicated region
      $region33: #{encoding_block_forward.7} parent=31 // pred_check
        %p205 = pneg %p32
      $region34: #{encoding_block_forward.7} parent=31 // pred_check_branch
        %207 = sbr.rel (%p205) target = $region36
      $region35: #{encoding_block_forward.7} parent=31 // pred_region
        %p208 = scmp.lt.s32.totalorder %s12, 3
        %s209 = scalar_select %p208, %s12, 3
        %s210 = smul.addr %s209, 16
        %s211 = smul.addr %s210, 8
        %s212 = scalar_lea.vmem %s0, %s211
      $region36: #{encoding_block_forward.7} parent=31 // pred_fallthru
        _
      // Predicated region
      $region37: #{encoding_block_forward.7} parent=31 // pred_check
        %p213 = pneg %p100
      $region38: #{encoding_block_forward.7} parent=31 // pred_check_branch
        %215 = sbr.rel (%p213) target = $region40
      $region39: #{encoding_block_forward.7} parent=31 // pred_region
        %p216 = scmp.lt.s32.totalorder %s12, 3
        %s217 = scalar_select %p216, %s12, 3
        %s218 = smul.addr %s217, 16
        %s219 = smul.addr %s218, 4
        %s220 = scalar_lea.vmem %s3, %s219
      $region40: #{encoding_block_forward.7} parent=31 // pred_fallthru
        _
    $region32: #{encoding_block_forward.7} parent=5 // pred_fallthru
      _
    %p221 = scmp.le.s32.totalorder 1, %s12
    %p222 = scmp.lt.s32.totalorder %s12, 5
    %p223 = pnand %p221, %p222
    %p224 = pneg %p223
    // Predicated region
    $region41: #{encoding_block_forward.7} parent=5 // pred_check
      _
    $region42: #{encoding_block_forward.7} parent=5 // pred_check_branch
      %226 = sbr.rel (%p223) target = $region44
    $region43: #{encoding_block_forward.7} parent=5 // pred_region
      %s227 = ssub.s32 %s12, 1
      %p228 = scmp.lt.s32.totalorder %s17, 3
      %s229 = scalar_select %p228, %s17, 3
      %s230 = smul.addr %s229, 16
      %s231 = smul.addr %s230, 8
      %s232 = scalar_lea.vmem %s0, %s231
      %p233 = pneg %p38
      %p234 = pneg %p35
      %p235 = pneg %p59
      %p236 = pneg %p56
      %p237 = pneg %p80
      %p238 = pneg %p77
      %p239 = scmp.lt.s32.totalorder %s17, 3
      %s240 = scalar_select %p239, %s17, 3
      %s241 = smul.addr %s240, 16
      %s242 = smul.addr %s241, 4
      %s243 = scalar_lea.vmem %s3, %s242
      %p244 = pneg %p106
      %p245 = pneg %p103
      %p246 = pneg %p127
      %p247 = pneg %p124
      %p248 = pneg %p148
      %p249 = pneg %p145
      %p250 = pneg %p174
      %p251 = pneg %p171
      %p252 = scmp.lt.s32.totalorder %s17, 3
      %s253 = scalar_select %p252, %s17, 3
      %s254 = smul.addr %s253, 16
      %s255 = smul.addr %s254, 8
      %s256 = scalar_lea.vmem %s6, %s255
      %p257 = scmp.lt.s32.totalorder %s17, 3
      %s258 = scalar_select %p257, %s17, 3
      %s259 = smul.addr %s258, 16
      %s260 = smul.addr %s259, 8
      %s261 = scalar_lea.vmem %s0, %s260
      %p262 = scmp.lt.s32.totalorder %s17, 3
      %s263 = scalar_select %p262, %s17, 3
      %s264 = smul.addr %s263, 16
      %s265 = smul.addr %s264, 4
      %s266 = scalar_lea.vmem %s3, %s265
      %p267 = scmp.lt.s32.totalorder %s17, 3
      %s268 = scalar_select %p267, %s17, 3
      %s269 = smul.addr %s268, 16
      %s270 = smul.addr %s269, 8
      %s271 = scalar_lea.vmem %s6, %s270
      %v273 = vld [vmem:[%s261] sm:$0xff]
      %v274 = vld [vmem:[%s261 + $0x8] sm:$0xff]
      %v275 = vld [vmem:[%s261 + $0x10] sm:$0xff]
      %v276 = vld [vmem:[%s261 + $0x18] sm:$0xff]
      %v277 = vld [vmem:[%s261 + $0x20] sm:$0xff]
      %v278 = vld [vmem:[%s261 + $0x28] sm:$0xff]
      %v279 = vld [vmem:[%s261 + $0x30] sm:$0xff]
      %v280 = vld [vmem:[%s261 + $0x38] sm:$0xff]
      %v281 = vld [vmem:[%s261 + $0x40] sm:$0xff]
      %v282 = vld [vmem:[%s261 + $0x48] sm:$0xff]
      %v283 = vld [vmem:[%s261 + $0x50] sm:$0xff]
      %v284 = vld [vmem:[%s261 + $0x58] sm:$0xff]
      %v285 = vld [vmem:[%s261 + $0x60] sm:$0xff]
      %v286 = vld [vmem:[%s261 + $0x68] sm:$0xff]
      %v287 = vld [vmem:[%s261 + $0x70] sm:$0xff]
      %v288 = vld [vmem:[%s261 + $0x78] sm:$0xff]
      %v289 = vld [vmem:[%s1] sm:$0x1]
      %v291 = vperm.slane %v289, 0
      %v293 = vmul.f32 %v273, %v291
      %v294 = vmul.f32 %v274, %v291
      %v295 = vmul.f32 %v275, %v291
      %v296 = vmul.f32 %v276, %v291
      %v297 = vmul.f32 %v277, %v291
      %v298 = vmul.f32 %v278, %v291
      %v299 = vmul.f32 %v279, %v291
      %v300 = vmul.f32 %v280, %v291
      %v301 = vmul.f32 %v281, %v291
      %v302 = vmul.f32 %v282, %v291
      %v303 = vmul.f32 %v283, %v291
      %v304 = vmul.f32 %v284, %v291
      %v305 = vmul.f32 %v285, %v291
      %v306 = vmul.f32 %v286, %v291
      %v307 = vmul.f32 %v287, %v291
      %v308 = vmul.f32 %v288, %v291
      %v309 = vld [vmem:[%s2] sm:$0x1]
      %v311 = vperm.slane %v309, 0
      %v313 = vadd.f32 %v293, %v311
      %v314 = vadd.f32 %v294, %v311
      %v315 = vadd.f32 %v295, %v311
      %v316 = vadd.f32 %v296, %v311
      %v317 = vadd.f32 %v297, %v311
      %v318 = vadd.f32 %v298, %v311
      %v319 = vadd.f32 %v299, %v311
      %v320 = vadd.f32 %v300, %v311
      %v321 = vadd.f32 %v301, %v311
      %v322 = vadd.f32 %v302, %v311
      %v323 = vadd.f32 %v303, %v311
      %v324 = vadd.f32 %v304, %v311
      %v325 = vadd.f32 %v305, %v311
      %v326 = vadd.f32 %v306, %v311
      %v327 = vadd.f32 %v307, %v311
      %v328 = vadd.f32 %v308, %v311
      %v329 = vmax.f32 %v313, 0.0
      %v330 = vmax.f32 %v314, 0.0
      %v331 = vmax.f32 %v315, 0.0
      %v332 = vmax.f32 %v316, 0.0
      %v333 = vmax.f32 %v317, 0.0
      %v334 = vmax.f32 %v318, 0.0
      %v335 = vmax.f32 %v319, 0.0
      %v336 = vmax.f32 %v320, 0.0
      %v337 = vmax.f32 %v321, 0.0
      %v338 = vmax.f32 %v322, 0.0
      %v339 = vmax.f32 %v323, 0.0
      %v340 = vmax.f32 %v324, 0.0
      %v341 = vmax.f32 %v325, 0.0
      %v342 = vmax.f32 %v326, 0.0
      %v343 = vmax.f32 %v327, 0.0
      %v344 = vmax.f32 %v328, 0.0
      %v345 = vld [vmem:[%s266] sm:$0xf]
      %v346 = vld [vmem:[%s266 + $0x4] sm:$0xf]
      %v347 = vld [vmem:[%s266 + $0x8] sm:$0xf]
      %v348 = vld [vmem:[%s266 + $0xc] sm:$0xf]
      %v349 = vld [vmem:[%s266 + $0x10] sm:$0xf]
      %v350 = vld [vmem:[%s266 + $0x14] sm:$0xf]
      %v351 = vld [vmem:[%s266 + $0x18] sm:$0xf]
      %v352 = vld [vmem:[%s266 + $0x1c] sm:$0xf]
      %v353 = vld [vmem:[%s266 + $0x20] sm:$0xf]
      %v354 = vld [vmem:[%s266 + $0x24] sm:$0xf]
      %v355 = vld [vmem:[%s266 + $0x28] sm:$0xf]
      %v356 = vld [vmem:[%s266 + $0x2c] sm:$0xf]
      %v357 = vld [vmem:[%s266 + $0x30] sm:$0xf]
      %v358 = vld [vmem:[%s266 + $0x34] sm:$0xf]
      %v359 = vld [vmem:[%s266 + $0x38] sm:$0xf]
      %v360 = vld [vmem:[%s266 + $0x3c] sm:$0xf]
      %v361 = vld [vmem:[%s4] sm:$0xf]
      %v362 = vld [vmem:[%s5] sm:$0x1]
      %v364 = vperm.slane %v362, 0
      %v382 = vunpack.c.l.b16 %v345
      %v383 = vunpack.c.l.b16 %v346
      %v384 = vunpack.c.l.b16 %v347
      %v385 = vunpack.c.l.b16 %v348
      %v386 = vunpack.c.l.b16 %v349
      %v387 = vunpack.c.l.b16 %v350
      %v388 = vunpack.c.l.b16 %v351
      %v389 = vunpack.c.l.b16 %v352
      %v390 = vunpack.c.l.b16 %v353
      %v391 = vunpack.c.l.b16 %v354
      %v392 = vunpack.c.l.b16 %v355
      %v393 = vunpack.c.l.b16 %v356
      %v394 = vunpack.c.l.b16 %v357
      %v395 = vunpack.c.l.b16 %v358
      %v396 = vunpack.c.l.b16 %v359
      %v397 = vunpack.c.l.b16 %v360
      %v398 = vpack.c.b16 %v383, %v382
      %v399 = vpack.c.b16 %v385, %v384
      %v400 = vpack.c.b16 %v387, %v386
      %v401 = vpack.c.b16 %v389, %v388
      %v402 = vpack.c.b16 %v391, %v390
      %v403 = vpack.c.b16 %v393, %v392
      %v404 = vpack.c.b16 %v395, %v394
      %v405 = vpack.c.b16 %v397, %v396
      %vm406 = vcmask 64512
      %v408 = vsel %vm406, %v398, 0
      %v411 = vsel %vm406, %v399, 0
      %v414 = vsel %vm406, %v400, 0
      %v417 = vsel %vm406, %v401, 0
      %v420 = vsel %vm406, %v402, 0
      %v423 = vsel %vm406, %v403, 0
      %v426 = vsel %vm406, %v404, 0
      %v429 = vsel %vm406, %v405, 0
      %vm431 = vcmask 1043456
      %v433 = vsel %vm431, %v361, 0
      %435 = vmatpush.bf16.msra.mxu0 0
      %436 = vmatpush.bf16.msra.mxu0 0
      %437 = vmatpush.bf16.msra.mxu0 0
      %438 = vmatpush.bf16.msra.mxu0 0
      %439 = vmatpush.bf16.msra.mxu0 0
      %440 = vmatpush.bf16.msra.mxu0 0
      %441 = vmatpush.bf16.msra.mxu0 0
      %442 = vmatpush.bf16.msra.mxu0 %v433
      %443 = vmatmul.bf16.gmra.mxu0 %v408
      %v444 = vpop.f32.mrf.mxu0
      %v445 = vadd.f32 %v364, %v444
      %v446 = vpop.f32.mrf.mxu0
      %v447 = vadd.f32 %v364, %v446
      %448 = vmatmul.bf16.gmra.mxu0 %v411
      %v449 = vpop.f32.mrf.mxu0
      %v450 = vadd.f32 %v364, %v449
      %v451 = vpop.f32.mrf.mxu0
      %v452 = vadd.f32 %v364, %v451
      %453 = vmatmul.bf16.gmra.mxu0 %v414
      %v454 = vpop.f32.mrf.mxu0
      %v455 = vadd.f32 %v364, %v454
      %v456 = vpop.f32.mrf.mxu0
      %v457 = vadd.f32 %v364, %v456
      %458 = vmatmul.bf16.gmra.mxu0 %v417
      %v459 = vpop.f32.mrf.mxu0
      %v460 = vadd.f32 %v364, %v459
      %v461 = vpop.f32.mrf.mxu0
      %v462 = vadd.f32 %v364, %v461
      %463 = vmatmul.bf16.gmra.mxu0 %v420
      %v464 = vpop.f32.mrf.mxu0
      %v465 = vadd.f32 %v364, %v464
      %v466 = vpop.f32.mrf.mxu0
      %v467 = vadd.f32 %v364, %v466
      %468 = vmatmul.bf16.gmra.mxu0 %v423
      %v469 = vpop.f32.mrf.mxu0
      %v470 = vadd.f32 %v364, %v469
      %v471 = vpop.f32.mrf.mxu0
      %v472 = vadd.f32 %v364, %v471
      %473 = vmatmul.bf16.gmra.mxu0 %v426
      %v474 = vpop.f32.mrf.mxu0
      %v475 = vadd.f32 %v364, %v474
      %v476 = vpop.f32.mrf.mxu0
      %v477 = vadd.f32 %v364, %v476
      %478 = vmatmul.bf16.gmra.mxu0 %v429
      %v479 = vpop.f32.mrf.mxu0
      %v480 = vadd.f32 %v364, %v479
      %v481 = vpop.f32.mrf.mxu0
      %v482 = vadd.f32 %v364, %v481
      %483 = vdwg.mxu0
      %v484 = vadd.f32 %v329, %v445
      %v485 = vadd.f32 %v330, %v447
      %v486 = vadd.f32 %v331, %v450
      %v487 = vadd.f32 %v332, %v452
      %v488 = vadd.f32 %v333, %v455
      %v489 = vadd.f32 %v334, %v457
      %v490 = vadd.f32 %v335, %v460
      %v491 = vadd.f32 %v336, %v462
      %v492 = vadd.f32 %v337, %v465
      %v493 = vadd.f32 %v338, %v467
      %v494 = vadd.f32 %v339, %v470
      %v495 = vadd.f32 %v340, %v472
      %v496 = vadd.f32 %v341, %v475
      %v497 = vadd.f32 %v342, %v477
      %v498 = vadd.f32 %v343, %v480
      %v499 = vadd.f32 %v344, %v482
      %500 = vst [vmem:[%s271] sm:$0xff] %v484
      %501 = vst [vmem:[%s271 + $0x8] sm:$0xff] %v485
      %502 = vst [vmem:[%s271 + $0x10] sm:$0xff] %v486
      %503 = vst [vmem:[%s271 + $0x18] sm:$0xff] %v487
      %504 = vst [vmem:[%s271 + $0x20] sm:$0xff] %v488
      %505 = vst [vmem:[%s271 + $0x28] sm:$0xff] %v489
      %506 = vst [vmem:[%s271 + $0x30] sm:$0xff] %v490
      %507 = vst [vmem:[%s271 + $0x38] sm:$0xff] %v491
      %508 = vst [vmem:[%s271 + $0x40] sm:$0xff] %v492
      %509 = vst [vmem:[%s271 + $0x48] sm:$0xff] %v493
      %510 = vst [vmem:[%s271 + $0x50] sm:$0xff] %v494
      %511 = vst [vmem:[%s271 + $0x58] sm:$0xff] %v495
      %512 = vst [vmem:[%s271 + $0x60] sm:$0xff] %v496
      %513 = vst [vmem:[%s271 + $0x68] sm:$0xff] %v497
      %514 = vst [vmem:[%s271 + $0x70] sm:$0xff] %v498
      %515 = vst [vmem:[%s271 + $0x78] sm:$0xff] %v499
      %p516 = scmp.lt.s32.totalorder %s17, 3
      %s517 = scalar_select %p516, %s17, 3
      %s518 = smul.addr %s517, 16
      %s519 = smul.addr %s518, 8
      %s520 = scalar_lea.vmem %s6, %s519
      // Predicated region
      $region45: #{encoding_block_forward.7} parent=43 // pred_check
        %p521 = pneg %p171
      $region46: #{encoding_block_forward.7} parent=43 // pred_check_branch
        %523 = sbr.rel (%p521) target = $region48
      $region47: #{encoding_block_forward.7} parent=43 // pred_region
        _
      $region48: #{encoding_block_forward.7} parent=43 // pred_fallthru
        _
    $region44: #{encoding_block_forward.7} parent=5 // pred_fallthru
      _
    %p524 = scmp.le.s32.totalorder 2, %s12
    // Predicated region
    $region49: #{encoding_block_forward.7} parent=5 // pred_check
      %p525 = pneg %p524
    $region50: #{encoding_block_forward.7} parent=5 // pred_check_branch
      %527 = sbr.rel (%p525) target = $region52
    $region51: #{encoding_block_forward.7} parent=5 // pred_region
      %s528 = ssub.s32 %s12, 2
      // Predicated region
      $region53: #{encoding_block_forward.7} parent=51 // pred_check
        %p529 = pneg %p177
      $region54: #{encoding_block_forward.7} parent=51 // pred_check_branch
        %531 = sbr.rel (%p529) target = $region56
      $region55: #{encoding_block_forward.7} parent=51 // pred_region
        %p532 = scmp.lt.s32.totalorder %s18, 3
        %s533 = scalar_select %p532, %s18, 3
        %s534 = smul.addr %s533, 16
        %s535 = smul.addr %s534, 8
        %s536 = scalar_lea.vmem %s6, %s535
      $region56: #{encoding_block_forward.7} parent=51 // pred_fallthru
        _
    $region52: #{encoding_block_forward.7} parent=5 // pred_fallthru
      _
  $region6: #{encoding_block_forward.7} parent=0 // loop_footer
    %s16 = sadd.s32 1, %s12
  $region7: #{encoding_block_forward.7} parent=0 // loop_footer_branch
    %11 = sbr.rel target = $region3
  $region8: #{encoding_block_forward.7} parent=0 // loop_exit
    _

// kernel: encoding_block_forward.6
$region0: #{encoding_block_forward.6}
  #allocation0 [shape = 'u32[]', space=smem, size = 0x4, offset = 0x4, fixed_abs, tag = 'smem constant byte address 0x4 - core index']
  #allocation1 [shape = 'u32[72,128]{1,0:T(1,128)}', space=vmem, size = 0x9000, scoped, tag = 'internal scratch']
  %s0 = inlined_call_operand.vmem [shape: bf16[4,10,18,128], index: 0, kind: input, shape index: {}]
  %s1 = inlined_call_operand.vmem [shape: bf16[9,128,128], index: 1, kind: input, shape index: {}]
  %s2 = inlined_call_operand.vmem [shape: f32[4,8,16,128], index: 2, kind: output, shape index: {0}]
  %s3 = inlined_call_operand.vmem [shape: f32[1,128], index: 3, kind: output, shape index: {1}]
  %s4 = inlined_call_operand.vmem [shape: f32[1,128], index: 4, kind: output, shape index: {2}]
  %5 = xla_tuple %s2, %s3, %s4
  %s6 = sld [smem:[#allocation0]]
  $region61: #{encoding_block_forward.6} parent=0
    _
  %s8 = ssub.s32 1, %s6
  %s9 = scalar_select 0, %s8, %s6
  loop: start=0, step=1, limit=6
  $region2: #{encoding_block_forward.6} parent=0 // loop_pre_header
    _
  $region3: #{encoding_block_forward.6} parent=0 // loop_header
    %s11 = sphi 0, %s15
    %p12 = scmp.ge.s32.totalorder %s11, 6
    %s21 = sphi 0, %s23
    %s24 = sphi 0, %s21
    %s25 = sphi 0, %s24
    %s41 = sphi 0, %s25
    %s45 = sphi 0, %s45
    %s47 = sphi 0, %s45
    %s48 = sphi 0, %s47
    %s62 = sphi 0, %s48
    %s68 = sphi 0, %s70
    %s71 = sphi 0, %s68
    %s72 = sphi 0, %s71
    %s88 = sphi 0, %s72
    %s92 = sphi 0, %s92
    %s94 = sphi 0, %s92
    %s95 = sphi 0, %s94
    %s109 = sphi 0, %s95
    %s113 = sphi 0, %s113
    %s115 = sphi 0, %s113
    %s116 = sphi 0, %s115
    %s130 = sphi 0, %s116
  $region4: #{encoding_block_forward.6} parent=0 // loop_header_branch
    %14 = sbr.rel (%p12) target = $region8
  $region5: #{encoding_block_forward.6} parent=0 // loop_body
    %s16 = ssub.s32 %s11, 1
    %s17 = ssub.s32 %s11, 2
    %s18 = sadd.s32 %s11, 1
    %s19 = ssub.s32 %s11, %s18
    %p20 = scmp.eq.s32.totalorder %s19, 0
    %s22 = sadd.s32 %s21, 1
    %s23 = scalar_select %p20, %s21, %s22
    %p26 = pneg %p20
    %p27 = scmp.eq.s32.totalorder %s11, 3
    %p28 = por %p26, %p27
    %p29 = scmp.ne.s32.totalorder %s21, %s24
    %p30 = scmp.eq.s32.totalorder %s11, 0
    %p31 = por %p29, %p30
    %p32 = scmp.ne.s32.totalorder %s21, %s24
    %p33 = scmp.eq.s32.totalorder %s16, 3
    %p34 = por %p32, %p33
    %p35 = scmp.ne.s32.totalorder %s24, %s25
    %p36 = scmp.eq.s32.totalorder %s16, 0
    %p37 = por %p35, %p36
    %p38 = scmp.ne.s32.totalorder %s24, %s25
    %p39 = scmp.eq.s32.totalorder %s17, 3
    %p40 = por %p38, %p39
    %p42 = scmp.ne.s32.totalorder %s25, %s41
    %p43 = scmp.eq.s32.totalorder %s17, 0
    %p44 = por %p42, %p43
    %s46 = sadd.s32 %s45, 1
    %p49 = scmp.eq.s32.totalorder %s11, 3
    %p50 = scmp.ne.s32.totalorder %s45, %s47
    %p51 = scmp.eq.s32.totalorder %s11, 0
    %p52 = por %p50, %p51
    %p53 = scmp.ne.s32.totalorder %s45, %s47
    %p54 = scmp.eq.s32.totalorder %s16, 3
    %p55 = por %p53, %p54
    %p56 = scmp.ne.s32.totalorder %s47, %s48
    %p57 = scmp.eq.s32.totalorder %s16, 0
    %p58 = por %p56, %p57
    %p59 = scmp.ne.s32.totalorder %s47, %s48
    %p60 = scmp.eq.s32.totalorder %s17, 3
    %p61 = por %p59, %p60
    %p63 = scmp.ne.s32.totalorder %s48, %s62
    %p64 = scmp.eq.s32.totalorder %s17, 0
    %p65 = por %p63, %p64
    %s66 = ssub.s32 %s11, %s18
    %p67 = scmp.eq.s32.totalorder %s66, 0
    %s69 = sadd.s32 %s68, 1
    %s70 = scalar_select %p67, %s68, %s69
    %p73 = pneg %p67
    %p74 = scmp.eq.s32.totalorder %s11, 3
    %p75 = por %p73, %p74
    %p76 = scmp.ne.s32.totalorder %s68, %s71
    %p77 = scmp.eq.s32.totalorder %s11, 0
    %p78 = por %p76, %p77
    %p79 = scmp.ne.s32.totalorder %s68, %s71
    %p80 = scmp.eq.s32.totalorder %s16, 3
    %p81 = por %p79, %p80
    %p82 = scmp.ne.s32.totalorder %s71, %s72
    %p83 = scmp.eq.s32.totalorder %s16, 0
    %p84 = por %p82, %p83
    %p85 = scmp.ne.s32.totalorder %s71, %s72
    %p86 = scmp.eq.s32.totalorder %s17, 3
    %p87 = por %p85, %p86
    %p89 = scmp.ne.s32.totalorder %s72, %s88
    %p90 = scmp.eq.s32.totalorder %s17, 0
    %p91 = por %p89, %p90
    %s93 = sadd.s32 %s92, 1
    %p96 = scmp.eq.s32.totalorder %s11, 3
    %p97 = scmp.ne.s32.totalorder %s92, %s94
    %p98 = scmp.eq.s32.totalorder %s11, 0
    %p99 = por %p97, %p98
    %p100 = scmp.ne.s32.totalorder %s92, %s94
    %p101 = scmp.eq.s32.totalorder %s16, 3
    %p102 = por %p100, %p101
    %p103 = scmp.ne.s32.totalorder %s94, %s95
    %p104 = scmp.eq.s32.totalorder %s16, 0
    %p105 = por %p103, %p104
    %p106 = scmp.ne.s32.totalorder %s94, %s95
    %p107 = scmp.eq.s32.totalorder %s17, 3
    %p108 = por %p106, %p107
    %p110 = scmp.ne.s32.totalorder %s95, %s109
    %p111 = scmp.eq.s32.totalorder %s17, 0
    %p112 = por %p110, %p111
    %s114 = sadd.s32 %s113, 1
    %p117 = scmp.eq.s32.totalorder %s11, 3
    %p118 = scmp.ne.s32.totalorder %s113, %s115
    %p119 = scmp.eq.s32.totalorder %s11, 0
    %p120 = por %p118, %p119
    %p121 = scmp.ne.s32.totalorder %s113, %s115
    %p122 = scmp.eq.s32.totalorder %s16, 3
    %p123 = por %p121, %p122
    %p124 = scmp.ne.s32.totalorder %s115, %s116
    %p125 = scmp.eq.s32.totalorder %s16, 0
    %p126 = por %p124, %p125
    %p127 = scmp.ne.s32.totalorder %s115, %s116
    %p128 = scmp.eq.s32.totalorder %s17, 3
    %p129 = por %p127, %p128
    %p131 = scmp.ne.s32.totalorder %s116, %s130
    %p132 = scmp.eq.s32.totalorder %s17, 0
    %p133 = por %p131, %p132
    %p134 = scmp.le.s32.totalorder 1, %s11
    %p135 = scmp.lt.s32.totalorder %s11, 5
    %p136 = pnand %p134, %p135
    %p137 = pneg %p136
    // Predicated region
    $region9: #{encoding_block_forward.6} parent=5 // pred_check
      _
    $region10: #{encoding_block_forward.6} parent=5 // pred_check_branch
      %139 = sbr.rel (%p136) target = $region12
    $region11: #{encoding_block_forward.6} parent=5 // pred_region
      %s140 = ssub.s32 %s11, 1
      // Predicated region
      $region13: #{encoding_block_forward.6} parent=11 // pred_check
        %p141 = pneg %p58
      $region14: #{encoding_block_forward.6} parent=11 // pred_check_branch
        %143 = sbr.rel (%p141) target = $region16
      $region15: #{encoding_block_forward.6} parent=11 // pred_region
        _
      $region16: #{encoding_block_forward.6} parent=11 // pred_fallthru
        _
    $region12: #{encoding_block_forward.6} parent=5 // pred_fallthru
      _
    %p144 = scmp.lt.s32.totalorder %s11, 4
    // Predicated region
    $region17: #{encoding_block_forward.6} parent=5 // pred_check
      %p145 = pneg %p144
    $region18: #{encoding_block_forward.6} parent=5 // pred_check_branch
      %147 = sbr.rel (%p145) target = $region20
    $region19: #{encoding_block_forward.6} parent=5 // pred_region
      // Predicated region
      $region21: #{encoding_block_forward.6} parent=19 // pred_check
        %p148 = pneg %p31
      $region22: #{encoding_block_forward.6} parent=19 // pred_check_branch
        %150 = sbr.rel (%p148) target = $region24
      $region23: #{encoding_block_forward.6} parent=19 // pred_region
        %p151 = scmp.lt.s32.totalorder %s11, 3
        %s152 = scalar_select %p151, %s11, 3
        %s153 = smul.addr %s152, 30
        %s154 = smul.addr %s153, 4
        %s155 = scalar_lea.vmem %s0, %s154
      $region24: #{encoding_block_forward.6} parent=19 // pred_fallthru
        _
    $region20: #{encoding_block_forward.6} parent=5 // pred_fallthru
      _
    %p156 = scmp.le.s32.totalorder 1, %s11
    %p157 = scmp.lt.s32.totalorder %s11, 5
    %p158 = pnand %p156, %p157
    %p159 = pneg %p158
    // Predicated region
    $region25: #{encoding_block_forward.6} parent=5 // pred_check
      _
    $region26: #{encoding_block_forward.6} parent=5 // pred_check_branch
      %161 = sbr.rel (%p158) target = $region28
    $region27: #{encoding_block_forward.6} parent=5 // pred_region
      %s162 = ssub.s32 %s11, 1
      %p163 = scmp.lt.s32.totalorder %s16, 3
      %s164 = scalar_select %p163, %s16, 3
      %s165 = smul.addr %s164, 30
      %s166 = smul.addr %s165, 4
      %s167 = scalar_lea.vmem %s0, %s166
      %p168 = pneg %p37
      %p169 = pneg %p34
      %p170 = pneg %p58
      %p171 = pneg %p55
      %p172 = pneg %p84
      %p173 = pneg %p81
      %p174 = scmp.lt.s32.totalorder %s16, 3
      %s175 = scalar_select %p174, %s16, 3
      %s176 = smul.addr %s175, 16
      %s177 = smul.addr %s176, 8
      %s178 = scalar_lea.vmem %s2, %s177
      %p179 = pneg %p105
      %p180 = pneg %p102
      %p181 = pneg %p126
      %p182 = pneg %p123
      %p183 = scmp.lt.s32.totalorder %s16, 3
      %s184 = scalar_select %p183, %s16, 3
      %s185 = smul.addr %s184, 30
      %s186 = smul.addr %s185, 4
      %s187 = scalar_lea.vmem %s0, %s186
      %p188 = scmp.lt.s32.totalorder %s16, 3
      %s189 = scalar_select %p188, %s16, 3
      %s190 = smul.addr %s189, 16
      %s191 = smul.addr %s190, 8
      %s192 = scalar_lea.vmem %s2, %s191
      %p193 = scmp.eq.s32.totalorder %s16, 0
      // Predicated region
      $region29: #{encoding_block_forward.6} parent=27 // pred_check
        %p194 = pneg %p193
      $region30: #{encoding_block_forward.6} parent=27 // pred_check_branch
        %196 = sbr.rel (%p194) target = $region32
      $region31: #{encoding_block_forward.6} parent=27 // pred_region
        %197 = vst [vmem:[%s3] sm:$0x1] 0.0
        %198 = vst [vmem:[%s4] sm:$0x1] 0.0
      $region32: #{encoding_block_forward.6} parent=27 // pred_fallthru
        _
      %v199 = vld [vmem:[%s187] sm:$0xf]
      %v200 = vld [vmem:[%s187 + $0x4] sm:$0xf]
      %v201 = vld [vmem:[%s187 + $0x8] sm:$0x1]
      %v202 = vld [vmem:[%s187 + $0xc] sm:$0xf]
      %v203 = vld [vmem:[%s187 + $0x10] sm:$0xf]
      %v204 = vld [vmem:[%s187 + $0x14] sm:$0x1]
      %v205 = vld [vmem:[%s187 + $0x18] sm:$0xf]
      %v206 = vld [vmem:[%s187 + $0x1c] sm:$0xf]
      %v207 = vld [vmem:[%s187 + $0x20] sm:$0x1]
      %v208 = vld [vmem:[%s187 + $0x24] sm:$0xf]
      %v209 = vld [vmem:[%s187 + $0x28] sm:$0xf]
      %v210 = vld [vmem:[%s187 + $0x2c] sm:$0x1]
      %v211 = vld [vmem:[%s187 + $0x30] sm:$0xf]
      %v212 = vld [vmem:[%s187 + $0x34] sm:$0xf]
      %v213 = vld [vmem:[%s187 + $0x38] sm:$0x1]
      %v214 = vld [vmem:[%s187 + $0x3c] sm:$0xf]
      %v215 = vld [vmem:[%s187 + $0x40] sm:$0xf]
      %v216 = vld [vmem:[%s187 + $0x44] sm:$0x1]
      %v217 = vld [vmem:[%s187 + $0x48] sm:$0xf]
      %v218 = vld [vmem:[%s187 + $0x4c] sm:$0xf]
      %v219 = vld [vmem:[%s187 + $0x50] sm:$0x1]
      %v220 = vld [vmem:[%s187 + $0x54] sm:$0xf]
      %v221 = vld [vmem:[%s187 + $0x58] sm:$0xf]
      %v222 = vld [vmem:[%s187 + $0x5c] sm:$0x1]
      %v223 = vld [vmem:[%s187 + $0x60] sm:$0xf]
      %v224 = vld [vmem:[%s187 + $0x64] sm:$0xf]
      %v225 = vld [vmem:[%s187 + $0x68] sm:$0x1]
      %v226 = vld [vmem:[%s187 + $0x6c] sm:$0xf]
      %v227 = vld [vmem:[%s187 + $0x70] sm:$0xf]
      %v228 = vld [vmem:[%s187 + $0x74] sm:$0x1]
      %v229 = vunpack.c.l.bf16 %v199
      %v230 = vunpack.c.l.bf16 %v200
      %v231 = vunpack.c.l.bf16 %v201
      %v232 = vunpack.c.l.bf16 %v202
      %v233 = vunpack.c.l.bf16 %v203
      %v234 = vunpack.c.l.bf16 %v204
      %v235 = vunpack.c.l.bf16 %v205
      %v236 = vunpack.c.l.bf16 %v206
      %v237 = vunpack.c.l.bf16 %v207
      %v238 = vunpack.c.l.bf16 %v208
      %v239 = vunpack.c.l.bf16 %v209
      %v240 = vunpack.c.l.bf16 %v210
      %v241 = vunpack.c.l.bf16 %v211
      %v242 = vunpack.c.l.bf16 %v212
      %v243 = vunpack.c.l.bf16 %v213
      %v244 = vunpack.c.l.bf16 %v214
      %v245 = vunpack.c.l.bf16 %v215
      %v246 = vunpack.c.l.bf16 %v216
      %v247 = vunpack.c.l.bf16 %v217
      %v248 = vunpack.c.l.bf16 %v218
      %v249 = vunpack.c.l.bf16 %v219
      %v250 = vunpack.c.l.bf16 %v220
      %v251 = vunpack.c.l.bf16 %v221
      %v252 = vunpack.c.l.bf16 %v222
      %v253 = vunpack.c.l.bf16 %v223
      %v254 = vunpack.c.l.bf16 %v224
      %v255 = vunpack.c.l.bf16 %v225
      %v256 = vunpack.c.l.bf16 %v226
      %v257 = vunpack.c.l.bf16 %v227
      %v258 = vunpack.c.l.bf16 %v228
      %v259 = vpack.c.bf16 %v230, %v229
      %v260 = vpack.c.bf16 %v233, %v232
      %v261 = vpack.c.bf16 %v236, %v235
      %v262 = vpack.c.bf16 %v239, %v238
      %v263 = vpack.c.bf16 %v242, %v241
      %v264 = vpack.c.bf16 %v245, %v244
      %v265 = vpack.c.bf16 %v248, %v247
      %v266 = vpack.c.bf16 %v251, %v250
      %v267 = vld [vmem:[%s1] sm:$0xf]
      %v268 = vld [vmem:[%s1 + $0x4] sm:$0xf]
      %v269 = vld [vmem:[%s1 + $0x8] sm:$0xf]
      %v270 = vld [vmem:[%s1 + $0xc] sm:$0xf]
      %v271 = vld [vmem:[%s1 + $0x10] sm:$0xf]
      %v272 = vld [vmem:[%s1 + $0x14] sm:$0xf]
      %v273 = vld [vmem:[%s1 + $0x18] sm:$0xf]
      %v274 = vld [vmem:[%s1 + $0x1c] sm:$0xf]
      %v275 = vld [vmem:[%s1 + $0x20] sm:$0xf]
      %v276 = vld [vmem:[%s1 + $0x24] sm:$0xf]
      %v277 = vld [vmem:[%s1 + $0x28] sm:$0xf]
      %v278 = vld [vmem:[%s1 + $0x2c] sm:$0xf]
      %v279 = vld [vmem:[%s1 + $0x30] sm:$0xf]
      %v280 = vld [vmem:[%s1 + $0x34] sm:$0xf]
      %v281 = vld [vmem:[%s1 + $0x38] sm:$0xf]
      %v282 = vld [vmem:[%s1 + $0x3c] sm:$0xf]
      %vm307 = vcmask 1046528
      %v308 = vrot.slane %v229, 1
      %v309 = vrot.slane %v230, 1
      %v310 = vsel %vm307, %v308, %v309
      %v311 = vrot.slane %v231, 1
      %v312 = vsel %vm307, %v309, %v311
      %v313 = vrot.slane %v232, 1
      %v314 = vrot.slane %v233, 1
      %v315 = vsel %vm307, %v313, %v314
      %v316 = vrot.slane %v234, 1
      %v317 = vsel %vm307, %v314, %v316
      %v318 = vrot.slane %v235, 1
      %v319 = vrot.slane %v236, 1
      %v320 = vsel %vm307, %v318, %v319
      %v321 = vrot.slane %v237, 1
      %v322 = vsel %vm307, %v319, %v321
      %v323 = vrot.slane %v238, 1
      %v324 = vrot.slane %v239, 1
      %v325 = vsel %vm307, %v323, %v324
      %v326 = vrot.slane %v240, 1
      %v327 = vsel %vm307, %v324, %v326
      %v328 = vrot.slane %v241, 1
      %v329 = vrot.slane %v242, 1
      %v330 = vsel %vm307, %v328, %v329
      %v331 = vrot.slane %v243, 1
      %v332 = vsel %vm307, %v329, %v331
      %v333 = vrot.slane %v244, 1
      %v334 = vrot.slane %v245, 1
      %v335 = vsel %vm307, %v333, %v334
      %v336 = vrot.slane %v246, 1
      %v337 = vsel %vm307, %v334, %v336
      %v338 = vrot.slane %v247, 1
      %v339 = vrot.slane %v248, 1
      %v340 = vsel %vm307, %v338, %v339
      %v341 = vrot.slane %v249, 1
      %v342 = vsel %vm307, %v339, %v341
      %v343 = vrot.slane %v250, 1
      %v344 = vrot.slane %v251, 1
      %v345 = vsel %vm307, %v343, %v344
      %v346 = vrot.slane %v252, 1
      %v347 = vsel %vm307, %v344, %v346
      %v364 = vpack.c.bf16 %v312, %v310
      %v365 = vpack.c.bf16 %v317, %v315
      %v366 = vpack.c.bf16 %v322, %v320
      %v367 = vpack.c.bf16 %v327, %v325
      %v368 = vpack.c.bf16 %v332, %v330
      %v369 = vpack.c.bf16 %v337, %v335
      %v370 = vpack.c.bf16 %v342, %v340
      %v371 = vpack.c.bf16 %v347, %v345
      %s372 = scalar_lea.vmem %s1, 64
      %v373 = vld [vmem:[%s372] sm:$0xf]
      %v374 = vld [vmem:[%s372 + $0x4] sm:$0xf]
      %v375 = vld [vmem:[%s372 + $0x8] sm:$0xf]
      %v376 = vld [vmem:[%s372 + $0xc] sm:$0xf]
      %v377 = vld [vmem:[%s372 + $0x10] sm:$0xf]
      %v378 = vld [vmem:[%s372 + $0x14] sm:$0xf]
      %v379 = vld [vmem:[%s372 + $0x18] sm:$0xf]
      %v380 = vld [vmem:[%s372 + $0x1c] sm:$0xf]
      %v381 = vld [vmem:[%s372 + $0x20] sm:$0xf]
      %v382 = vld [vmem:[%s372 + $0x24] sm:$0xf]
      %v383 = vld [vmem:[%s372 + $0x28] sm:$0xf]
      %v384 = vld [vmem:[%s372 + $0x2c] sm:$0xf]
      %v385 = vld [vmem:[%s372 + $0x30] sm:$0xf]
      %v386 = vld [vmem:[%s372 + $0x34] sm:$0xf]
      %v387 = vld [vmem:[%s372 + $0x38] sm:$0xf]
      %v388 = vld [vmem:[%s372 + $0x3c] sm:$0xf]
      %v405 = vunpack.c.l.b16 %v373
      %v406 = vunpack.c.l.b16 %v374
      %v407 = vunpack.c.l.b16 %v375
      %v408 = vunpack.c.l.b16 %v376
      %v409 = vunpack.c.l.b16 %v377
      %v410 = vunpack.c.l.b16 %v378
      %v411 = vunpack.c.l.b16 %v379
      %v412 = vunpack.c.l.b16 %v380
      %v413 = vunpack.c.l.b16 %v381
      %v414 = vunpack.c.l.b16 %v382
      %v415 = vunpack.c.l.b16 %v383
      %v416 = vunpack.c.l.b16 %v384
      %v417 = vunpack.c.l.b16 %v385
      %v418 = vunpack.c.l.b16 %v386
      %v419 = vunpack.c.l.b16 %v387
      %v420 = vunpack.c.l.b16 %v388
      %v421 = vpack.c.b16 %v406, %v405
      %v422 = vpack.c.b16 %v408, %v407
      %v423 = vpack.c.b16 %v410, %v409
      %v424 = vpack.c.b16 %v412, %v411
      %v425 = vpack.c.b16 %v414, %v413
      %v426 = vpack.c.b16 %v416, %v415
      %v427 = vpack.c.b16 %v418, %v417
      %v428 = vpack.c.b16 %v420, %v419
      %437 = vmatpush.bf16.msra.mxu0 %v428
      %438 = vmatpush.bf16.msra.mxu0 %v427
      %439 = vmatpush.bf16.msra.mxu0 %v426
      %440 = vmatpush.bf16.msra.mxu0 %v425
      %441 = vmatpush.bf16.msra.mxu0 %v424
      %442 = vmatpush.bf16.msra.mxu0 %v423
      %443 = vmatpush.bf16.msra.mxu0 %v422
      %444 = vmatpush.bf16.msra.mxu0 %v421
      %445 = vmatmul.bf16.gmra.mxu0 %v364
      %v446 = vpop.f32.mrf.mxu0
      %v447 = vadd.f32 0.0, %v446
      %v448 = vpop.f32.mrf.mxu0
      %v449 = vadd.f32 0.0, %v448
      %450 = vmatmul.bf16.gmra.mxu0 %v365
      %v451 = vpop.f32.mrf.mxu0
      %v452 = vadd.f32 0.0, %v451
      %v453 = vpop.f32.mrf.mxu0
      %v454 = vadd.f32 0.0, %v453
      %455 = vmatmul.bf16.gmra.mxu0 %v366
      %v456 = vpop.f32.mrf.mxu0
      %v457 = vadd.f32 0.0, %v456
      %v458 = vpop.f32.mrf.mxu0
      %v459 = vadd.f32 0.0, %v458
      %460 = vmatmul.bf16.gmra.mxu0 %v367
      %v461 = vpop.f32.mrf.mxu0
      %v462 = vadd.f32 0.0, %v461
      %v463 = vpop.f32.mrf.mxu0
      %v464 = vadd.f32 0.0, %v463
      %465 = vmatmul.bf16.gmra.mxu0 %v368
      %v466 = vpop.f32.mrf.mxu0
      %v467 = vadd.f32 0.0, %v466
      %v468 = vpop.f32.mrf.mxu0
      %v469 = vadd.f32 0.0, %v468
      %470 = vmatmul.bf16.gmra.mxu0 %v369
      %v471 = vpop.f32.mrf.mxu0
      %v472 = vadd.f32 0.0, %v471
      %v473 = vpop.f32.mrf.mxu0
      %v474 = vadd.f32 0.0, %v473
      %475 = vmatmul.bf16.gmra.mxu0 %v370
      %v476 = vpop.f32.mrf.mxu0
      %v477 = vadd.f32 0.0, %v476
      %v478 = vpop.f32.mrf.mxu0
      %v479 = vadd.f32 0.0, %v478
      %480 = vmatmul.bf16.gmra.mxu0 %v371
      %v481 = vpop.f32.mrf.mxu0
      %v482 = vadd.f32 0.0, %v481
      %v483 = vpop.f32.mrf.mxu0
      %v484 = vadd.f32 0.0, %v483
      %485 = vdwg.mxu0
      %v502 = vunpack.c.l.b16 %v267
      %v503 = vunpack.c.l.b16 %v268
      %v504 = vunpack.c.l.b16 %v269
      %v505 = vunpack.c.l.b16 %v270
      %v506 = vunpack.c.l.b16 %v271
      %v507 = vunpack.c.l.b16 %v272
      %v508 = vunpack.c.l.b16 %v273
      %v509 = vunpack.c.l.b16 %v274
      %v510 = vunpack.c.l.b16 %v275
      %v511 = vunpack.c.l.b16 %v276
      %v512 = vunpack.c.l.b16 %v277
      %v513 = vunpack.c.l.b16 %v278
      %v514 = vunpack.c.l.b16 %v279
      %v515 = vunpack.c.l.b16 %v280
      %v516 = vunpack.c.l.b16 %v281
      %v517 = vunpack.c.l.b16 %v282
      %v518 = vpack.c.b16 %v503, %v502
      %v519 = vpack.c.b16 %v505, %v504
      %v520 = vpack.c.b16 %v507, %v506
      %v521 = vpack.c.b16 %v509, %v508
      %v522 = vpack.c.b16 %v511, %v510
      %v523 = vpack.c.b16 %v513, %v512
      %v524 = vpack.c.b16 %v515, %v514
      %v525 = vpack.c.b16 %v517, %v516
      %534 = vmatpush.bf16.msra.mxu0 %v525
      %535 = vmatpush.bf16.msra.mxu0 %v524
      %536 = vmatpush.bf16.msra.mxu0 %v523
      %537 = vmatpush.bf16.msra.mxu0 %v522
      %538 = vmatpush.bf16.msra.mxu0 %v521
      %539 = vmatpush.bf16.msra.mxu0 %v520
      %540 = vmatpush.bf16.msra.mxu0 %v519
      %541 = vmatpush.bf16.msra.mxu0 %v518
      %542 = vmatmul.bf16.gmra.mxu0 %v259
      %v543 = vpop.f32.mrf.mxu0
      %v544 = vadd.f32 %v447, %v543
      %v545 = vpop.f32.mrf.mxu0
      %v546 = vadd.f32 %v449, %v545
      %547 = vmatmul.bf16.gmra.mxu0 %v260
      %v548 = vpop.f32.mrf.mxu0
      %v549 = vadd.f32 %v452, %v548
      %v550 = vpop.f32.mrf.mxu0
      %v551 = vadd.f32 %v454, %v550
      %552 = vmatmul.bf16.gmra.mxu0 %v261
      %v553 = vpop.f32.mrf.mxu0
      %v554 = vadd.f32 %v457, %v553
      %v555 = vpop.f32.mrf.mxu0
      %v556 = vadd.f32 %v459, %v555
      %557 = vmatmul.bf16.gmra.mxu0 %v262
      %v558 = vpop.f32.mrf.mxu0
      %v559 = vadd.f32 %v462, %v558
      %v560 = vpop.f32.mrf.mxu0
      %v561 = vadd.f32 %v464, %v560
      %562 = vmatmul.bf16.gmra.mxu0 %v263
      %v563 = vpop.f32.mrf.mxu0
      %v564 = vadd.f32 %v467, %v563
      %v565 = vpop.f32.mrf.mxu0
      %v566 = vadd.f32 %v469, %v565
      %567 = vmatmul.bf16.gmra.mxu0 %v264
      %v568 = vpop.f32.mrf.mxu0
      %v569 = vadd.f32 %v472, %v568
      %v570 = vpop.f32.mrf.mxu0
      %v571 = vadd.f32 %v474, %v570
      %572 = vmatmul.bf16.gmra.mxu0 %v265
      %v573 = vpop.f32.mrf.mxu0
      %v574 = vadd.f32 %v477, %v573
      %v575 = vpop.f32.mrf.mxu0
      %v576 = vadd.f32 %v479, %v575
      %577 = vmatmul.bf16.gmra.mxu0 %v266
      %v578 = vpop.f32.mrf.mxu0
      %v579 = vadd.f32 %v482, %v578
      %v580 = vpop.f32.mrf.mxu0
      %v581 = vadd.f32 %v484, %v580
      %582 = vdwg.mxu0
      %vm583 = vcmask 1045504
      %v584 = vrot.slane %v229, 2
      %v585 = vrot.slane %v230, 2
      %v586 = vsel %vm583, %v584, %v585
      %v587 = vrot.slane %v231, 2
      %v588 = vsel %vm583, %v585, %v587
      %v589 = vrot.slane %v232, 2
      %v590 = vrot.slane %v233, 2
      %v591 = vsel %vm583, %v589, %v590
      %v592 = vrot.slane %v234, 2
      %v593 = vsel %vm583, %v590, %v592
      %v594 = vrot.slane %v235, 2
      %v595 = vrot.slane %v236, 2
      %v596 = vsel %vm583, %v594, %v595
      %v597 = vrot.slane %v237, 2
      %v598 = vsel %vm583, %v595, %v597
      %v599 = vrot.slane %v238, 2
      %v600 = vrot.slane %v239, 2
      %v601 = vsel %vm583, %v599, %v600
      %v602 = vrot.slane %v240, 2
      %v603 = vsel %vm583, %v600, %v602
      %v604 = vrot.slane %v241, 2
      %v605 = vrot.slane %v242, 2
      %v606 = vsel %vm583, %v604, %v605
      %v607 = vrot.slane %v243, 2
      %v608 = vsel %vm583, %v605, %v607
      %v609 = vrot.slane %v244, 2
      %v610 = vrot.slane %v245, 2
      %v611 = vsel %vm583, %v609, %v610
      %v612 = vrot.slane %v246, 2
      %v613 = vsel %vm583, %v610, %v612
      %v614 = vrot.slane %v247, 2
      %v615 = vrot.slane %v248, 2
      %v616 = vsel %vm583, %v614, %v615
      %v617 = vrot.slane %v249, 2
      %v618 = vsel %vm583, %v615, %v617
      %v619 = vrot.slane %v250, 2
      %v620 = vrot.slane %v251, 2
      %v621 = vsel %vm583, %v619, %v620
      %v622 = vrot.slane %v252, 2
      %v623 = vsel %vm583, %v620, %v622
      %v640 = vpack.c.bf16 %v588, %v586
      %v641 = vpack.c.bf16 %v593, %v591
      %v642 = vpack.c.bf16 %v598, %v596
      %v643 = vpack.c.bf16 %v603, %v601
      %v644 = vpack.c.bf16 %v608, %v606
      %v645 = vpack.c.bf16 %v613, %v611
      %v646 = vpack.c.bf16 %v618, %v616
      %v647 = vpack.c.bf16 %v623, %v621
      %s648 = scalar_lea.vmem %s1, 128
      %v649 = vld [vmem:[%s648] sm:$0xf]
      %v650 = vld [vmem:[%s648 + $0x4] sm:$0xf]
      %v651 = vld [vmem:[%s648 + $0x8] sm:$0xf]
      %v652 = vld [vmem:[%s648 + $0xc] sm:$0xf]
      %v653 = vld [vmem:[%s648 + $0x10] sm:$0xf]
      %v654 = vld [vmem:[%s648 + $0x14] sm:$0xf]
      %v655 = vld [vmem:[%s648 + $0x18] sm:$0xf]
      %v656 = vld [vmem:[%s648 + $0x1c] sm:$0xf]
      %v657 = vld [vmem:[%s648 + $0x20] sm:$0xf]
      %v658 = vld [vmem:[%s648 + $0x24] sm:$0xf]
      %v659 = vld [vmem:[%s648 + $0x28] sm:$0xf]
      %v660 = vld [vmem:[%s648 + $0x2c] sm:$0xf]
      %v661 = vld [vmem:[%s648 + $0x30] sm:$0xf]
      %v662 = vld [vmem:[%s648 + $0x34] sm:$0xf]
      %v663 = vld [vmem:[%s648 + $0x38] sm:$0xf]
      %v664 = vld [vmem:[%s648 + $0x3c] sm:$0xf]
      %v681 = vunpack.c.l.b16 %v649
      %v682 = vunpack.c.l.b16 %v650
      %v683 = vunpack.c.l.b16 %v651
      %v684 = vunpack.c.l.b16 %v652
      %v685 = vunpack.c.l.b16 %v653
      %v686 = vunpack.c.l.b16 %v654
      %v687 = vunpack.c.l.b16 %v655
      %v688 = vunpack.c.l.b16 %v656
      %v689 = vunpack.c.l.b16 %v657
      %v690 = vunpack.c.l.b16 %v658
      %v691 = vunpack.c.l.b16 %v659
      %v692 = vunpack.c.l.b16 %v660
      %v693 = vunpack.c.l.b16 %v661
      %v694 = vunpack.c.l.b16 %v662
      %v695 = vunpack.c.l.b16 %v663
      %v696 = vunpack.c.l.b16 %v664
      %v697 = vpack.c.b16 %v682, %v681
      %v698 = vpack.c.b16 %v684, %v683
      %v699 = vpack.c.b16 %v686, %v685
      %v700 = vpack.c.b16 %v688, %v687
      %v701 = vpack.c.b16 %v690, %v689
      %v702 = vpack.c.b16 %v692, %v691
      %v703 = vpack.c.b16 %v694, %v693
      %v704 = vpack.c.b16 %v696, %v695
      %713 = vmatpush.bf16.msra.mxu0 %v704
      %714 = vmatpush.bf16.msra.mxu0 %v703
      %715 = vmatpush.bf16.msra.mxu0 %v702
      %716 = vmatpush.bf16.msra.mxu0 %v701
      %717 = vmatpush.bf16.msra.mxu0 %v700
      %718 = vmatpush.bf16.msra.mxu0 %v699
      %719 = vmatpush.bf16.msra.mxu0 %v698
      %720 = vmatpush.bf16.msra.mxu0 %v697
      %721 = vmatmul.bf16.gmra.mxu0 %v640
      %v722 = vpop.f32.mrf.mxu0
      %v723 = vadd.f32 0.0, %v722
      %v724 = vpop.f32.mrf.mxu0
      %v725 = vadd.f32 0.0, %v724
      %726 = vmatmul.bf16.gmra.mxu0 %v641
      %v727 = vpop.f32.mrf.mxu0
      %v728 = vadd.f32 0.0, %v727
      %v729 = vpop.f32.mrf.mxu0
      %v730 = vadd.f32 0.0, %v729
      %731 = vmatmul.bf16.gmra.mxu0 %v642
      %v732 = vpop.f32.mrf.mxu0
      %v733 = vadd.f32 0.0, %v732
      %v734 = vpop.f32.mrf.mxu0
      %v735 = vadd.f32 0.0, %v734
      %736 = vmatmul.bf16.gmra.mxu0 %v643
      %v737 = vpop.f32.mrf.mxu0
      %v738 = vadd.f32 0.0, %v737
      %v739 = vpop.f32.mrf.mxu0
      %v740 = vadd.f32 0.0, %v739
      %741 = vmatmul.bf16.gmra.mxu0 %v644
      %v742 = vpop.f32.mrf.mxu0
      %v743 = vadd.f32 0.0, %v742
      %v744 = vpop.f32.mrf.mxu0
      %v745 = vadd.f32 0.0, %v744
      %746 = vmatmul.bf16.gmra.mxu0 %v645
      %v747 = vpop.f32.mrf.mxu0
      %v748 = vadd.f32 0.0, %v747
      %v749 = vpop.f32.mrf.mxu0
      %v750 = vadd.f32 0.0, %v749
      %751 = vmatmul.bf16.gmra.mxu0 %v646
      %v752 = vpop.f32.mrf.mxu0
      %v753 = vadd.f32 0.0, %v752
      %v754 = vpop.f32.mrf.mxu0
      %v755 = vadd.f32 0.0, %v754
      %756 = vmatmul.bf16.gmra.mxu0 %v647
      %v757 = vpop.f32.mrf.mxu0
      %v758 = vadd.f32 0.0, %v757
      %v759 = vpop.f32.mrf.mxu0
      %v760 = vadd.f32 0.0, %v759
      %761 = vdwg.mxu0
      %v762 = vadd.f32 %v544, %v723
      %v763 = vadd.f32 %v546, %v725
      %v764 = vadd.f32 %v549, %v728
      %v765 = vadd.f32 %v551, %v730
      %v766 = vadd.f32 %v554, %v733
      %v767 = vadd.f32 %v556, %v735
      %v768 = vadd.f32 %v559, %v738
      %v769 = vadd.f32 %v561, %v740
      %v770 = vadd.f32 %v564, %v743
      %v771 = vadd.f32 %v566, %v745
      %v772 = vadd.f32 %v569, %v748
      %v773 = vadd.f32 %v571, %v750
      %v774 = vadd.f32 %v574, %v753
      %v775 = vadd.f32 %v576, %v755
      %v776 = vadd.f32 %v579, %v758
      %v777 = vadd.f32 %v581, %v760
      %v778 = vpack.c.bf16 %v254, %v253
      %s779 = scalar_lea.vmem %s1, 192
      %v780 = vld [vmem:[%s779] sm:$0xf]
      %v781 = vld [vmem:[%s779 + $0x4] sm:$0xf]
      %v782 = vld [vmem:[%s779 + $0x8] sm:$0xf]
      %v783 = vld [vmem:[%s779 + $0xc] sm:$0xf]
      %v784 = vld [vmem:[%s779 + $0x10] sm:$0xf]
      %v785 = vld [vmem:[%s779 + $0x14] sm:$0xf]
      %v786 = vld [vmem:[%s779 + $0x18] sm:$0xf]
      %v787 = vld [vmem:[%s779 + $0x1c] sm:$0xf]
      %v788 = vld [vmem:[%s779 + $0x20] sm:$0xf]
      %v789 = vld [vmem:[%s779 + $0x24] sm:$0xf]
      %v790 = vld [vmem:[%s779 + $0x28] sm:$0xf]
      %v791 = vld [vmem:[%s779 + $0x2c] sm:$0xf]
      %v792 = vld [vmem:[%s779 + $0x30] sm:$0xf]
      %v793 = vld [vmem:[%s779 + $0x34] sm:$0xf]
      %v794 = vld [vmem:[%s779 + $0x38] sm:$0xf]
      %v795 = vld [vmem:[%s779 + $0x3c] sm:$0xf]
      %v812 = vunpack.c.l.b16 %v780
      %v813 = vunpack.c.l.b16 %v781
      %v814 = vunpack.c.l.b16 %v782
      %v815 = vunpack.c.l.b16 %v783
      %v816 = vunpack.c.l.b16 %v784
      %v817 = vunpack.c.l.b16 %v785
      %v818 = vunpack.c.l.b16 %v786
      %v819 = vunpack.c.l.b16 %v787
      %v820 = vunpack.c.l.b16 %v788
      %v821 = vunpack.c.l.b16 %v789
      %v822 = vunpack.c.l.b16 %v790
      %v823 = vunpack.c.l.b16 %v791
      %v824 = vunpack.c.l.b16 %v792
      %v825 = vunpack.c.l.b16 %v793
      %v826 = vunpack.c.l.b16 %v794
      %v827 = vunpack.c.l.b16 %v795
      %v828 = vpack.c.b16 %v813, %v812
      %v829 = vpack.c.b16 %v815, %v814
      %v830 = vpack.c.b16 %v817, %v816
      %v831 = vpack.c.b16 %v819, %v818
      %v832 = vpack.c.b16 %v821, %v820
      %v833 = vpack.c.b16 %v823, %v822
      %v834 = vpack.c.b16 %v825, %v824
      %v835 = vpack.c.b16 %v827, %v826
      %844 = vmatpush.bf16.msra.mxu0 %v835
      %845 = vmatpush.bf16.msra.mxu0 %v834
      %846 = vmatpush.bf16.msra.mxu0 %v833
      %847 = vmatpush.bf16.msra.mxu0 %v832
      %848 = vmatpush.bf16.msra.mxu0 %v831
      %849 = vmatpush.bf16.msra.mxu0 %v830
      %850 = vmatpush.bf16.msra.mxu0 %v829
      %851 = vmatpush.bf16.msra.mxu0 %v828
      %852 = vmatmul.bf16.gmra.mxu0 %v260
      %v853 = vpop.f32.mrf.mxu0
      %v854 = vadd.f32 0.0, %v853
      %v855 = vpop.f32.mrf.mxu0
      %v856 = vadd.f32 0.0, %v855
      %857 = vmatmul.bf16.gmra.mxu0 %v261
      %v858 = vpop.f32.mrf.mxu0
      %v859 = vadd.f32 0.0, %v858
      %v860 = vpop.f32.mrf.mxu0
      %v861 = vadd.f32 0.0, %v860
      %862 = vmatmul.bf16.gmra.mxu0 %v262
      %v863 = vpop.f32.mrf.mxu0
      %v864 = vadd.f32 0.0, %v863
      %v865 = vpop.f32.mrf.mxu0
      %v866 = vadd.f32 0.0, %v865
      %867 = vmatmul.bf16.gmra.mxu0 %v263
      %v868 = vpop.f32.mrf.mxu0
      %v869 = vadd.f32 0.0, %v868
      %v870 = vpop.f32.mrf.mxu0
      %v871 = vadd.f32 0.0, %v870
      %872 = vmatmul.bf16.gmra.mxu0 %v264
      %v873 = vpop.f32.mrf.mxu0
      %v874 = vadd.f32 0.0, %v873
      %v875 = vpop.f32.mrf.mxu0
      %v876 = vadd.f32 0.0, %v875
      %877 = vmatmul.bf16.gmra.mxu0 %v265
      %v878 = vpop.f32.mrf.mxu0
      %v879 = vadd.f32 0.0, %v878
      %v880 = vpop.f32.mrf.mxu0
      %v881 = vadd.f32 0.0, %v880
      %882 = vmatmul.bf16.gmra.mxu0 %v266
      %v883 = vpop.f32.mrf.mxu0
      %v884 = vadd.f32 0.0, %v883
      %v885 = vpop.f32.mrf.mxu0
      %v886 = vadd.f32 0.0, %v885
      %887 = vmatmul.bf16.gmra.mxu0 %v778
      %v888 = vpop.f32.mrf.mxu0
      %v889 = vadd.f32 0.0, %v888
      %v890 = vpop.f32.mrf.mxu0
      %v891 = vadd.f32 0.0, %v890
      %892 = vdwg.mxu0
      %v893 = vadd.f32 %v762, %v854
      %v894 = vadd.f32 %v763, %v856
      %v895 = vadd.f32 %v764, %v859
      %v896 = vadd.f32 %v765, %v861
      %v897 = vadd.f32 %v766, %v864
      %v898 = vadd.f32 %v767, %v866
      %v899 = vadd.f32 %v768, %v869
      %v900 = vadd.f32 %v769, %v871
      %v901 = vadd.f32 %v770, %v874
      %v902 = vadd.f32 %v771, %v876
      %v903 = vadd.f32 %v772, %v879
      %v904 = vadd.f32 %v773, %v881
      %v905 = vadd.f32 %v774, %v884
      %v906 = vadd.f32 %v775, %v886
      %v907 = vadd.f32 %v776, %v889
      %v908 = vadd.f32 %v777, %v891
      %v912 = vrot.slane %v253, 1
      %v913 = vrot.slane %v254, 1
      %v914 = vsel %vm307, %v912, %v913
      %v915 = vrot.slane %v255, 1
      %v916 = vsel %vm307, %v913, %v915
      %v919 = vpack.c.bf16 %v916, %v914
      %s920 = scalar_lea.vmem %s1, 256
      %v921 = vld [vmem:[%s920] sm:$0xf]
      %v922 = vld [vmem:[%s920 + $0x4] sm:$0xf]
      %v923 = vld [vmem:[%s920 + $0x8] sm:$0xf]
      %v924 = vld [vmem:[%s920 + $0xc] sm:$0xf]
      %v925 = vld [vmem:[%s920 + $0x10] sm:$0xf]
      %v926 = vld [vmem:[%s920 + $0x14] sm:$0xf]
      %v927 = vld [vmem:[%s920 + $0x18] sm:$0xf]
      %v928 = vld [vmem:[%s920 + $0x1c] sm:$0xf]
      %v929 = vld [vmem:[%s920 + $0x20] sm:$0xf]
      %v930 = vld [vmem:[%s920 + $0x24] sm:$0xf]
      %v931 = vld [vmem:[%s920 + $0x28] sm:$0xf]
      %v932 = vld [vmem:[%s920 + $0x2c] sm:$0xf]
      %v933 = vld [vmem:[%s920 + $0x30] sm:$0xf]
      %v934 = vld [vmem:[%s920 + $0x34] sm:$0xf]
      %v935 = vld [vmem:[%s920 + $0x38] sm:$0xf]
      %v936 = vld [vmem:[%s920 + $0x3c] sm:$0xf]
      %v953 = vunpack.c.l.b16 %v921
      %v954 = vunpack.c.l.b16 %v922
      %v955 = vunpack.c.l.b16 %v923
      %v956 = vunpack.c.l.b16 %v924
      %v957 = vunpack.c.l.b16 %v925
      %v958 = vunpack.c.l.b16 %v926
      %v959 = vunpack.c.l.b16 %v927
      %v960 = vunpack.c.l.b16 %v928
      %v961 = vunpack.c.l.b16 %v929
      %v962 = vunpack.c.l.b16 %v930
      %v963 = vunpack.c.l.b16 %v931
      %v964 = vunpack.c.l.b16 %v932
      %v965 = vunpack.c.l.b16 %v933
      %v966 = vunpack.c.l.b16 %v934
      %v967 = vunpack.c.l.b16 %v935
      %v968 = vunpack.c.l.b16 %v936
      %v969 = vpack.c.b16 %v954, %v953
      %v970 = vpack.c.b16 %v956, %v955
      %v971 = vpack.c.b16 %v958, %v957
      %v972 = vpack.c.b16 %v960, %v959
      %v973 = vpack.c.b16 %v962, %v961
      %v974 = vpack.c.b16 %v964, %v963
      %v975 = vpack.c.b16 %v966, %v965
      %v976 = vpack.c.b16 %v968, %v967
      %985 = vmatpush.bf16.msra.mxu0 %v976
      %986 = vmatpush.bf16.msra.mxu0 %v975
      %987 = vmatpush.bf16.msra.mxu0 %v974
      %988 = vmatpush.bf16.msra.mxu0 %v973
      %989 = vmatpush.bf16.msra.mxu0 %v972
      %990 = vmatpush.bf16.msra.mxu0 %v971
      %991 = vmatpush.bf16.msra.mxu0 %v970
      %992 = vmatpush.bf16.msra.mxu0 %v969
      %993 = vmatmul.bf16.gmra.mxu0 %v365
      %v994 = vpop.f32.mrf.mxu0
      %v995 = vadd.f32 0.0, %v994
      %v996 = vpop.f32.mrf.mxu0
      %v997 = vadd.f32 0.0, %v996
      %998 = vmatmul.bf16.gmra.mxu0 %v366
      %v999 = vpop.f32.mrf.mxu0
      %v1000 = vadd.f32 0.0, %v999
      %v1001 = vpop.f32.mrf.mxu0
      %v1002 = vadd.f32 0.0, %v1001
      %1003 = vmatmul.bf16.gmra.mxu0 %v367
      %v1004 = vpop.f32.mrf.mxu0
      %v1005 = vadd.f32 0.0, %v1004
      %v1006 = vpop.f32.mrf.mxu0
      %v1007 = vadd.f32 0.0, %v1006
      %1008 = vmatmul.bf16.gmra.mxu0 %v368
      %v1009 = vpop.f32.mrf.mxu0
      %v1010 = vadd.f32 0.0, %v1009
      %v1011 = vpop.f32.mrf.mxu0
      %v1012 = vadd.f32 0.0, %v1011
      %1013 = vmatmul.bf16.gmra.mxu0 %v369
      %v1014 = vpop.f32.mrf.mxu0
      %v1015 = vadd.f32 0.0, %v1014
      %v1016 = vpop.f32.mrf.mxu0
      %v1017 = vadd.f32 0.0, %v1016
      %1018 = vmatmul.bf16.gmra.mxu0 %v370
      %v1019 = vpop.f32.mrf.mxu0
      %v1020 = vadd.f32 0.0, %v1019
      %v1021 = vpop.f32.mrf.mxu0
      %v1022 = vadd.f32 0.0, %v1021
      %1023 = vmatmul.bf16.gmra.mxu0 %v371
      %v1024 = vpop.f32.mrf.mxu0
      %v1025 = vadd.f32 0.0, %v1024
      %v1026 = vpop.f32.mrf.mxu0
      %v1027 = vadd.f32 0.0, %v1026
      %1028 = vmatmul.bf16.gmra.mxu0 %v919
      %v1029 = vpop.f32.mrf.mxu0
      %v1030 = vadd.f32 0.0, %v1029
      %v1031 = vpop.f32.mrf.mxu0
      %v1032 = vadd.f32 0.0, %v1031
      %1033 = vdwg.mxu0
      %v1034 = vadd.f32 %v893, %v995
      %v1035 = vadd.f32 %v894, %v997
      %v1036 = vadd.f32 %v895, %v1000
      %v1037 = vadd.f32 %v896, %v1002
      %v1038 = vadd.f32 %v897, %v1005
      %v1039 = vadd.f32 %v898, %v1007
      %v1040 = vadd.f32 %v899, %v1010
      %v1041 = vadd.f32 %v900, %v1012
      %v1042 = vadd.f32 %v901, %v1015
      %v1043 = vadd.f32 %v902, %v1017
      %v1044 = vadd.f32 %v903, %v1020
      %v1045 = vadd.f32 %v904, %v1022
      %v1046 = vadd.f32 %v905, %v1025
      %v1047 = vadd.f32 %v906, %v1027
      %v1048 = vadd.f32 %v907, %v1030
      %v1049 = vadd.f32 %v908, %v1032
      %v1050 = vrot.slane %v253, 2
      %v1051 = vrot.slane %v254, 2
      %v1052 = vsel %vm583, %v1050, %v1051
      %v1053 = vrot.slane %v255, 2
      %v1054 = vsel %vm583, %v1051, %v1053
      %v1057 = vpack.c.bf16 %v1054, %v1052
      %s1058 = scalar_lea.vmem %s1, 320
      %v1059 = vld [vmem:[%s1058] sm:$0xf]
      %v1060 = vld [vmem:[%s1058 + $0x4] sm:$0xf]
      %v1061 = vld [vmem:[%s1058 + $0x8] sm:$0xf]
      %v1062 = vld [vmem:[%s1058 + $0xc] sm:$0xf]
      %v1063 = vld [vmem:[%s1058 + $0x10] sm:$0xf]
      %v1064 = vld [vmem:[%s1058 + $0x14] sm:$0xf]
      %v1065 = vld [vmem:[%s1058 + $0x18] sm:$0xf]
      %v1066 = vld [vmem:[%s1058 + $0x1c] sm:$0xf]
      %v1067 = vld [vmem:[%s1058 + $0x20] sm:$0xf]
      %v1068 = vld [vmem:[%s1058 + $0x24] sm:$0xf]
      %v1069 = vld [vmem:[%s1058 + $0x28] sm:$0xf]
      %v1070 = vld [vmem:[%s1058 + $0x2c] sm:$0xf]
      %v1071 = vld [vmem:[%s1058 + $0x30] sm:$0xf]
      %v1072 = vld [vmem:[%s1058 + $0x34] sm:$0xf]
      %v1073 = vld [vmem:[%s1058 + $0x38] sm:$0xf]
      %v1074 = vld [vmem:[%s1058 + $0x3c] sm:$0xf]
      %v1091 = vunpack.c.l.b16 %v1059
      %v1092 = vunpack.c.l.b16 %v1060
      %v1093 = vunpack.c.l.b16 %v1061
      %v1094 = vunpack.c.l.b16 %v1062
      %v1095 = vunpack.c.l.b16 %v1063
      %v1096 = vunpack.c.l.b16 %v1064
      %v1097 = vunpack.c.l.b16 %v1065
      %v1098 = vunpack.c.l.b16 %v1066
      %v1099 = vunpack.c.l.b16 %v1067
      %v1100 = vunpack.c.l.b16 %v1068
      %v1101 = vunpack.c.l.b16 %v1069
      %v1102 = vunpack.c.l.b16 %v1070
      %v1103 = vunpack.c.l.b16 %v1071
      %v1104 = vunpack.c.l.b16 %v1072
      %v1105 = vunpack.c.l.b16 %v1073
      %v1106 = vunpack.c.l.b16 %v1074
      %v1107 = vpack.c.b16 %v1092, %v1091
      %v1108 = vpack.c.b16 %v1094, %v1093
      %v1109 = vpack.c.b16 %v1096, %v1095
      %v1110 = vpack.c.b16 %v1098, %v1097
      %v1111 = vpack.c.b16 %v1100, %v1099
      %v1112 = vpack.c.b16 %v1102, %v1101
      %v1113 = vpack.c.b16 %v1104, %v1103
      %v1114 = vpack.c.b16 %v1106, %v1105
      %1123 = vmatpush.bf16.msra.mxu0 %v1114
      %1124 = vmatpush.bf16.msra.mxu0 %v1113
      %1125 = vmatpush.bf16.msra.mxu0 %v1112
      %1126 = vmatpush.bf16.msra.mxu0 %v1111
      %1127 = vmatpush.bf16.msra.mxu0 %v1110
      %1128 = vmatpush.bf16.msra.mxu0 %v1109
      %1129 = vmatpush.bf16.msra.mxu0 %v1108
      %1130 = vmatpush.bf16.msra.mxu0 %v1107
      %1131 = vmatmul.bf16.gmra.mxu0 %v641
      %v1132 = vpop.f32.mrf.mxu0
      %v1133 = vadd.f32 0.0, %v1132
      %v1134 = vpop.f32.mrf.mxu0
      %v1135 = vadd.f32 0.0, %v1134
      %1136 = vmatmul.bf16.gmra.mxu0 %v642
      %v1137 = vpop.f32.mrf.mxu0
      %v1138 = vadd.f32 0.0, %v1137
      %v1139 = vpop.f32.mrf.mxu0
      %v1140 = vadd.f32 0.0, %v1139
      %1141 = vmatmul.bf16.gmra.mxu0 %v643
      %v1142 = vpop.f32.mrf.mxu0
      %v1143 = vadd.f32 0.0, %v1142
      %v1144 = vpop.f32.mrf.mxu0
      %v1145 = vadd.f32 0.0, %v1144
      %1146 = vmatmul.bf16.gmra.mxu0 %v644
      %v1147 = vpop.f32.mrf.mxu0
      %v1148 = vadd.f32 0.0, %v1147
      %v1149 = vpop.f32.mrf.mxu0
      %v1150 = vadd.f32 0.0, %v1149
      %1151 = vmatmul.bf16.gmra.mxu0 %v645
      %v1152 = vpop.f32.mrf.mxu0
      %v1153 = vadd.f32 0.0, %v1152
      %v1154 = vpop.f32.mrf.mxu0
      %v1155 = vadd.f32 0.0, %v1154
      %1156 = vmatmul.bf16.gmra.mxu0 %v646
      %v1157 = vpop.f32.mrf.mxu0
      %v1158 = vadd.f32 0.0, %v1157
      %v1159 = vpop.f32.mrf.mxu0
      %v1160 = vadd.f32 0.0, %v1159
      %1161 = vmatmul.bf16.gmra.mxu0 %v647
      %v1162 = vpop.f32.mrf.mxu0
      %v1163 = vadd.f32 0.0, %v1162
      %v1164 = vpop.f32.mrf.mxu0
      %v1165 = vadd.f32 0.0, %v1164
      %1166 = vmatmul.bf16.gmra.mxu0 %v1057
      %v1167 = vpop.f32.mrf.mxu0
      %v1168 = vadd.f32 0.0, %v1167
      %v1169 = vpop.f32.mrf.mxu0
      %v1170 = vadd.f32 0.0, %v1169
      %1171 = vdwg.mxu0
      %v1172 = vadd.f32 %v1034, %v1133
      %v1173 = vadd.f32 %v1035, %v1135
      %v1174 = vadd.f32 %v1036, %v1138
      %v1175 = vadd.f32 %v1037, %v1140
      %v1176 = vadd.f32 %v1038, %v1143
      %v1177 = vadd.f32 %v1039, %v1145
      %v1178 = vadd.f32 %v1040, %v1148
      %v1179 = vadd.f32 %v1041, %v1150
      %v1180 = vadd.f32 %v1042, %v1153
      %v1181 = vadd.f32 %v1043, %v1155
      %v1182 = vadd.f32 %v1044, %v1158
      %v1183 = vadd.f32 %v1045, %v1160
      %v1184 = vadd.f32 %v1046, %v1163
      %v1185 = vadd.f32 %v1047, %v1165
      %v1186 = vadd.f32 %v1048, %v1168
      %v1187 = vadd.f32 %v1049, %v1170
      %v1188 = vpack.c.bf16 %v257, %v256
      %s1189 = scalar_lea.vmem %s1, 384
      %v1190 = vld [vmem:[%s1189] sm:$0xf]
      %v1191 = vld [vmem:[%s1189 + $0x4] sm:$0xf]
      %v1192 = vld [vmem:[%s1189 + $0x8] sm:$0xf]
      %v1193 = vld [vmem:[%s1189 + $0xc] sm:$0xf]
      %v1194 = vld [vmem:[%s1189 + $0x10] sm:$0xf]
      %v1195 = vld [vmem:[%s1189 + $0x14] sm:$0xf]
      %v1196 = vld [vmem:[%s1189 + $0x18] sm:$0xf]
      %v1197 = vld [vmem:[%s1189 + $0x1c] sm:$0xf]
      %v1198 = vld [vmem:[%s1189 + $0x20] sm:$0xf]
      %v1199 = vld [vmem:[%s1189 + $0x24] sm:$0xf]
      %v1200 = vld [vmem:[%s1189 + $0x28] sm:$0xf]
      %v1201 = vld [vmem:[%s1189 + $0x2c] sm:$0xf]
      %v1202 = vld [vmem:[%s1189 + $0x30] sm:$0xf]
      %v1203 = vld [vmem:[%s1189 + $0x34] sm:$0xf]
      %v1204 = vld [vmem:[%s1189 + $0x38] sm:$0xf]
      %v1205 = vld [vmem:[%s1189 + $0x3c] sm:$0xf]
      %v1222 = vunpack.c.l.b16 %v1190
      %v1223 = vunpack.c.l.b16 %v1191
      %v1224 = vunpack.c.l.b16 %v1192
      %v1225 = vunpack.c.l.b16 %v1193
      %v1226 = vunpack.c.l.b16 %v1194
      %v1227 = vunpack.c.l.b16 %v1195
      %v1228 = vunpack.c.l.b16 %v1196
      %v1229 = vunpack.c.l.b16 %v1197
      %v1230 = vunpack.c.l.b16 %v1198
      %v1231 = vunpack.c.l.b16 %v1199
      %v1232 = vunpack.c.l.b16 %v1200
      %v1233 = vunpack.c.l.b16 %v1201
      %v1234 = vunpack.c.l.b16 %v1202
      %v1235 = vunpack.c.l.b16 %v1203
      %v1236 = vunpack.c.l.b16 %v1204
      %v1237 = vunpack.c.l.b16 %v1205
      %v1238 = vpack.c.b16 %v1223, %v1222
      %v1239 = vpack.c.b16 %v1225, %v1224
      %v1240 = vpack.c.b16 %v1227, %v1226
      %v1241 = vpack.c.b16 %v1229, %v1228
      %v1242 = vpack.c.b16 %v1231, %v1230
      %v1243 = vpack.c.b16 %v1233, %v1232
      %v1244 = vpack.c.b16 %v1235, %v1234
      %v1245 = vpack.c.b16 %v1237, %v1236
      %1254 = vmatpush.bf16.msra.mxu0 %v1245
      %1255 = vmatpush.bf16.msra.mxu0 %v1244
      %1256 = vmatpush.bf16.msra.mxu0 %v1243
      %1257 = vmatpush.bf16.msra.mxu0 %v1242
      %1258 = vmatpush.bf16.msra.mxu0 %v1241
      %1259 = vmatpush.bf16.msra.mxu0 %v1240
      %1260 = vmatpush.bf16.msra.mxu0 %v1239
      %1261 = vmatpush.bf16.msra.mxu0 %v1238
      %1262 = vmatmul.bf16.gmra.mxu0 %v261
      %v1263 = vpop.f32.mrf.mxu0
      %v1264 = vadd.f32 0.0, %v1263
      %v1265 = vpop.f32.mrf.mxu0
      %v1266 = vadd.f32 0.0, %v1265
      %1267 = vmatmul.bf16.gmra.mxu0 %v262
      %v1268 = vpop.f32.mrf.mxu0
      %v1269 = vadd.f32 0.0, %v1268
      %v1270 = vpop.f32.mrf.mxu0
      %v1271 = vadd.f32 0.0, %v1270
      %1272 = vmatmul.bf16.gmra.mxu0 %v263
      %v1273 = vpop.f32.mrf.mxu0
      %v1274 = vadd.f32 0.0, %v1273
      %v1275 = vpop.f32.mrf.mxu0
      %v1276 = vadd.f32 0.0, %v1275
      %1277 = vmatmul.bf16.gmra.mxu0 %v264
      %v1278 = vpop.f32.mrf.mxu0
      %v1279 = vadd.f32 0.0, %v1278
      %v1280 = vpop.f32.mrf.mxu0
      %v1281 = vadd.f32 0.0, %v1280
      %1282 = vmatmul.bf16.gmra.mxu0 %v265
      %v1283 = vpop.f32.mrf.mxu0
      %v1284 = vadd.f32 0.0, %v1283
      %v1285 = vpop.f32.mrf.mxu0
      %v1286 = vadd.f32 0.0, %v1285
      %1287 = vmatmul.bf16.gmra.mxu0 %v266
      %v1288 = vpop.f32.mrf.mxu0
      %v1289 = vadd.f32 0.0, %v1288
      %v1290 = vpop.f32.mrf.mxu0
      %v1291 = vadd.f32 0.0, %v1290
      %1292 = vmatmul.bf16.gmra.mxu0 %v778
      %v1293 = vpop.f32.mrf.mxu0
      %v1294 = vadd.f32 0.0, %v1293
      %v1295 = vpop.f32.mrf.mxu0
      %v1296 = vadd.f32 0.0, %v1295
      %1297 = vmatmul.bf16.gmra.mxu0 %v1188
      %v1298 = vpop.f32.mrf.mxu0
      %v1299 = vadd.f32 0.0, %v1298
      %v1300 = vpop.f32.mrf.mxu0
      %v1301 = vadd.f32 0.0, %v1300
      %1302 = vdwg.mxu0
      %v1303 = vadd.f32 %v1172, %v1264
      %v1304 = vadd.f32 %v1173, %v1266
      %v1305 = vadd.f32 %v1174, %v1269
      %v1306 = vadd.f32 %v1175, %v1271
      %v1307 = vadd.f32 %v1176, %v1274
      %v1308 = vadd.f32 %v1177, %v1276
      %v1309 = vadd.f32 %v1178, %v1279
      %v1310 = vadd.f32 %v1179, %v1281
      %v1311 = vadd.f32 %v1180, %v1284
      %v1312 = vadd.f32 %v1181, %v1286
      %v1313 = vadd.f32 %v1182, %v1289
      %v1314 = vadd.f32 %v1183, %v1291
      %v1315 = vadd.f32 %v1184, %v1294
      %v1316 = vadd.f32 %v1185, %v1296
      %v1317 = vadd.f32 %v1186, %v1299
      %v1318 = vadd.f32 %v1187, %v1301
      %v1322 = vrot.slane %v256, 1
      %v1323 = vrot.slane %v257, 1
      %v1324 = vsel %vm307, %v1322, %v1323
      %v1325 = vrot.slane %v258, 1
      %v1326 = vsel %vm307, %v1323, %v1325
      %v1329 = vpack.c.bf16 %v1326, %v1324
      %s1330 = scalar_lea.vmem %s1, 448
      %v1331 = vld [vmem:[%s1330] sm:$0xf]
      %v1332 = vld [vmem:[%s1330 + $0x4] sm:$0xf]
      %v1333 = vld [vmem:[%s1330 + $0x8] sm:$0xf]
      %v1334 = vld [vmem:[%s1330 + $0xc] sm:$0xf]
      %v1335 = vld [vmem:[%s1330 + $0x10] sm:$0xf]
      %v1336 = vld [vmem:[%s1330 + $0x14] sm:$0xf]
      %v1337 = vld [vmem:[%s1330 + $0x18] sm:$0xf]
      %v1338 = vld [vmem:[%s1330 + $0x1c] sm:$0xf]
      %v1339 = vld [vmem:[%s1330 + $0x20] sm:$0xf]
      %v1340 = vld [vmem:[%s1330 + $0x24] sm:$0xf]
      %v1341 = vld [vmem:[%s1330 + $0x28] sm:$0xf]
      %v1342 = vld [vmem:[%s1330 + $0x2c] sm:$0xf]
      %v1343 = vld [vmem:[%s1330 + $0x30] sm:$0xf]
      %v1344 = vld [vmem:[%s1330 + $0x34] sm:$0xf]
      %v1345 = vld [vmem:[%s1330 + $0x38] sm:$0xf]
      %v1346 = vld [vmem:[%s1330 + $0x3c] sm:$0xf]
      %v1363 = vunpack.c.l.b16 %v1331
      %v1364 = vunpack.c.l.b16 %v1332
      %v1365 = vunpack.c.l.b16 %v1333
      %v1366 = vunpack.c.l.b16 %v1334
      %v1367 = vunpack.c.l.b16 %v1335
      %v1368 = vunpack.c.l.b16 %v1336
      %v1369 = vunpack.c.l.b16 %v1337
      %v1370 = vunpack.c.l.b16 %v1338
      %v1371 = vunpack.c.l.b16 %v1339
      %v1372 = vunpack.c.l.b16 %v1340
      %v1373 = vunpack.c.l.b16 %v1341
      %v1374 = vunpack.c.l.b16 %v1342
      %v1375 = vunpack.c.l.b16 %v1343
      %v1376 = vunpack.c.l.b16 %v1344
      %v1377 = vunpack.c.l.b16 %v1345
      %v1378 = vunpack.c.l.b16 %v1346
      %v1379 = vpack.c.b16 %v1364, %v1363
      %v1380 = vpack.c.b16 %v1366, %v1365
      %v1381 = vpack.c.b16 %v1368, %v1367
      %v1382 = vpack.c.b16 %v1370, %v1369
      %v1383 = vpack.c.b16 %v1372, %v1371
      %v1384 = vpack.c.b16 %v1374, %v1373
      %v1385 = vpack.c.b16 %v1376, %v1375
      %v1386 = vpack.c.b16 %v1378, %v1377
      %1395 = vmatpush.bf16.msra.mxu0 %v1386
      %1396 = vmatpush.bf16.msra.mxu0 %v1385
      %1397 = vmatpush.bf16.msra.mxu0 %v1384
      %1398 = vmatpush.bf16.msra.mxu0 %v1383
      %1399 = vmatpush.bf16.msra.mxu0 %v1382
      %1400 = vmatpush.bf16.msra.mxu0 %v1381
      %1401 = vmatpush.bf16.msra.mxu0 %v1380
      %1402 = vmatpush.bf16.msra.mxu0 %v1379
      %1403 = vmatmul.bf16.gmra.mxu0 %v366
      %v1404 = vpop.f32.mrf.mxu0
      %v1405 = vadd.f32 0.0, %v1404
      %v1406 = vpop.f32.mrf.mxu0
      %v1407 = vadd.f32 0.0, %v1406
      %1408 = vmatmul.bf16.gmra.mxu0 %v367
      %v1409 = vpop.f32.mrf.mxu0
      %v1410 = vadd.f32 0.0, %v1409
      %v1411 = vpop.f32.mrf.mxu0
      %v1412 = vadd.f32 0.0, %v1411
      %1413 = vmatmul.bf16.gmra.mxu0 %v368
      %v1414 = vpop.f32.mrf.mxu0
      %v1415 = vadd.f32 0.0, %v1414
      %v1416 = vpop.f32.mrf.mxu0
      %v1417 = vadd.f32 0.0, %v1416
      %1418 = vmatmul.bf16.gmra.mxu0 %v369
      %v1419 = vpop.f32.mrf.mxu0
      %v1420 = vadd.f32 0.0, %v1419
      %v1421 = vpop.f32.mrf.mxu0
      %v1422 = vadd.f32 0.0, %v1421
      %1423 = vmatmul.bf16.gmra.mxu0 %v370
      %v1424 = vpop.f32.mrf.mxu0
      %v1425 = vadd.f32 0.0, %v1424
      %v1426 = vpop.f32.mrf.mxu0
      %v1427 = vadd.f32 0.0, %v1426
      %1428 = vmatmul.bf16.gmra.mxu0 %v371
      %v1429 = vpop.f32.mrf.mxu0
      %v1430 = vadd.f32 0.0, %v1429
      %v1431 = vpop.f32.mrf.mxu0
      %v1432 = vadd.f32 0.0, %v1431
      %1433 = vmatmul.bf16.gmra.mxu0 %v919
      %v1434 = vpop.f32.mrf.mxu0
      %v1435 = vadd.f32 0.0, %v1434
      %v1436 = vpop.f32.mrf.mxu0
      %v1437 = vadd.f32 0.0, %v1436
      %1438 = vmatmul.bf16.gmra.mxu0 %v1329
      %v1439 = vpop.f32.mrf.mxu0
      %v1440 = vadd.f32 0.0, %v1439
      %v1441 = vpop.f32.mrf.mxu0
      %v1442 = vadd.f32 0.0, %v1441
      %1443 = vdwg.mxu0
      %v1444 = vadd.f32 %v1303, %v1405
      %v1445 = vadd.f32 %v1304, %v1407
      %v1446 = vadd.f32 %v1305, %v1410
      %v1447 = vadd.f32 %v1306, %v1412
      %v1448 = vadd.f32 %v1307, %v1415
      %v1449 = vadd.f32 %v1308, %v1417
      %v1450 = vadd.f32 %v1309, %v1420
      %v1451 = vadd.f32 %v1310, %v1422
      %v1452 = vadd.f32 %v1311, %v1425
      %v1453 = vadd.f32 %v1312, %v1427
      %v1454 = vadd.f32 %v1313, %v1430
      %v1455 = vadd.f32 %v1314, %v1432
      %v1456 = vadd.f32 %v1315, %v1435
      %v1457 = vadd.f32 %v1316, %v1437
      %v1458 = vadd.f32 %v1317, %v1440
      %v1459 = vadd.f32 %v1318, %v1442
      %v1460 = vrot.slane %v256, 2
      %v1461 = vrot.slane %v257, 2
      %v1462 = vsel %vm583, %v1460, %v1461
      %v1463 = vrot.slane %v258, 2
      %v1464 = vsel %vm583, %v1461, %v1463
      %v1467 = vpack.c.bf16 %v1464, %v1462
      %s1468 = scalar_lea.vmem %s1, 512
      %v1469 = vld [vmem:[%s1468] sm:$0xf]
      %v1470 = vld [vmem:[%s1468 + $0x4] sm:$0xf]
      %v1471 = vld [vmem:[%s1468 + $0x8] sm:$0xf]
      %v1472 = vld [vmem:[%s1468 + $0xc] sm:$0xf]
      %v1473 = vld [vmem:[%s1468 + $0x10] sm:$0xf]
      %v1474 = vld [vmem:[%s1468 + $0x14] sm:$0xf]
      %v1475 = vld [vmem:[%s1468 + $0x18] sm:$0xf]
      %v1476 = vld [vmem:[%s1468 + $0x1c] sm:$0xf]
      %v1477 = vld [vmem:[%s1468 + $0x20] sm:$0xf]
      %v1478 = vld [vmem:[%s1468 + $0x24] sm:$0xf]
      %v1479 = vld [vmem:[%s1468 + $0x28] sm:$0xf]
      %v1480 = vld [vmem:[%s1468 + $0x2c] sm:$0xf]
      %v1481 = vld [vmem:[%s1468 + $0x30] sm:$0xf]
      %v1482 = vld [vmem:[%s1468 + $0x34] sm:$0xf]
      %v1483 = vld [vmem:[%s1468 + $0x38] sm:$0xf]
      %v1484 = vld [vmem:[%s1468 + $0x3c] sm:$0xf]
      %v1501 = vunpack.c.l.b16 %v1469
      %v1502 = vunpack.c.l.b16 %v1470
      %v1503 = vunpack.c.l.b16 %v1471
      %v1504 = vunpack.c.l.b16 %v1472
      %v1505 = vunpack.c.l.b16 %v1473
      %v1506 = vunpack.c.l.b16 %v1474
      %v1507 = vunpack.c.l.b16 %v1475
      %v1508 = vunpack.c.l.b16 %v1476
      %v1509 = vunpack.c.l.b16 %v1477
      %v1510 = vunpack.c.l.b16 %v1478
      %v1511 = vunpack.c.l.b16 %v1479
      %v1512 = vunpack.c.l.b16 %v1480
      %v1513 = vunpack.c.l.b16 %v1481
      %v1514 = vunpack.c.l.b16 %v1482
      %v1515 = vunpack.c.l.b16 %v1483
      %v1516 = vunpack.c.l.b16 %v1484
      %v1517 = vpack.c.b16 %v1502, %v1501
      %v1518 = vpack.c.b16 %v1504, %v1503
      %v1519 = vpack.c.b16 %v1506, %v1505
      %v1520 = vpack.c.b16 %v1508, %v1507
      %v1521 = vpack.c.b16 %v1510, %v1509
      %v1522 = vpack.c.b16 %v1512, %v1511
      %v1523 = vpack.c.b16 %v1514, %v1513
      %v1524 = vpack.c.b16 %v1516, %v1515
      %1533 = vmatpush.bf16.msra.mxu0 %v1524
      %1534 = vmatpush.bf16.msra.mxu0 %v1523
      %1535 = vmatpush.bf16.msra.mxu0 %v1522
      %1536 = vmatpush.bf16.msra.mxu0 %v1521
      %1537 = vmatpush.bf16.msra.mxu0 %v1520
      %1538 = vmatpush.bf16.msra.mxu0 %v1519
      %1539 = vmatpush.bf16.msra.mxu0 %v1518
      %1540 = vmatpush.bf16.msra.mxu0 %v1517
      %1541 = vmatmul.bf16.gmra.mxu0 %v642
      %v1542 = vpop.f32.mrf.mxu0
      %v1543 = vadd.f32 0.0, %v1542
      %v1544 = vpop.f32.mrf.mxu0
      %v1545 = vadd.f32 0.0, %v1544
      %1546 = vmatmul.bf16.gmra.mxu0 %v643
      %v1547 = vpop.f32.mrf.mxu0
      %v1548 = vadd.f32 0.0, %v1547
      %v1549 = vpop.f32.mrf.mxu0
      %v1550 = vadd.f32 0.0, %v1549
      %1551 = vmatmul.bf16.gmra.mxu0 %v644
      %v1552 = vpop.f32.mrf.mxu0
      %v1553 = vadd.f32 0.0, %v1552
      %v1554 = vpop.f32.mrf.mxu0
      %v1555 = vadd.f32 0.0, %v1554
      %1556 = vmatmul.bf16.gmra.mxu0 %v645
      %v1557 = vpop.f32.mrf.mxu0
      %v1558 = vadd.f32 0.0, %v1557
      %v1559 = vpop.f32.mrf.mxu0
      %v1560 = vadd.f32 0.0, %v1559
      %1561 = vmatmul.bf16.gmra.mxu0 %v646
      %v1562 = vpop.f32.mrf.mxu0
      %v1563 = vadd.f32 0.0, %v1562
      %v1564 = vpop.f32.mrf.mxu0
      %v1565 = vadd.f32 0.0, %v1564
      %1566 = vmatmul.bf16.gmra.mxu0 %v647
      %v1567 = vpop.f32.mrf.mxu0
      %v1568 = vadd.f32 0.0, %v1567
      %v1569 = vpop.f32.mrf.mxu0
      %v1570 = vadd.f32 0.0, %v1569
      %1571 = vmatmul.bf16.gmra.mxu0 %v1057
      %v1572 = vpop.f32.mrf.mxu0
      %v1573 = vadd.f32 0.0, %v1572
      %v1574 = vpop.f32.mrf.mxu0
      %v1575 = vadd.f32 0.0, %v1574
      %1576 = vmatmul.bf16.gmra.mxu0 %v1467
      %v1577 = vpop.f32.mrf.mxu0
      %v1578 = vadd.f32 0.0, %v1577
      %v1579 = vpop.f32.mrf.mxu0
      %v1580 = vadd.f32 0.0, %v1579
      %1581 = vdwg.mxu0
      %v1582 = vadd.f32 %v1444, %v1543
      %v1583 = vadd.f32 %v1445, %v1545
      %v1584 = vadd.f32 %v1446, %v1548
      %v1585 = vadd.f32 %v1447, %v1550
      %v1586 = vadd.f32 %v1448, %v1553
      %v1587 = vadd.f32 %v1449, %v1555
      %v1588 = vadd.f32 %v1450, %v1558
      %v1589 = vadd.f32 %v1451, %v1560
      %v1590 = vadd.f32 %v1452, %v1563
      %v1591 = vadd.f32 %v1453, %v1565
      %v1592 = vadd.f32 %v1454, %v1568
      %v1593 = vadd.f32 %v1455, %v1570
      %v1594 = vadd.f32 %v1456, %v1573
      %v1595 = vadd.f32 %v1457, %v1575
      %v1596 = vadd.f32 %v1458, %v1578
      %v1597 = vadd.f32 %v1459, %v1580
      %1598 = vst [vmem:[%s192] sm:$0xff] %v1582
      %1599 = vst [vmem:[%s192 + $0x8] sm:$0xff] %v1583
      %1600 = vst [vmem:[%s192 + $0x10] sm:$0xff] %v1584
      %1601 = vst [vmem:[%s192 + $0x18] sm:$0xff] %v1585
      %1602 = vst [vmem:[%s192 + $0x20] sm:$0xff] %v1586
      %1603 = vst [vmem:[%s192 + $0x28] sm:$0xff] %v1587
      %1604 = vst [vmem:[%s192 + $0x30] sm:$0xff] %v1588
      %1605 = vst [vmem:[%s192 + $0x38] sm:$0xff] %v1589
      %1606 = vst [vmem:[%s192 + $0x40] sm:$0xff] %v1590
      %1607 = vst [vmem:[%s192 + $0x48] sm:$0xff] %v1591
      %1608 = vst [vmem:[%s192 + $0x50] sm:$0xff] %v1592
      %1609 = vst [vmem:[%s192 + $0x58] sm:$0xff] %v1593
      %1610 = vst [vmem:[%s192 + $0x60] sm:$0xff] %v1594
      %1611 = vst [vmem:[%s192 + $0x68] sm:$0xff] %v1595
      %1612 = vst [vmem:[%s192 + $0x70] sm:$0xff] %v1596
      %1613 = vst [vmem:[%s192 + $0x78] sm:$0xff] %v1597
      %v1614 = vld [vmem:[%s3] sm:$0x1]
      %v1615 = vadd.f32 %v1582, %v1583
      %v1616 = vadd.f32 %v1615, %v1584
      %v1617 = vadd.f32 %v1616, %v1585
      %v1618 = vadd.f32 %v1617, %v1586
      %v1619 = vadd.f32 %v1618, %v1587
      %v1620 = vadd.f32 %v1619, %v1588
      %v1621 = vadd.f32 %v1620, %v1589
      %v1622 = vadd.f32 %v1621, %v1590
      %v1623 = vadd.f32 %v1622, %v1591
      %v1624 = vadd.f32 %v1623, %v1592
      %v1625 = vadd.f32 %v1624, %v1593
      %v1626 = vadd.f32 %v1625, %v1594
      %v1627 = vadd.f32 %v1626, %v1595
      %v1628 = vadd.f32 %v1627, %v1596
      %v1629 = vadd.f32 %v1628, %v1597
      %v1630 = vrot.slane %v1629, 4
      %v1631 = vadd.f32 %v1629, %v1630
      %v1632 = vrot.slane %v1631, 2
      %v1633 = vadd.f32 %v1631, %v1632
      %v1634 = vrot.slane %v1633, 1
      %v1635 = vadd.f32 %v1633, %v1634
      %v1636 = vadd.f32 %v1614, %v1635
      %1637 = vst [vmem:[%s3] sm:$0x1] %v1636
      %v1638 = vld [vmem:[%s4] sm:$0x1]
      %v1639 = vmul.f32 %v1582, %v1582
      %v1640 = vmul.f32 %v1583, %v1583
      %v1641 = vmul.f32 %v1584, %v1584
      %v1642 = vmul.f32 %v1585, %v1585
      %v1643 = vmul.f32 %v1586, %v1586
      %v1644 = vmul.f32 %v1587, %v1587
      %v1645 = vmul.f32 %v1588, %v1588
      %v1646 = vmul.f32 %v1589, %v1589
      %v1647 = vmul.f32 %v1590, %v1590
      %v1648 = vmul.f32 %v1591, %v1591
      %v1649 = vmul.f32 %v1592, %v1592
      %v1650 = vmul.f32 %v1593, %v1593
      %v1651 = vmul.f32 %v1594, %v1594
      %v1652 = vmul.f32 %v1595, %v1595
      %v1653 = vmul.f32 %v1596, %v1596
      %v1654 = vmul.f32 %v1597, %v1597
      %v1655 = vadd.f32 %v1639, %v1640
      %v1656 = vadd.f32 %v1655, %v1641
      %v1657 = vadd.f32 %v1656, %v1642
      %v1658 = vadd.f32 %v1657, %v1643
      %v1659 = vadd.f32 %v1658, %v1644
      %v1660 = vadd.f32 %v1659, %v1645
      %v1661 = vadd.f32 %v1660, %v1646
      %v1662 = vadd.f32 %v1661, %v1647
      %v1663 = vadd.f32 %v1662, %v1648
      %v1664 = vadd.f32 %v1663, %v1649
      %v1665 = vadd.f32 %v1664, %v1650
      %v1666 = vadd.f32 %v1665, %v1651
      %v1667 = vadd.f32 %v1666, %v1652
      %v1668 = vadd.f32 %v1667, %v1653
      %v1669 = vadd.f32 %v1668, %v1654
      %v1670 = vrot.slane %v1669, 4
      %v1671 = vadd.f32 %v1669, %v1670
      %v1672 = vrot.slane %v1671, 2
      %v1673 = vadd.f32 %v1671, %v1672
      %v1674 = vrot.slane %v1673, 1
      %v1675 = vadd.f32 %v1673, %v1674
      %v1676 = vadd.f32 %v1638, %v1675
      %1677 = vst [vmem:[%s4] sm:$0x1] %v1676
      %p1678 = scmp.lt.s32.totalorder %s16, 3
      %s1679 = scalar_select %p1678, %s16, 3
      %s1680 = smul.addr %s1679, 16
      %s1681 = smul.addr %s1680, 8
      %s1682 = scalar_lea.vmem %s2, %s1681
      // Predicated region
      $region33: #{encoding_block_forward.6} parent=27 // pred_check
        %p1683 = pneg %p81
      $region34: #{encoding_block_forward.6} parent=27 // pred_check_branch
        %1685 = sbr.rel (%p1683) target = $region36
      $region35: #{encoding_block_forward.6} parent=27 // pred_region
        _
      $region36: #{encoding_block_forward.6} parent=27 // pred_fallthru
        _
      // Predicated region
      $region37: #{encoding_block_forward.6} parent=27 // pred_check
        %p1686 = pneg %p102
      $region38: #{encoding_block_forward.6} parent=27 // pred_check_branch
        %1688 = sbr.rel (%p1686) target = $region40
      $region39: #{encoding_block_forward.6} parent=27 // pred_region
        _
      $region40: #{encoding_block_forward.6} parent=27 // pred_fallthru
        _
      // Predicated region
      $region41: #{encoding_block_forward.6} parent=27 // pred_check
        %p1689 = pneg %p123
      $region42: #{encoding_block_forward.6} parent=27 // pred_check_branch
        %1691 = sbr.rel (%p1689) target = $region44
      $region43: #{encoding_block_forward.6} parent=27 // pred_region
        _
      $region44: #{encoding_block_forward.6} parent=27 // pred_fallthru
        _
      // Predicated region
      $region45: #{encoding_block_forward.6} parent=27 // pred_check
        %p1692 = pneg %p102
      $region46: #{encoding_block_forward.6} parent=27 // pred_check_branch
        %1694 = sbr.rel (%p1692) target = $region48
      $region47: #{encoding_block_forward.6} parent=27 // pred_region
        _
      $region48: #{encoding_block_forward.6} parent=27 // pred_fallthru
        _
      // Predicated region
      $region49: #{encoding_block_forward.6} parent=27 // pred_check
        %p1695 = pneg %p123
      $region50: #{encoding_block_forward.6} parent=27 // pred_check_branch
        %1697 = sbr.rel (%p1695) target = $region52
      $region51: #{encoding_block_forward.6} parent=27 // pred_region
        _
      $region52: #{encoding_block_forward.6} parent=27 // pred_fallthru
        _
    $region28: #{encoding_block_forward.6} parent=5 // pred_fallthru
      _
    %p1698 = scmp.le.s32.totalorder 2, %s11
    // Predicated region
    $region53: #{encoding_block_forward.6} parent=5 // pred_check
      %p1699 = pneg %p1698
    $region54: #{encoding_block_forward.6} parent=5 // pred_check_branch
      %1701 = sbr.rel (%p1699) target = $region56
    $region55: #{encoding_block_forward.6} parent=5 // pred_region
      %s1702 = ssub.s32 %s11, 2
      // Predicated region
      $region57: #{encoding_block_forward.6} parent=55 // pred_check
        %p1703 = pneg %p87
      $region58: #{encoding_block_forward.6} parent=55 // pred_check_branch
        %1705 = sbr.rel (%p1703) target = $region60
      $region59: #{encoding_block_forward.6} parent=55 // pred_region
        %p1706 = scmp.lt.s32.totalorder %s17, 3
        %s1707 = scalar_select %p1706, %s17, 3
        %s1708 = smul.addr %s1707, 16
        %s1709 = smul.addr %s1708, 8
        %s1710 = scalar_lea.vmem %s2, %s1709
      $region60: #{encoding_block_forward.6} parent=55 // pred_fallthru
        _
    $region56: #{encoding_block_forward.6} parent=5 // pred_fallthru
      _
  $region6: #{encoding_block_forward.6} parent=0 // loop_footer
    %s15 = sadd.s32 1, %s11
  $region7: #{encoding_block_forward.6} parent=0 // loop_footer_branch
    %10 = sbr.rel target = $region3
  $region8: #{encoding_block_forward.6} parent=0 // loop_exit
    _

</llo_original>
